<compile_context>
chip_gen: v5e
topology: v5e:2x2
jax: 0.10.0
libtpu: 0.0.40
codegen_flags: <defaults>
</compile_context>

<pallas_src>
import functools

import jax
import jax.numpy as jnp
from jax.experimental import pallas as pl
from jax.experimental.pallas import tpu as pltpu


_VMEM_LIMIT_BYTES = 40 * 1024 * 1024   # < v7x 64 MiB physical; ample on v5e/v6e


def _round_up(x, m):
    return (x + m - 1) // m * m


# ---------------------------------------------------------------------------
# Kernel 1/2: per-point MLP (3->64->128->1024) fused with per-tile max over points.
#   - w1 is either shared (8,64) [TNet] or per-batch (1,8,64) [input transform folded
#     into feat conv1].
#   - conv3 bias / ReLU are deferred to the wrapper (commute with the row max).
# ---------------------------------------------------------------------------

def _mlp_max_kernel(x_ref, w1_ref, b1_ref, w2_ref, b2_ref, w3_ref, pmax_ref):
    x = x_ref[0]                                                   # (tn, 8) bf16
    if len(w1_ref.shape) == 3:
        w1 = w1_ref[0]                                             # per-batch (8, 64)
    else:
        w1 = w1_ref[...]                                           # shared (8, 64)
    h = jnp.dot(x, w1, preferred_element_type=jnp.float32) + b1_ref[...]
    h = jnp.maximum(h, 0.0)                                        # (tn, 64)
    h = jnp.dot(h.astype(jnp.bfloat16), w2_ref[...],
                preferred_element_type=jnp.float32) + b2_ref[...]
    h = jnp.maximum(h, 0.0)                                        # (tn, 128)
    g = jnp.dot(h.astype(jnp.bfloat16), w3_ref[...],
                preferred_element_type=jnp.float32)                # (tn, 1024), raw (bias deferred)
    pmax_ref[0, 0] = jnp.max(g, axis=0, keepdims=True)             # (1, 1024) per-tile max


def mlp_partial_max(x_bf, w1, b1, w2, b2, w3, *, per_batch_w1, tile_n):
    """x_bf: (B, N_pad, 8) bf16 -> per-tile partial maxima (B, NT, 1, 1024) f32."""
    B, N_pad, C = x_bf.shape
    NT = N_pad // tile_n
    if per_batch_w1:
        w1_spec = pl.BlockSpec((1, C, 64), lambda b, n: (b, 0, 0))
    else:
        w1_spec = pl.BlockSpec((C, 64), lambda b, n: (0, 0))
    return pl.pallas_call(
        _mlp_max_kernel,
        out_shape=jax.ShapeDtypeStruct((B, NT, 1, 1024), jnp.float32),
        grid_spec=pltpu.PrefetchScalarGridSpec(
            num_scalar_prefetch=0,
            grid=(B, NT),
            in_specs=[
                pl.BlockSpec((1, tile_n, C), lambda b, n: (b, n, 0)),
                w1_spec,
                pl.BlockSpec((1, 64), lambda b, n: (0, 0)),
                pl.BlockSpec((64, 128), lambda b, n: (0, 0)),
                pl.BlockSpec((1, 128), lambda b, n: (0, 0)),
                pl.BlockSpec((128, 1024), lambda b, n: (0, 0)),
            ],
            out_specs=pl.BlockSpec((1, 1, 1, 1024), lambda b, n: (b, n, 0, 0)),
        ),
        compiler_params=pltpu.CompilerParams(
            dimension_semantics=("parallel", "parallel"),
            vmem_limit_bytes=_VMEM_LIMIT_BYTES),
    )(x_bf, w1, b1.reshape(1, -1).astype(jnp.float32),
      w2.astype(jnp.bfloat16), b2.reshape(1, -1).astype(jnp.float32),
      w3.astype(jnp.bfloat16))


# ---------------------------------------------------------------------------
# Kernel 3: dense classification head.
#   Recomputes the 64-ch point features from x (no HBM round trip), adds the
#   per-batch global contribution (1024 global channels of cls conv1 folded in the
#   wrapper), runs conv2..conv4 + log_softmax over a 128-padded class dim, and stores
#   the log-probs transposed (k, tn) for a lane-dense output block.
# ---------------------------------------------------------------------------

def _cls_head_kernel(x_ref, w1e_ref, b1_ref, gc_ref, wpt_ref, w2_ref, b2_ref,
                     w3_ref, b3_ref, w4_ref, b4_ref, o_ref, *, k):
    x = x_ref[0]                                                   # (tn, 8) bf16
    h = jnp.dot(x, w1e_ref[0], preferred_element_type=jnp.float32) + b1_ref[...]
    h = jnp.maximum(h, 0.0)                                        # (tn, 64) point features
    c = jnp.dot(h.astype(jnp.bfloat16), wpt_ref[...],
                preferred_element_type=jnp.float32) + gc_ref[0]    # + (global@Wg + b) per batch
    c = jnp.maximum(c, 0.0)                                        # (tn, 512)
    c = jnp.dot(c.astype(jnp.bfloat16), w2_ref[...],
                preferred_element_type=jnp.float32) + b2_ref[...]
    c = jnp.maximum(c, 0.0)                                        # (tn, 256)
    c = jnp.dot(c.astype(jnp.bfloat16), w3_ref[...],
                preferred_element_type=jnp.float32) + b3_ref[...]
    c = jnp.maximum(c, 0.0)                                        # (tn, 128)
    logits = jnp.dot(c.astype(jnp.bfloat16), w4_ref[...],
                     preferred_element_type=jnp.float32) + b4_ref[...]   # (tn, kp)
    m = jnp.max(logits, axis=-1, keepdims=True)
    s = logits - m
    lse = jnp.log(jnp.sum(jnp.exp(s), axis=-1, keepdims=True))
    logp = s - lse                                                 # (tn, kp); pad cols ~ -1e30
    # lane-dense store: aligned (tn, 128) -> (128, tn) transpose (XLU), keep k real rows
    o_ref[0] = logp.T[:k, :].astype(o_ref.dtype)                   # (k, tn)


def cls_head(x_bf, w1_eff, b1, gc, w_pt, params, *, tile_n):
    """Returns log-probs transposed: (B, k, N_pad) f32."""
    B, N_pad, C = x_bf.shape
    NT = N_pad // tile_n
    (w2, b2), (w3, b3), (w4, b4) = params["cls_conv2"], params["cls_conv3"], params["cls_conv4"]
    k = w4.shape[1]
    kp = _round_up(k, 128)
    # pad class dim: zero weight columns, -1e30 bias -> exp() == 0, never the max
    w4p = jnp.zeros((w4.shape[0], kp), jnp.float32).at[:, :k].set(w4)
    b4p = jnp.full((kp,), -1e30, jnp.float32).at[:k].set(b4)
    return pl.pallas_call(
        functools.partial(_cls_head_kernel, k=k),
        out_shape=jax.ShapeDtypeStruct((B, k, N_pad), jnp.float32),
        grid_spec=pltpu.PrefetchScalarGridSpec(
            num_scalar_prefetch=0,
            grid=(B, NT),
            in_specs=[
                pl.BlockSpec((1, tile_n, C), lambda b, n: (b, n, 0)),
                pl.BlockSpec((1, C, 64), lambda b, n: (b, 0, 0)),
                pl.BlockSpec((1, 64), lambda b, n: (0, 0)),
                pl.BlockSpec((1, 1, 512), lambda b, n: (b, 0, 0)),
                pl.BlockSpec((64, 512), lambda b, n: (0, 0)),
                pl.BlockSpec((512, 256), lambda b, n: (0, 0)),
                pl.BlockSpec((1, 256), lambda b, n: (0, 0)),
                pl.BlockSpec((256, 128), lambda b, n: (0, 0)),
                pl.BlockSpec((1, 128), lambda b, n: (0, 0)),
                pl.BlockSpec((128, kp), lambda b, n: (0, 0)),
                pl.BlockSpec((1, kp), lambda b, n: (0, 0)),
            ],
            out_specs=pl.BlockSpec((1, k, tile_n), lambda b, n: (b, 0, n)),
        ),
        compiler_params=pltpu.CompilerParams(
            dimension_semantics=("parallel", "parallel"),
            vmem_limit_bytes=_VMEM_LIMIT_BYTES),
    )(x_bf, w1_eff, b1.reshape(1, -1).astype(jnp.float32),
      gc, w_pt.astype(jnp.bfloat16),
      w2.astype(jnp.bfloat16), b2.reshape(1, -1).astype(jnp.float32),
      w3.astype(jnp.bfloat16), b3.reshape(1, -1).astype(jnp.float32),
      w4p.astype(jnp.bfloat16), b4p.reshape(1, -1))


# ---------------------------------------------------------------------------
# Parameter init (deterministic, synthetic) + BatchNorm folding
# ---------------------------------------------------------------------------

def _fold_bn(w, b, gamma, beta, mean, var, eps=1e-5):
    scale = gamma / jnp.sqrt(var + eps)
    return ((w * scale[None, :]).astype(jnp.float32),
            ((b - mean) * scale + beta).astype(jnp.float32))


def _init_conv_bn(key, cin, cout):
    k1, k2, k3, k4, k5, k6 = jax.random.split(key, 6)
    s = 1.0 / jnp.sqrt(jnp.float32(cin))
    w = s * jax.random.normal(k1, (cin, cout), jnp.float32)
    b = s * jax.random.normal(k2, (cout,), jnp.float32)
    gamma = 1.0 + 0.1 * jax.random.normal(k3, (cout,), jnp.float32)
    beta = 0.1 * jax.random.normal(k4, (cout,), jnp.float32)
    mean = 0.1 * jax.random.normal(k5, (cout,), jnp.float32)
    var = 1.0 + 0.1 * jnp.abs(jax.random.normal(k6, (cout,), jnp.float32))
    return _fold_bn(w, b, gamma, beta, mean, var)


def _init_linear(key, cin, cout):
    k1, k2 = jax.random.split(key)
    s = 1.0 / jnp.sqrt(jnp.float32(cin))
    w = s * jax.random.normal(k1, (cin, cout), jnp.float32)
    b = s * jax.random.normal(k2, (cout,), jnp.float32)
    return w, b


def init_params(key, num_classes=2):
    keys = jax.random.split(key, 16)
    p = {}
    # TNet(k=3): conv+BN+ReLU chain, then plain Linear stack (no BN/ReLU in fc per spec)
    p["t3_conv1"] = _init_conv_bn(keys[0], 3, 64)
    p["t3_conv2"] = _init_conv_bn(keys[1], 64, 128)
    p["t3_conv3"] = _init_conv_bn(keys[2], 128, 1024)
    p["t3_fc1"] = _init_linear(keys[3], 1024, 512)
    p["t3_fc2"] = _init_linear(keys[4], 512, 256)
    p["t3_fc3"] = _init_linear(keys[5], 256, 9)
    # PointNetfeat (feature_transform=False -> no TNet(64))
    p["feat_conv1"] = _init_conv_bn(keys[6], 3, 64)
    p["feat_conv2"] = _init_conv_bn(keys[7], 64, 128)
    p["feat_conv3"] = _init_conv_bn(keys[8], 128, 1024)    # BN, no ReLU
    # dense classification head
    p["cls_conv1"] = _init_conv_bn(keys[9], 1088, 512)
    p["cls_conv2"] = _init_conv_bn(keys[10], 512, 256)
    p["cls_conv3"] = _init_conv_bn(keys[11], 256, 128)
    p["cls_conv4"] = _init_linear(keys[12], 128, num_classes)  # plain conv, no BN/ReLU
    return p


# ---------------------------------------------------------------------------
# Forward pass (PointNetDenseCls, feature_transform=False)
# ---------------------------------------------------------------------------

def pointnet_dense_cls_forward(params, x, *, target_tile=2048):
    """x: (B, 3, N) float32 (PyTorch NCW). Returns (log_probs (B,N,k), trans (B,3,3), None)."""
    B, cin, N = x.shape
    assert cin == 3
    x_pts = jnp.transpose(x, (0, 2, 1)).astype(jnp.float32)        # (B, N, 3)

    # Split N into NT ~equal tiles of <= target_tile points, each a multiple of 128.
    NT = -(-N // target_tile)
    tn = _round_up(-(-N // NT), 128)
    N_pad = tn * NT
    if N_pad != N:
        # repeat the last point: max-invariant; cls outputs for pad rows are sliced off
        pad = jnp.broadcast_to(x_pts[:, -1:, :], (B, N_pad - N, 3))
        x_pts = jnp.concatenate([x_pts, pad], axis=1)
    # zero-pad channels 3 -> 8 (contiguous 16-byte DMA rows); matching zero weight rows
    x_pts = jnp.pad(x_pts, ((0, 0), (0, 0), (0, 5)))
    x_bf = x_pts.astype(jnp.bfloat16)                               # (B, N_pad, 8)

    # ---- TNet(k=3): fused per-point MLP + per-tile max (Pallas); tiny FCs in plain JAX
    w1_t, b1_t = params["t3_conv1"]
    w2_t, b2_t = params["t3_conv2"]
    w3_t, b3_t = params["t3_conv3"]
    w1_t_pad = jnp.pad(w1_t, ((0, 5), (0, 0))).astype(jnp.bfloat16)     # (8, 64)
    tpart = mlp_partial_max(x_bf, w1_t_pad, b1_t, w2_t, b2_t, w3_t,
                            per_batch_w1=False, tile_n=tn)              # (B, NT, 1, 1024)
    # deferred conv3 bias + ReLU (commute with max over points)
    tmax = jnp.maximum(jnp.max(tpart[:, :, 0, :], axis=1) + b3_t, 0.0)  # (B, 1024)
    t = tmax @ params["t3_fc1"][0] + params["t3_fc1"][1]
    t = t @ params["t3_fc2"][0] + params["t3_fc2"][1]
    t = t @ params["t3_fc3"][0] + params["t3_fc3"][1]                   # (B, 9)
    trans = t.reshape(B, 3, 3) + jnp.eye(3, dtype=jnp.float32)[None]

    # ---- fold the 3x3 input transform into feat conv1: (x @ trans) @ W1 = x @ (trans @ W1)
    w1_f, b1_f = params["feat_conv1"]
    w2_f, b2_f = params["feat_conv2"]
    w3_f, b3_f = params["feat_conv3"]
    w1_eff = jnp.einsum("bij,jk->bik", trans, w1_f)                     # (B, 3, 64) f32
    w1_eff = jnp.pad(w1_eff, ((0, 0), (0, 5), (0, 0))).astype(jnp.bfloat16)  # (B, 8, 64)

    gpart = mlp_partial_max(x_bf, w1_eff, b1_f, w2_f, b2_f, w3_f,
                            per_batch_w1=True, tile_n=tn)               # (B, NT, 1, 1024)
    gmax = jnp.max(gpart[:, :, 0, :], axis=1) + b3_f                    # (B, 1024), no ReLU

    # ---- split cls conv1 (1088 -> 512): 1024 global channels -> per-batch contribution,
    #      64 point channels stay per-point.  Concat order is [global(1024), point(64)].
    w_c1, b_c1 = params["cls_conv1"]
    gc = (gmax @ w_c1[:1024] + b_c1).reshape(B, 1, 512)                 # (B, 1, 512) f32
    w_pt = w_c1[1024:]                                                  # (64, 512)

    out_kn = cls_head(x_bf, w1_eff, b1_f, gc, w_pt, params, tile_n=tn)  # (B, k, N_pad)
    out = jnp.transpose(out_kn[:, :, :N], (0, 2, 1))                    # (B, N, k)
    return out, trans, None   # feature_transform=False -> trans_feat is None


# ---------------------------------------------------------------------------
# Pure-JAX f32 reference (mirrors the PyTorch module with folded eval-mode BN)
# ---------------------------------------------------------------------------

def reference_forward(params, x):
    B, _, N = x.shape
    xp = jnp.transpose(x, (0, 2, 1))
    flat = xp.reshape(B * N, 3)

    def lin(h, wb, relu=False):
        w, b = wb
        y = h @ w + b
        return jnp.maximum(y, 0.0) if relu else y

    t = lin(flat, params["t3_conv1"], True)
    t = lin(t, params["t3_conv2"], True)
    t = lin(t, params["t3_conv3"], True)
    t = jnp.max(t.reshape(B, N, 1024), axis=1)
    t = lin(t, params["t3_fc1"]); t = lin(t, params["t3_fc2"]); t = lin(t, params["t3_fc3"])
    trans = t.reshape(B, 3, 3) + jnp.eye(3, dtype=jnp.float32)[None]

    xt = jnp.einsum("bnc,bcd->bnd", xp, trans)
    h = lin(xt.reshape(B * N, 3), params["feat_conv1"], True)
    pfeat = h
    g = lin(h, params["feat_conv2"], True)
    g = lin(g, params["feat_conv3"], False)
    gmax = jnp.max(g.reshape(B, N, 1024), axis=1)
    feat = jnp.concatenate([jnp.repeat(gmax, N, axis=0), pfeat], axis=1)

    c = lin(feat, params["cls_conv1"], True)
    c = lin(c, params["cls_conv2"], True)
    c = lin(c, params["cls_conv3"], True)
    c = lin(c, params["cls_conv4"], False)
    out = jax.nn.log_softmax(c, axis=-1).reshape(B, N, -1)
    return out, trans


# ---------------------------------------------------------------------------

if __name__ == "__main__":
    B, N, NUM_CLASSES = 2, 128, 2
    key = jax.random.PRNGKey(0)
    pkey, xkey = jax.random.split(key)

    params = init_params(pkey, num_classes=NUM_CLASSES)
    x = jax.random.normal(xkey, (B, 3, N), dtype=jnp.float32)

    fwd = jax.jit(pointnet_dense_cls_forward)
    out, trans, trans_feat = fwd(params, x)
    out = jax.block_until_ready(out)
    trans = jax.block_until_ready(trans)

    assert out.shape == (B, N, NUM_CLASSES)
    assert trans.shape == (B, 3, 3)
    assert trans_feat is None
    assert bool(jnp.all(jnp.isfinite(out)))
    # log-softmax rows should exponentiate-sum to ~1
    assert bool(jnp.all(jnp.abs(jnp.sum(jnp.exp(out), axis=-1) - 1.0) < 1e-3))

    # compare against the f32 pure-JAX reference (loose tolerance: bf16 MXU path)
    ref_out, ref_trans = reference_forward(params, x)
    assert float(jnp.max(jnp.abs(trans - ref_trans))) < 0.1
    assert float(jnp.max(jnp.abs(out - ref_out))) < 0.3
    print("KERNEL_OK")
</pallas_src>

<mosaic_0001>
module attributes {stable_mosaic.version = 11 : i64} {
  func.func @_mlp_max_kernel(%arg0: i32, %arg1: i32, %arg2: memref<1x128x8xbf16, #tpu.memory_space<vmem>>, %arg3: memref<8x64xbf16, #tpu.memory_space<vmem>>, %arg4: memref<1x64xf32, #tpu.memory_space<vmem>>, %arg5: memref<64x128xbf16, #tpu.memory_space<vmem>>, %arg6: memref<1x128xf32, #tpu.memory_space<vmem>>, %arg7: memref<128x1024xbf16, #tpu.memory_space<vmem>>, %arg8: memref<1x1x1x1024xf32, #tpu.memory_space<vmem>>) attributes {dimension_semantics = [#tpu.dimension_semantics<parallel>, #tpu.dimension_semantics<parallel>], iteration_bounds = array<i64: 2, 1>, scalar_prefetch = 0 : i64, scratch_operands = 0 : i64, tpu.core_type = #tpu.core_type<tc>, window_params = [{transform_indices = @transform_0, window_bounds = array<i64: 1, 128, 8>}, {pipeline_mode = #tpu.pipeline_mode<synchronous>, transform_indices = @transform_1, window_bounds = array<i64: 8, 64>}, {pipeline_mode = #tpu.pipeline_mode<synchronous>, transform_indices = @transform_2, window_bounds = array<i64: 1, 64>}, {pipeline_mode = #tpu.pipeline_mode<synchronous>, transform_indices = @transform_3, window_bounds = array<i64: 64, 128>}, {pipeline_mode = #tpu.pipeline_mode<synchronous>, transform_indices = @transform_4, window_bounds = array<i64: 1, 128>}, {pipeline_mode = #tpu.pipeline_mode<synchronous>, transform_indices = @transform_5, window_bounds = array<i64: 128, 1024>}, {transform_indices = @transform_6, window_bounds = array<i64: 1, 1, 1, 1024>}]} {
    %c0 = arith.constant 0 : index
    %c0_0 = arith.constant 0 : index
    %c0_1 = arith.constant 0 : index
    %0 = vector.load %arg2[%c0, %c0_0, %c0_1] : memref<1x128x8xbf16, #tpu.memory_space<vmem>>, vector<1x128x8xbf16>
    %1 = vector.shape_cast %0 : vector<1x128x8xbf16> to vector<128x8xbf16>
    %c0_2 = arith.constant 0 : index
    %c0_3 = arith.constant 0 : index
    %2 = vector.load %arg3[%c0_2, %c0_3] : memref<8x64xbf16, #tpu.memory_space<vmem>>, vector<8x64xbf16>
    %cst = arith.constant dense<0.000000e+00> : vector<128x64xf32>
    %3 = tpu.matmul %1, %2, %cst {dimension_numbers = #tpu.dot_dimension_numbers<[1], [0], [0], [1], [0, 0, 1, 1], [], []>} : vector<128x8xbf16>, vector<8x64xbf16>, vector<128x64xf32> -> vector<128x64xf32>
    %c0_4 = arith.constant 0 : index
    %c0_5 = arith.constant 0 : index
    %4 = vector.load %arg4[%c0_4, %c0_5] : memref<1x64xf32, #tpu.memory_space<vmem>>, vector<1x64xf32>
    %5 = vector.broadcast %4 : vector<1x64xf32> to vector<128x64xf32>
    %6 = arith.addf %3, %5 : vector<128x64xf32>
    %cst_6 = arith.constant 0.000000e+00 : f32
    %7 = vector.broadcast %cst_6 : f32 to vector<128x64xf32>
    %8 = arith.maximumf %6, %7 : vector<128x64xf32>
    %9 = arith.truncf %8 : vector<128x64xf32> to vector<128x64xbf16>
    %c0_7 = arith.constant 0 : index
    %c0_8 = arith.constant 0 : index
    %10 = vector.load %arg5[%c0_7, %c0_8] : memref<64x128xbf16, #tpu.memory_space<vmem>>, vector<64x128xbf16>
    %cst_9 = arith.constant dense<0.000000e+00> : vector<128x128xf32>
    %11 = tpu.matmul %9, %10, %cst_9 {dimension_numbers = #tpu.dot_dimension_numbers<[1], [0], [0], [1], [0, 0, 1, 1], [], []>} : vector<128x64xbf16>, vector<64x128xbf16>, vector<128x128xf32> -> vector<128x128xf32>
    %c0_10 = arith.constant 0 : index
    %c0_11 = arith.constant 0 : index
    %12 = vector.load %arg6[%c0_10, %c0_11] : memref<1x128xf32, #tpu.memory_space<vmem>>, vector<1x128xf32>
    %13 = vector.broadcast %12 : vector<1x128xf32> to vector<128x128xf32>
    %14 = arith.addf %11, %13 : vector<128x128xf32>
    %cst_12 = arith.constant 0.000000e+00 : f32
    %15 = vector.broadcast %cst_12 : f32 to vector<128x128xf32>
    %16 = arith.maximumf %14, %15 : vector<128x128xf32>
    %17 = arith.truncf %16 : vector<128x128xf32> to vector<128x128xbf16>
    %c0_13 = arith.constant 0 : index
    %c0_14 = arith.constant 0 : index
    %18 = vector.load %arg7[%c0_13, %c0_14] : memref<128x1024xbf16, #tpu.memory_space<vmem>>, vector<128x1024xbf16>
    %cst_15 = arith.constant dense<0.000000e+00> : vector<128x1024xf32>
    %19 = tpu.matmul %17, %18, %cst_15 {dimension_numbers = #tpu.dot_dimension_numbers<[1], [0], [0], [1], [0, 0, 1, 1], [], []>} : vector<128x128xbf16>, vector<128x1024xbf16>, vector<128x1024xf32> -> vector<128x1024xf32>
    %cst_16 = arith.constant dense<0xFF800000> : vector<1024xf32>
    %20 = vector.multi_reduction <maximumf>, %19, %cst_16 [0] : vector<128x1024xf32> to vector<1024xf32>
    %21 = vector.shape_cast %20 : vector<1024xf32> to vector<1x1024xf32>
    %c0_17 = arith.constant 0 : index
    %c0_18 = arith.constant 0 : index
    %c0_19 = arith.constant 0 : index
    %c0_20 = arith.constant 0 : index
    %22 = vector.load %arg8[%c0_17, %c0_18, %c0_19, %c0_20] : memref<1x1x1x1024xf32, #tpu.memory_space<vmem>>, vector<1x1x1x1024xf32>
    %23 = vector.shape_cast %22 : vector<1x1x1x1024xf32> to vector<1x1024xf32>
    %24 = vector.shape_cast %21 : vector<1x1024xf32> to vector<1x1x1x1024xf32>
    tpu.vector_store %arg8[%c0_17, %c0_18, %c0_19, %c0_20], %24 {strides = array<i32>} : memref<1x1x1x1024xf32, #tpu.memory_space<vmem>>, vector<1x1x1x1024xf32>,
    return
  }
  func.func @transform_0(%arg0: i32, %arg1: i32) -> (i32, i32, i32) {
    %c0_i32 = arith.constant 0 : i32
    %c0_i32_0 = arith.constant 0 : i32
    return %arg0, %arg1, %c0_i32 : i32, i32, i32
  }
  func.func @transform_1(%arg0: i32, %arg1: i32) -> (i32, i32) {
    %c0_i32 = arith.constant 0 : i32
    %c0_i32_0 = arith.constant 0 : i32
    %c0_i32_1 = arith.constant 0 : i32
    return %c0_i32, %c0_i32_0 : i32, i32
  }
  func.func @transform_2(%arg0: i32, %arg1: i32) -> (i32, i32) {
    %c0_i32 = arith.constant 0 : i32
    %c0_i32_0 = arith.constant 0 : i32
    %c0_i32_1 = arith.constant 0 : i32
    return %c0_i32, %c0_i32_0 : i32, i32
  }
  func.func @transform_3(%arg0: i32, %arg1: i32) -> (i32, i32) {
    %c0_i32 = arith.constant 0 : i32
    %c0_i32_0 = arith.constant 0 : i32
    %c0_i32_1 = arith.constant 0 : i32
    return %c0_i32, %c0_i32_0 : i32, i32
  }
  func.func @transform_4(%arg0: i32, %arg1: i32) -> (i32, i32) {
    %c0_i32 = arith.constant 0 : i32
    %c0_i32_0 = arith.constant 0 : i32
    %c0_i32_1 = arith.constant 0 : i32
    return %c0_i32, %c0_i32_0 : i32, i32
  }
  func.func @transform_5(%arg0: i32, %arg1: i32) -> (i32, i32) {
    %c0_i32 = arith.constant 0 : i32
    %c0_i32_0 = arith.constant 0 : i32
    %c0_i32_1 = arith.constant 0 : i32
    return %c0_i32, %c0_i32_0 : i32, i32
  }
  func.func @transform_6(%arg0: i32, %arg1: i32) -> (i32, i32, i32, i32) {
    %c0_i32 = arith.constant 0 : i32
    %c0_i32_0 = arith.constant 0 : i32
    %c0_i32_1 = arith.constant 0 : i32
    return %arg0, %arg1, %c0_i32, %c0_i32_0 : i32, i32, i32, i32
  }
}

module attributes {stable_mosaic.version = 11 : i64} {
  func.func @_mlp_max_kernel(%arg0: i32, %arg1: i32, %arg2: memref<1x128x8xbf16, #tpu.memory_space<vmem>>, %arg3: memref<1x8x64xbf16, #tpu.memory_space<vmem>>, %arg4: memref<1x64xf32, #tpu.memory_space<vmem>>, %arg5: memref<64x128xbf16, #tpu.memory_space<vmem>>, %arg6: memref<1x128xf32, #tpu.memory_space<vmem>>, %arg7: memref<128x1024xbf16, #tpu.memory_space<vmem>>, %arg8: memref<1x1x1x1024xf32, #tpu.memory_space<vmem>>) attributes {dimension_semantics = [#tpu.dimension_semantics<parallel>, #tpu.dimension_semantics<parallel>], iteration_bounds = array<i64: 2, 1>, scalar_prefetch = 0 : i64, scratch_operands = 0 : i64, tpu.core_type = #tpu.core_type<tc>, window_params = [{transform_indices = @transform_0, window_bounds = array<i64: 1, 128, 8>}, {transform_indices = @transform_1, window_bounds = array<i64: 1, 8, 64>}, {pipeline_mode = #tpu.pipeline_mode<synchronous>, transform_indices = @transform_2, window_bounds = array<i64: 1, 64>}, {pipeline_mode = #tpu.pipeline_mode<synchronous>, transform_indices = @transform_3, window_bounds = array<i64: 64, 128>}, {pipeline_mode = #tpu.pipeline_mode<synchronous>, transform_indices = @transform_4, window_bounds = array<i64: 1, 128>}, {pipeline_mode = #tpu.pipeline_mode<synchronous>, transform_indices = @transform_5, window_bounds = array<i64: 128, 1024>}, {transform_indices = @transform_6, window_bounds = array<i64: 1, 1, 1, 1024>}]} {
    %c0 = arith.constant 0 : index
    %c0_0 = arith.constant 0 : index
    %c0_1 = arith.constant 0 : index
    %0 = vector.load %arg2[%c0, %c0_0, %c0_1] : memref<1x128x8xbf16, #tpu.memory_space<vmem>>, vector<1x128x8xbf16>
    %1 = vector.shape_cast %0 : vector<1x128x8xbf16> to vector<128x8xbf16>
    %c0_2 = arith.constant 0 : index
    %c0_3 = arith.constant 0 : index
    %c0_4 = arith.constant 0 : index
    %2 = vector.load %arg3[%c0_2, %c0_3, %c0_4] : memref<1x8x64xbf16, #tpu.memory_space<vmem>>, vector<1x8x64xbf16>
    %3 = vector.shape_cast %2 : vector<1x8x64xbf16> to vector<8x64xbf16>
    %cst = arith.constant dense<0.000000e+00> : vector<128x64xf32>
    %4 = tpu.matmul %1, %3, %cst {dimension_numbers = #tpu.dot_dimension_numbers<[1], [0], [0], [1], [0, 0, 1, 1], [], []>} : vector<128x8xbf16>, vector<8x64xbf16>, vector<128x64xf32> -> vector<128x64xf32>
    %c0_5 = arith.constant 0 : index
    %c0_6 = arith.constant 0 : index
    %5 = vector.load %arg4[%c0_5, %c0_6] : memref<1x64xf32, #tpu.memory_space<vmem>>, vector<1x64xf32>
    %6 = vector.broadcast %5 : vector<1x64xf32> to vector<128x64xf32>
    %7 = arith.addf %4, %6 : vector<128x64xf32>
    %cst_7 = arith.constant 0.000000e+00 : f32
    %8 = vector.broadcast %cst_7 : f32 to vector<128x64xf32>
    %9 = arith.maximumf %7, %8 : vector<128x64xf32>
    %10 = arith.truncf %9 : vector<128x64xf32> to vector<128x64xbf16>
    %c0_8 = arith.constant 0 : index
    %c0_9 = arith.constant 0 : index
    %11 = vector.load %arg5[%c0_8, %c0_9] : memref<64x128xbf16, #tpu.memory_space<vmem>>, vector<64x128xbf16>
    %cst_10 = arith.constant dense<0.000000e+00> : vector<128x128xf32>
    %12 = tpu.matmul %10, %11, %cst_10 {dimension_numbers = #tpu.dot_dimension_numbers<[1], [0], [0], [1], [0, 0, 1, 1], [], []>} : vector<128x64xbf16>, vector<64x128xbf16>, vector<128x128xf32> -> vector<128x128xf32>
    %c0_11 = arith.constant 0 : index
    %c0_12 = arith.constant 0 : index
    %13 = vector.load %arg6[%c0_11, %c0_12] : memref<1x128xf32, #tpu.memory_space<vmem>>, vector<1x128xf32>
    %14 = vector.broadcast %13 : vector<1x128xf32> to vector<128x128xf32>
    %15 = arith.addf %12, %14 : vector<128x128xf32>
    %cst_13 = arith.constant 0.000000e+00 : f32
    %16 = vector.broadcast %cst_13 : f32 to vector<128x128xf32>
    %17 = arith.maximumf %15, %16 : vector<128x128xf32>
    %18 = arith.truncf %17 : vector<128x128xf32> to vector<128x128xbf16>
    %c0_14 = arith.constant 0 : index
    %c0_15 = arith.constant 0 : index
    %19 = vector.load %arg7[%c0_14, %c0_15] : memref<128x1024xbf16, #tpu.memory_space<vmem>>, vector<128x1024xbf16>
    %cst_16 = arith.constant dense<0.000000e+00> : vector<128x1024xf32>
    %20 = tpu.matmul %18, %19, %cst_16 {dimension_numbers = #tpu.dot_dimension_numbers<[1], [0], [0], [1], [0, 0, 1, 1], [], []>} : vector<128x128xbf16>, vector<128x1024xbf16>, vector<128x1024xf32> -> vector<128x1024xf32>
    %cst_17 = arith.constant dense<0xFF800000> : vector<1024xf32>
    %21 = vector.multi_reduction <maximumf>, %20, %cst_17 [0] : vector<128x1024xf32> to vector<1024xf32>
    %22 = vector.shape_cast %21 : vector<1024xf32> to vector<1x1024xf32>
    %c0_18 = arith.constant 0 : index
    %c0_19 = arith.constant 0 : index
    %c0_20 = arith.constant 0 : index
    %c0_21 = arith.constant 0 : index
    %23 = vector.load %arg8[%c0_18, %c0_19, %c0_20, %c0_21] : memref<1x1x1x1024xf32, #tpu.memory_space<vmem>>, vector<1x1x1x1024xf32>
    %24 = vector.shape_cast %23 : vector<1x1x1x1024xf32> to vector<1x1024xf32>
    %25 = vector.shape_cast %22 : vector<1x1024xf32> to vector<1x1x1x1024xf32>
    tpu.vector_store %arg8[%c0_18, %c0_19, %c0_20, %c0_21], %25 {strides = array<i32>} : memref<1x1x1x1024xf32, #tpu.memory_space<vmem>>, vector<1x1x1x1024xf32>,
    return
  }
  func.func @transform_0(%arg0: i32, %arg1: i32) -> (i32, i32, i32) {
    %c0_i32 = arith.constant 0 : i32
    %c0_i32_0 = arith.constant 0 : i32
    return %arg0, %arg1, %c0_i32 : i32, i32, i32
  }
  func.func @transform_1(%arg0: i32, %arg1: i32) -> (i32, i32, i32) {
    %c0_i32 = arith.constant 0 : i32
    %c0_i32_0 = arith.constant 0 : i32
    %c0_i32_1 = arith.constant 0 : i32
    return %arg0, %c0_i32, %c0_i32_0 : i32, i32, i32
  }
  func.func @transform_2(%arg0: i32, %arg1: i32) -> (i32, i32) {
    %c0_i32 = arith.constant 0 : i32
    %c0_i32_0 = arith.constant 0 : i32
    %c0_i32_1 = arith.constant 0 : i32
    return %c0_i32, %c0_i32_0 : i32, i32
  }
  func.func @transform_3(%arg0: i32, %arg1: i32) -> (i32, i32) {
    %c0_i32 = arith.constant 0 : i32
    %c0_i32_0 = arith.constant 0 : i32
    %c0_i32_1 = arith.constant 0 : i32
    return %c0_i32, %c0_i32_0 : i32, i32
  }
  func.func @transform_4(%arg0: i32, %arg1: i32) -> (i32, i32) {
    %c0_i32 = arith.constant 0 : i32
    %c0_i32_0 = arith.constant 0 : i32
    %c0_i32_1 = arith.constant 0 : i32
    return %c0_i32, %c0_i32_0 : i32, i32
  }
  func.func @transform_5(%arg0: i32, %arg1: i32) -> (i32, i32) {
    %c0_i32 = arith.constant 0 : i32
    %c0_i32_0 = arith.constant 0 : i32
    %c0_i32_1 = arith.constant 0 : i32
    return %c0_i32, %c0_i32_0 : i32, i32
  }
  func.func @transform_6(%arg0: i32, %arg1: i32) -> (i32, i32, i32, i32) {
    %c0_i32 = arith.constant 0 : i32
    %c0_i32_0 = arith.constant 0 : i32
    %c0_i32_1 = arith.constant 0 : i32
    return %arg0, %arg1, %c0_i32, %c0_i32_0 : i32, i32, i32, i32
  }
}

module attributes {stable_mosaic.version = 11 : i64} {
  func.func @_cls_head_kernel(%arg0: i32, %arg1: i32, %arg2: memref<1x128x8xbf16, #tpu.memory_space<vmem>>, %arg3: memref<1x8x64xbf16, #tpu.memory_space<vmem>>, %arg4: memref<1x64xf32, #tpu.memory_space<vmem>>, %arg5: memref<1x1x512xf32, #tpu.memory_space<vmem>>, %arg6: memref<64x512xbf16, #tpu.memory_space<vmem>>, %arg7: memref<512x256xbf16, #tpu.memory_space<vmem>>, %arg8: memref<1x256xf32, #tpu.memory_space<vmem>>, %arg9: memref<256x128xbf16, #tpu.memory_space<vmem>>, %arg10: memref<1x128xf32, #tpu.memory_space<vmem>>, %arg11: memref<128x128xbf16, #tpu.memory_space<vmem>>, %arg12: memref<1x128xf32, #tpu.memory_space<vmem>>, %arg13: memref<1x2x128xf32, #tpu.memory_space<vmem>>) attributes {dimension_semantics = [#tpu.dimension_semantics<parallel>, #tpu.dimension_semantics<parallel>], iteration_bounds = array<i64: 2, 1>, scalar_prefetch = 0 : i64, scratch_operands = 0 : i64, tpu.core_type = #tpu.core_type<tc>, window_params = [{transform_indices = @transform_0, window_bounds = array<i64: 1, 128, 8>}, {transform_indices = @transform_1, window_bounds = array<i64: 1, 8, 64>}, {pipeline_mode = #tpu.pipeline_mode<synchronous>, transform_indices = @transform_2, window_bounds = array<i64: 1, 64>}, {transform_indices = @transform_3, window_bounds = array<i64: 1, 1, 512>}, {pipeline_mode = #tpu.pipeline_mode<synchronous>, transform_indices = @transform_4, window_bounds = array<i64: 64, 512>}, {pipeline_mode = #tpu.pipeline_mode<synchronous>, transform_indices = @transform_5, window_bounds = array<i64: 512, 256>}, {pipeline_mode = #tpu.pipeline_mode<synchronous>, transform_indices = @transform_6, window_bounds = array<i64: 1, 256>}, {pipeline_mode = #tpu.pipeline_mode<synchronous>, transform_indices = @transform_7, window_bounds = array<i64: 256, 128>}, {pipeline_mode = #tpu.pipeline_mode<synchronous>, transform_indices = @transform_8, window_bounds = array<i64: 1, 128>}, {pipeline_mode = #tpu.pipeline_mode<synchronous>, transform_indices = @transform_9, window_bounds = array<i64: 128, 128>}, {pipeline_mode = #tpu.pipeline_mode<synchronous>, transform_indices = @transform_10, window_bounds = array<i64: 1, 128>}, {transform_indices = @transform_11, window_bounds = array<i64: 1, 2, 128>}]} {
    %c0 = arith.constant 0 : index
    %c0_0 = arith.constant 0 : index
    %c0_1 = arith.constant 0 : index
    %0 = vector.load %arg2[%c0, %c0_0, %c0_1] : memref<1x128x8xbf16, #tpu.memory_space<vmem>>, vector<1x128x8xbf16>
    %1 = vector.shape_cast %0 : vector<1x128x8xbf16> to vector<128x8xbf16>
    %c0_2 = arith.constant 0 : index
    %c0_3 = arith.constant 0 : index
    %c0_4 = arith.constant 0 : index
    %2 = vector.load %arg3[%c0_2, %c0_3, %c0_4] : memref<1x8x64xbf16, #tpu.memory_space<vmem>>, vector<1x8x64xbf16>
    %3 = vector.shape_cast %2 : vector<1x8x64xbf16> to vector<8x64xbf16>
    %cst = arith.constant dense<0.000000e+00> : vector<128x64xf32>
    %4 = tpu.matmul %1, %3, %cst {dimension_numbers = #tpu.dot_dimension_numbers<[1], [0], [0], [1], [0, 0, 1, 1], [], []>} : vector<128x8xbf16>, vector<8x64xbf16>, vector<128x64xf32> -> vector<128x64xf32>
    %c0_5 = arith.constant 0 : index
    %c0_6 = arith.constant 0 : index
    %5 = vector.load %arg4[%c0_5, %c0_6] : memref<1x64xf32, #tpu.memory_space<vmem>>, vector<1x64xf32>
    %6 = vector.broadcast %5 : vector<1x64xf32> to vector<128x64xf32>
    %7 = arith.addf %4, %6 : vector<128x64xf32>
    %cst_7 = arith.constant 0.000000e+00 : f32
    %8 = vector.broadcast %cst_7 : f32 to vector<128x64xf32>
    %9 = arith.maximumf %7, %8 : vector<128x64xf32>
    %10 = arith.truncf %9 : vector<128x64xf32> to vector<128x64xbf16>
    %c0_8 = arith.constant 0 : index
    %c0_9 = arith.constant 0 : index
    %11 = vector.load %arg6[%c0_8, %c0_9] : memref<64x512xbf16, #tpu.memory_space<vmem>>, vector<64x512xbf16>
    %cst_10 = arith.constant dense<0.000000e+00> : vector<128x512xf32>
    %12 = tpu.matmul %10, %11, %cst_10 {dimension_numbers = #tpu.dot_dimension_numbers<[1], [0], [0], [1], [0, 0, 1, 1], [], []>} : vector<128x64xbf16>, vector<64x512xbf16>, vector<128x512xf32> -> vector<128x512xf32>
    %c0_11 = arith.constant 0 : index
    %c0_12 = arith.constant 0 : index
    %c0_13 = arith.constant 0 : index
    %13 = vector.load %arg5[%c0_11, %c0_12, %c0_13] : memref<1x1x512xf32, #tpu.memory_space<vmem>>, vector<1x1x512xf32>
    %14 = vector.shape_cast %13 : vector<1x1x512xf32> to vector<1x512xf32>
    %15 = vector.broadcast %14 : vector<1x512xf32> to vector<128x512xf32>
    %16 = arith.addf %12, %15 : vector<128x512xf32>
    %cst_14 = arith.constant 0.000000e+00 : f32
    %17 = vector.broadcast %cst_14 : f32 to vector<128x512xf32>
    %18 = arith.maximumf %16, %17 : vector<128x512xf32>
    %19 = arith.truncf %18 : vector<128x512xf32> to vector<128x512xbf16>
    %c0_15 = arith.constant 0 : index
    %c0_16 = arith.constant 0 : index
    %20 = vector.load %arg7[%c0_15, %c0_16] : memref<512x256xbf16, #tpu.memory_space<vmem>>, vector<512x256xbf16>
    %cst_17 = arith.constant dense<0.000000e+00> : vector<128x256xf32>
    %21 = tpu.matmul %19, %20, %cst_17 {dimension_numbers = #tpu.dot_dimension_numbers<[1], [0], [0], [1], [0, 0, 1, 1], [], []>} : vector<128x512xbf16>, vector<512x256xbf16>, vector<128x256xf32> -> vector<128x256xf32>
    %c0_18 = arith.constant 0 : index
    %c0_19 = arith.constant 0 : index
    %22 = vector.load %arg8[%c0_18, %c0_19] : memref<1x256xf32, #tpu.memory_space<vmem>>, vector<1x256xf32>
    %23 = vector.broadcast %22 : vector<1x256xf32> to vector<128x256xf32>
    %24 = arith.addf %21, %23 : vector<128x256xf32>
    %cst_20 = arith.constant 0.000000e+00 : f32
    %25 = vector.broadcast %cst_20 : f32 to vector<128x256xf32>
    %26 = arith.maximumf %24, %25 : vector<128x256xf32>
    %27 = arith.truncf %26 : vector<128x256xf32> to vector<128x256xbf16>
    %c0_21 = arith.constant 0 : index
    %c0_22 = arith.constant 0 : index
    %28 = vector.load %arg9[%c0_21, %c0_22] : memref<256x128xbf16, #tpu.memory_space<vmem>>, vector<256x128xbf16>
    %cst_23 = arith.constant dense<0.000000e+00> : vector<128x128xf32>
    %29 = tpu.matmul %27, %28, %cst_23 {dimension_numbers = #tpu.dot_dimension_numbers<[1], [0], [0], [1], [0, 0, 1, 1], [], []>} : vector<128x256xbf16>, vector<256x128xbf16>, vector<128x128xf32> -> vector<128x128xf32>
    %c0_24 = arith.constant 0 : index
    %c0_25 = arith.constant 0 : index
    %30 = vector.load %arg10[%c0_24, %c0_25] : memref<1x128xf32, #tpu.memory_space<vmem>>, vector<1x128xf32>
    %31 = vector.broadcast %30 : vector<1x128xf32> to vector<128x128xf32>
    %32 = arith.addf %29, %31 : vector<128x128xf32>
    %cst_26 = arith.constant 0.000000e+00 : f32
    %33 = vector.broadcast %cst_26 : f32 to vector<128x128xf32>
    %34 = arith.maximumf %32, %33 : vector<128x128xf32>
    %35 = arith.truncf %34 : vector<128x128xf32> to vector<128x128xbf16>
    %c0_27 = arith.constant 0 : index
    %c0_28 = arith.constant 0 : index
    %36 = vector.load %arg11[%c0_27, %c0_28] : memref<128x128xbf16, #tpu.memory_space<vmem>>, vector<128x128xbf16>
    %cst_29 = arith.constant dense<0.000000e+00> : vector<128x128xf32>
    %37 = tpu.matmul %35, %36, %cst_29 {dimension_numbers = #tpu.dot_dimension_numbers<[1], [0], [0], [1], [0, 0, 1, 1], [], []>} : vector<128x128xbf16>, vector<128x128xbf16>, vector<128x128xf32> -> vector<128x128xf32>
    %c0_30 = arith.constant 0 : index
    %c0_31 = arith.constant 0 : index
    %38 = vector.load %arg12[%c0_30, %c0_31] : memref<1x128xf32, #tpu.memory_space<vmem>>, vector<1x128xf32>
    %39 = vector.broadcast %38 : vector<1x128xf32> to vector<128x128xf32>
    %40 = arith.addf %37, %39 : vector<128x128xf32>
    %cst_32 = arith.constant dense<0xFF800000> : vector<128xf32>
    %41 = vector.multi_reduction <maximumf>, %40, %cst_32 [1] : vector<128x128xf32> to vector<128xf32>
    %42 = vector.shape_cast %41 : vector<128xf32> to vector<128x1xf32>
    %43 = vector.broadcast %42 : vector<128x1xf32> to vector<128x128xf32>
    %44 = arith.subf %40, %43 : vector<128x128xf32>
    %45 = math.exp %44 : vector<128x128xf32>
    %cst_33 = arith.constant dense<0.000000e+00> : vector<128xf32>
    %46 = vector.multi_reduction <add>, %45, %cst_33 [1] : vector<128x128xf32> to vector<128xf32>
    %47 = vector.shape_cast %46 : vector<128xf32> to vector<128x1xf32>
    %48 = math.log %47 : vector<128x1xf32>
    %49 = vector.broadcast %48 : vector<128x1xf32> to vector<128x128xf32>
    %50 = arith.subf %44, %49 : vector<128x128xf32>
    %51 = tpu.transpose %50, [1, 0] : vector<128x128xf32> -> vector<128x128xf32>
    %52 = vector.extract_strided_slice %51 {offsets = [0, 0], sizes = [2, 128], strides = [1, 1]} : vector<128x128xf32> to vector<2x128xf32>
    %c0_34 = arith.constant 0 : index
    %c0_35 = arith.constant 0 : index
    %c0_36 = arith.constant 0 : index
    %53 = vector.load %arg13[%c0_34, %c0_35, %c0_36] : memref<1x2x128xf32, #tpu.memory_space<vmem>>, vector<1x2x128xf32>
    %54 = vector.shape_cast %53 : vector<1x2x128xf32> to vector<2x128xf32>
    %55 = vector.shape_cast %52 : vector<2x128xf32> to vector<1x2x128xf32>
    tpu.vector_store %arg13[%c0_34, %c0_35, %c0_36], %55 {strides = array<i32>} : memref<1x2x128xf32, #tpu.memory_space<vmem>>, vector<1x2x128xf32>,
    return
  }
  func.func @transform_0(%arg0: i32, %arg1: i32) -> (i32, i32, i32) {
    %c0_i32 = arith.constant 0 : i32
    %c0_i32_0 = arith.constant 0 : i32
    return %arg0, %arg1, %c0_i32 : i32, i32, i32
  }
  func.func @transform_1(%arg0: i32, %arg1: i32) -> (i32, i32, i32) {
    %c0_i32 = arith.constant 0 : i32
    %c0_i32_0 = arith.constant 0 : i32
    %c0_i32_1 = arith.constant 0 : i32
    return %arg0, %c0_i32, %c0_i32_0 : i32, i32, i32
  }
  func.func @transform_2(%arg0: i32, %arg1: i32) -> (i32, i32) {
    %c0_i32 = arith.constant 0 : i32
    %c0_i32_0 = arith.constant 0 : i32
    %c0_i32_1 = arith.constant 0 : i32
    return %c0_i32, %c0_i32_0 : i32, i32
  }
  func.func @transform_3(%arg0: i32, %arg1: i32) -> (i32, i32, i32) {
    %c0_i32 = arith.constant 0 : i32
    %c0_i32_0 = arith.constant 0 : i32
    %c0_i32_1 = arith.constant 0 : i32
    return %arg0, %c0_i32, %c0_i32_0 : i32, i32, i32
  }
  func.func @transform_4(%arg0: i32, %arg1: i32) -> (i32, i32) {
    %c0_i32 = arith.constant 0 : i32
    %c0_i32_0 = arith.constant 0 : i32
    %c0_i32_1 = arith.constant 0 : i32
    return %c0_i32, %c0_i32_0 : i32, i32
  }
  func.func @transform_5(%arg0: i32, %arg1: i32) -> (i32, i32) {
    %c0_i32 = arith.constant 0 : i32
    %c0_i32_0 = arith.constant 0 : i32
    %c0_i32_1 = arith.constant 0 : i32
    return %c0_i32, %c0_i32_0 : i32, i32
  }
  func.func @transform_6(%arg0: i32, %arg1: i32) -> (i32, i32) {
    %c0_i32 = arith.constant 0 : i32
    %c0_i32_0 = arith.constant 0 : i32
    %c0_i32_1 = arith.constant 0 : i32
    return %c0_i32, %c0_i32_0 : i32, i32
  }
  func.func @transform_7(%arg0: i32, %arg1: i32) -> (i32, i32) {
    %c0_i32 = arith.constant 0 : i32
    %c0_i32_0 = arith.constant 0 : i32
    %c0_i32_1 = arith.constant 0 : i32
    return %c0_i32, %c0_i32_0 : i32, i32
  }
  func.func @transform_8(%arg0: i32, %arg1: i32) -> (i32, i32) {
    %c0_i32 = arith.constant 0 : i32
    %c0_i32_0 = arith.constant 0 : i32
    %c0_i32_1 = arith.constant 0 : i32
    return %c0_i32, %c0_i32_0 : i32, i32
  }
  func.func @transform_9(%arg0: i32, %arg1: i32) -> (i32, i32) {
    %c0_i32 = arith.constant 0 : i32
    %c0_i32_0 = arith.constant 0 : i32
    %c0_i32_1 = arith.constant 0 : i32
    return %c0_i32, %c0_i32_0 : i32, i32
  }
  func.func @transform_10(%arg0: i32, %arg1: i32) -> (i32, i32) {
    %c0_i32 = arith.constant 0 : i32
    %c0_i32_0 = arith.constant 0 : i32
    %c0_i32_1 = arith.constant 0 : i32
    return %c0_i32, %c0_i32_0 : i32, i32
  }
  func.func @transform_11(%arg0: i32, %arg1: i32) -> (i32, i32, i32) {
    %c0_i32 = arith.constant 0 : i32
    %c0_i32_0 = arith.constant 0 : i32
    return %arg0, %c0_i32, %arg1 : i32, i32, i32
  }
}

</mosaic_0001>

<llo_original>
// kernel: pointnet_dense_cls_forward.3
$region0: #{pointnet_dense_cls_forward.3}
  #allocation0 [shape = 'u32[]', space=smem, size = 0x4, offset = 0x4, fixed_abs, tag = 'smem constant byte address 0x4 - core index']
  #allocation1 [shape = 'u32[72,128]{1,0:T(1,128)}', space=vmem, size = 0x9000, scoped, tag = 'internal scratch']
  %s0 = inlined_call_operand.vmem [shape: bf16[2,128,8], index: 0, kind: input, shape index: {}]
  %s1 = inlined_call_operand.vmem [shape: bf16[8,64], index: 1, kind: input, shape index: {}]
  %s2 = inlined_call_operand.hbm [shape: f32[1,64], index: 2, kind: input, shape index: {}]
  %s3 = inlined_call_operand.vmem [shape: bf16[64,128], index: 3, kind: input, shape index: {}]
  %s4 = inlined_call_operand.hbm [shape: f32[1,128], index: 4, kind: input, shape index: {}]
  %s5 = inlined_call_operand.vmem [shape: bf16[128,1024], index: 5, kind: input, shape index: {}]
  %s6 = inlined_call_operand.vmem [shape: f32[2,1,1,1024], index: 6, kind: output, shape index: {}]
  %s7 = sld [smem:[#allocation0]]
  $region65: #{pointnet_dense_cls_forward.3} parent=0
    _
  %s9 = ssub.s32 1, %s7
  %s10 = scalar_select 0, %s9, %s7
  $region1: #{pointnet_dense_cls_forward.3} parent=0
    #allocation2 [shape = 'u8[512]{0}', space=vmem, size = 0x400, scoped, tag = 'input window, operand 2, single buffered']
    #allocation3 [shape = 's32[2]{0}', space=sflag, size = 0x8, scoped, tag = 'scoped memory for pointnet_dense_cls_forward.3']
    #allocation4 [shape = 'u8[512]{0}', space=vmem, size = 0x400, scoped, tag = 'input window, operand 4, single buffered']
    #allocation5 [shape = 's32[1]{0}', space=sflag, size = 0x4, scoped, tag = 'scoped memory for pointnet_dense_cls_forward.3']
    %11 = vsyncpa [#allocation3], 0
    %12 = vsyncpa [#allocation5], 0
    loop: start=0, step=1, limit=4
    $region2: #{pointnet_dense_cls_forward.3} parent=1 // loop_pre_header
      _
    $region3: #{pointnet_dense_cls_forward.3} parent=1 // loop_header
      %s14 = sphi 0, %s18
      %p15 = scmp.ge.s32.totalorder %s14, 4
      %s21 = sphi 0, %s33
      %s22 = sphi 0, %s29
      %s23 = sphi 0, %s21
      %s24 = sphi 0, %s22
      %s25 = sphi 0, %s23
      %s26 = sphi 0, %s24
      %s38 = sphi 0, %s40
      %s41 = sphi 0, %s38
      %s42 = sphi 0, %s41
      %s58 = sphi 0, %s42
      %s62 = sphi 0, %s62
      %s64 = sphi 0, %s62
      %s65 = sphi 0, %s64
      %s79 = sphi 0, %s65
      %s83 = sphi 0, %s83
      %s85 = sphi 0, %s83
      %s86 = sphi 0, %s85
      %s100 = sphi 0, %s86
      %s104 = sphi 0, %s104
      %s106 = sphi 0, %s104
      %s107 = sphi 0, %s106
      %s121 = sphi 0, %s107
      %s125 = sphi 0, %s125
      %s127 = sphi 0, %s125
      %s128 = sphi 0, %s127
      %s142 = sphi 0, %s128
      %s146 = sphi 0, %s146
      %s148 = sphi 0, %s146
      %s149 = sphi 0, %s148
      %s163 = sphi 0, %s149
      %s171 = sphi 0, %s173
      %s174 = sphi 0, %s171
      %s175 = sphi 0, %s174
      %s191 = sphi 0, %s175
    $region4: #{pointnet_dense_cls_forward.3} parent=1 // loop_header_branch
      %17 = sbr.rel (%p15) target = $region8
    $region5: #{pointnet_dense_cls_forward.3} parent=1 // loop_body
      %s19 = ssub.s32 %s14, 1
      %s20 = ssub.s32 %s14, 2
      %s27 = sadd.s32 1, %s22
      %p28 = scmp.ge.s32.totalorder %s27, 1
      %s29 = scalar_select %p28, 0, %s27
      %s30 = sadd.s32 1, %s21
      %s31 = scalar_select %p28, %s30, %s21
      %p32 = scmp.ge.s32.totalorder %s31, 2
      %s33 = scalar_select %p32, 0, %s31
      %s34 = ssub.s32 %s21, %s33
      %s35 = ssub.s32 %s22, %s29
      %s36 = sor.u32 %s34, %s35
      %p37 = scmp.eq.s32.totalorder %s36, 0
      %s39 = sadd.s32 %s38, 1
      %s40 = scalar_select %p37, %s38, %s39
      %p43 = pneg %p37
      %p44 = scmp.eq.s32.totalorder %s14, 1
      %p45 = por %p43, %p44
      %p46 = scmp.ne.s32.totalorder %s38, %s41
      %p47 = scmp.eq.s32.totalorder %s14, 0
      %p48 = por %p46, %p47
      %p49 = scmp.ne.s32.totalorder %s38, %s41
      %p50 = scmp.eq.s32.totalorder %s19, 1
      %p51 = por %p49, %p50
      %p52 = scmp.ne.s32.totalorder %s41, %s42
      %p53 = scmp.eq.s32.totalorder %s19, 0
      %p54 = por %p52, %p53
      %p55 = scmp.ne.s32.totalorder %s41, %s42
      %p56 = scmp.eq.s32.totalorder %s20, 1
      %p57 = por %p55, %p56
      %p59 = scmp.ne.s32.totalorder %s42, %s58
      %p60 = scmp.eq.s32.totalorder %s20, 0
      %p61 = por %p59, %p60
      %s63 = sadd.s32 %s62, 1
      %p66 = scmp.eq.s32.totalorder %s14, 1
      %p67 = scmp.ne.s32.totalorder %s62, %s64
      %p68 = scmp.eq.s32.totalorder %s14, 0
      %p69 = por %p67, %p68
      %p70 = scmp.ne.s32.totalorder %s62, %s64
      %p71 = scmp.eq.s32.totalorder %s19, 1
      %p72 = por %p70, %p71
      %p73 = scmp.ne.s32.totalorder %s64, %s65
      %p74 = scmp.eq.s32.totalorder %s19, 0
      %p75 = por %p73, %p74
      %p76 = scmp.ne.s32.totalorder %s64, %s65
      %p77 = scmp.eq.s32.totalorder %s20, 1
      %p78 = por %p76, %p77
      %p80 = scmp.ne.s32.totalorder %s65, %s79
      %p81 = scmp.eq.s32.totalorder %s20, 0
      %p82 = por %p80, %p81
      %s84 = sadd.s32 %s83, 1
      %p87 = scmp.eq.s32.totalorder %s14, 1
      %p88 = scmp.ne.s32.totalorder %s83, %s85
      %p89 = scmp.eq.s32.totalorder %s14, 0
      %p90 = por %p88, %p89
      %p91 = scmp.ne.s32.totalorder %s83, %s85
      %p92 = scmp.eq.s32.totalorder %s19, 1
      %p93 = por %p91, %p92
      %p94 = scmp.ne.s32.totalorder %s85, %s86
      %p95 = scmp.eq.s32.totalorder %s19, 0
      %p96 = por %p94, %p95
      %p97 = scmp.ne.s32.totalorder %s85, %s86
      %p98 = scmp.eq.s32.totalorder %s20, 1
      %p99 = por %p97, %p98
      %p101 = scmp.ne.s32.totalorder %s86, %s100
      %p102 = scmp.eq.s32.totalorder %s20, 0
      %p103 = por %p101, %p102
      %s105 = sadd.s32 %s104, 1
      %p108 = scmp.eq.s32.totalorder %s14, 1
      %p109 = scmp.ne.s32.totalorder %s104, %s106
      %p110 = scmp.eq.s32.totalorder %s14, 0
      %p111 = por %p109, %p110
      %p112 = scmp.ne.s32.totalorder %s104, %s106
      %p113 = scmp.eq.s32.totalorder %s19, 1
      %p114 = por %p112, %p113
      %p115 = scmp.ne.s32.totalorder %s106, %s107
      %p116 = scmp.eq.s32.totalorder %s19, 0
      %p117 = por %p115, %p116
      %p118 = scmp.ne.s32.totalorder %s106, %s107
      %p119 = scmp.eq.s32.totalorder %s20, 1
      %p120 = por %p118, %p119
      %p122 = scmp.ne.s32.totalorder %s107, %s121
      %p123 = scmp.eq.s32.totalorder %s20, 0
      %p124 = por %p122, %p123
      %s126 = sadd.s32 %s125, 1
      %p129 = scmp.eq.s32.totalorder %s14, 1
      %p130 = scmp.ne.s32.totalorder %s125, %s127
      %p131 = scmp.eq.s32.totalorder %s14, 0
      %p132 = por %p130, %p131
      %p133 = scmp.ne.s32.totalorder %s125, %s127
      %p134 = scmp.eq.s32.totalorder %s19, 1
      %p135 = por %p133, %p134
      %p136 = scmp.ne.s32.totalorder %s127, %s128
      %p137 = scmp.eq.s32.totalorder %s19, 0
      %p138 = por %p136, %p137
      %p139 = scmp.ne.s32.totalorder %s127, %s128
      %p140 = scmp.eq.s32.totalorder %s20, 1
      %p141 = por %p139, %p140
      %p143 = scmp.ne.s32.totalorder %s128, %s142
      %p144 = scmp.eq.s32.totalorder %s20, 0
      %p145 = por %p143, %p144
      %s147 = sadd.s32 %s146, 1
      %p150 = scmp.eq.s32.totalorder %s14, 1
      %p151 = scmp.ne.s32.totalorder %s146, %s148
      %p152 = scmp.eq.s32.totalorder %s14, 0
      %p153 = por %p151, %p152
      %p154 = scmp.ne.s32.totalorder %s146, %s148
      %p155 = scmp.eq.s32.totalorder %s19, 1
      %p156 = por %p154, %p155
      %p157 = scmp.ne.s32.totalorder %s148, %s149
      %p158 = scmp.eq.s32.totalorder %s19, 0
      %p159 = por %p157, %p158
      %p160 = scmp.ne.s32.totalorder %s148, %s149
      %p161 = scmp.eq.s32.totalorder %s20, 1
      %p162 = por %p160, %p161
      %p164 = scmp.ne.s32.totalorder %s149, %s163
      %p165 = scmp.eq.s32.totalorder %s20, 0
      %p166 = por %p164, %p165
      %s167 = ssub.s32 %s21, %s33
      %s168 = ssub.s32 %s22, %s29
      %s169 = sor.u32 %s167, %s168
      %p170 = scmp.eq.s32.totalorder %s169, 0
      %s172 = sadd.s32 %s171, 1
      %s173 = scalar_select %p170, %s171, %s172
      %p176 = pneg %p170
      %p177 = scmp.eq.s32.totalorder %s14, 1
      %p178 = por %p176, %p177
      %p179 = scmp.ne.s32.totalorder %s171, %s174
      %p180 = scmp.eq.s32.totalorder %s14, 0
      %p181 = por %p179, %p180
      %p182 = scmp.ne.s32.totalorder %s171, %s174
      %p183 = scmp.eq.s32.totalorder %s19, 1
      %p184 = por %p182, %p183
      %p185 = scmp.ne.s32.totalorder %s174, %s175
      %p186 = scmp.eq.s32.totalorder %s19, 0
      %p187 = por %p185, %p186
      %p188 = scmp.ne.s32.totalorder %s174, %s175
      %p189 = scmp.eq.s32.totalorder %s20, 1
      %p190 = por %p188, %p189
      %p192 = scmp.ne.s32.totalorder %s175, %s191
      %p193 = scmp.eq.s32.totalorder %s20, 0
      %p194 = por %p192, %p193
      %p195 = scmp.le.s32.totalorder 1, %s14
      %p196 = scmp.lt.s32.totalorder %s14, 3
      %p197 = pnand %p195, %p196
      %p198 = pneg %p197
      // Predicated region
      $region9: #{pointnet_dense_cls_forward.3} parent=5 // pred_check
        _
      $region10: #{pointnet_dense_cls_forward.3} parent=5 // pred_check_branch
        %200 = sbr.rel (%p197) target = $region12
      $region11: #{pointnet_dense_cls_forward.3} parent=5 // pred_region
        %s201 = ssub.s32 %s14, 1
        // Predicated region
        $region13: #{pointnet_dense_cls_forward.3} parent=11 // pred_check
          %p202 = pneg %p75
        $region14: #{pointnet_dense_cls_forward.3} parent=11 // pred_check_branch
          %204 = sbr.rel (%p202) target = $region16
        $region15: #{pointnet_dense_cls_forward.3} parent=11 // pred_region
          _
        $region16: #{pointnet_dense_cls_forward.3} parent=11 // pred_fallthru
          _
        // Predicated region
        $region17: #{pointnet_dense_cls_forward.3} parent=11 // pred_check
          %p205 = pneg %p96
        $region18: #{pointnet_dense_cls_forward.3} parent=11 // pred_check_branch
          %207 = sbr.rel (%p205) target = $region20
        $region19: #{pointnet_dense_cls_forward.3} parent=11 // pred_region
          %209 = vsyncadd [#allocation3], 0
          %s211 = sshll.u32 %s2, 4
          %s212 = int_to_ptr.hbm [resolvable:$true] %s211
          %s213 = sshll.u32 [#allocation2], 4
          %s214 = int_to_ptr.vmem [resolvable:$true] %s213
          %216 = dma.hbm_to_vmem [thread:$0]  %s212, 16, %s214, [#allocation3]
        $region20: #{pointnet_dense_cls_forward.3} parent=11 // pred_fallthru
          _
        // Predicated region
        $region21: #{pointnet_dense_cls_forward.3} parent=11 // pred_check
          %p217 = pneg %p117
        $region22: #{pointnet_dense_cls_forward.3} parent=11 // pred_check_branch
          %219 = sbr.rel (%p217) target = $region24
        $region23: #{pointnet_dense_cls_forward.3} parent=11 // pred_region
          _
        $region24: #{pointnet_dense_cls_forward.3} parent=11 // pred_fallthru
          _
        // Predicated region
        $region25: #{pointnet_dense_cls_forward.3} parent=11 // pred_check
          %p220 = pneg %p138
        $region26: #{pointnet_dense_cls_forward.3} parent=11 // pred_check_branch
          %222 = sbr.rel (%p220) target = $region28
        $region27: #{pointnet_dense_cls_forward.3} parent=11 // pred_region
          %224 = vsyncadd [#allocation5], 0
          %s226 = sshll.u32 %s4, 4
          %s227 = int_to_ptr.hbm [resolvable:$true] %s226
          %s228 = sshll.u32 [#allocation4], 4
          %s229 = int_to_ptr.vmem [resolvable:$true] %s228
          %231 = dma.hbm_to_vmem [thread:$0]  %s227, 16, %s229, [#allocation5]
        $region28: #{pointnet_dense_cls_forward.3} parent=11 // pred_fallthru
          _
        // Predicated region
        $region29: #{pointnet_dense_cls_forward.3} parent=11 // pred_check
          %p232 = pneg %p159
        $region30: #{pointnet_dense_cls_forward.3} parent=11 // pred_check_branch
          %234 = sbr.rel (%p232) target = $region32
        $region31: #{pointnet_dense_cls_forward.3} parent=11 // pred_region
          _
        $region32: #{pointnet_dense_cls_forward.3} parent=11 // pred_fallthru
          _
      $region12: #{pointnet_dense_cls_forward.3} parent=5 // pred_fallthru
        _
      %p235 = scmp.lt.s32.totalorder %s14, 2
      // Predicated region
      $region33: #{pointnet_dense_cls_forward.3} parent=5 // pred_check
        %p236 = pneg %p235
      $region34: #{pointnet_dense_cls_forward.3} parent=5 // pred_check_branch
        %238 = sbr.rel (%p236) target = $region36
      $region35: #{pointnet_dense_cls_forward.3} parent=5 // pred_region
        // Predicated region
        $region37: #{pointnet_dense_cls_forward.3} parent=35 // pred_check
          %p239 = pneg %p48
        $region38: #{pointnet_dense_cls_forward.3} parent=35 // pred_check_branch
          %241 = sbr.rel (%p239) target = $region40
        $region39: #{pointnet_dense_cls_forward.3} parent=35 // pred_region
          %s242 = smul.u32 16, %s22
          %p243 = scmp.lt.s32.totalorder %s21, 1
          %s244 = scalar_select %p243, %s21, 1
          %p245 = scmp.lt.s32.totalorder %s242, 15
          %s246 = scalar_select %p245, %s242, 15
          %s247 = smul.addr %s244, 16
          %s248 = sadd.s32 %s246, %s247
          %s249 = smul.addr %s248, 4
          %s250 = scalar_lea.vmem %s0, %s249
          %s251 = smul.u32 16, %s22
        $region40: #{pointnet_dense_cls_forward.3} parent=35 // pred_fallthru
          _
      $region36: #{pointnet_dense_cls_forward.3} parent=5 // pred_fallthru
        _
      %p252 = scmp.le.s32.totalorder 1, %s14
      %p253 = scmp.lt.s32.totalorder %s14, 3
      %p254 = pnand %p252, %p253
      %p255 = pneg %p254
      // Predicated region
      $region41: #{pointnet_dense_cls_forward.3} parent=5 // pred_check
        _
      $region42: #{pointnet_dense_cls_forward.3} parent=5 // pred_check_branch
        %257 = sbr.rel (%p254) target = $region44
      $region43: #{pointnet_dense_cls_forward.3} parent=5 // pred_region
        %s258 = ssub.s32 %s14, 1
        // Predicated region
        $region45: #{pointnet_dense_cls_forward.3} parent=43 // pred_check
          %p259 = pneg %p96
        $region46: #{pointnet_dense_cls_forward.3} parent=43 // pred_check_branch
          %261 = sbr.rel (%p259) target = $region48
        $region47: #{pointnet_dense_cls_forward.3} parent=43 // pred_region
          %263 = dma.done [#allocation3], 16
        $region48: #{pointnet_dense_cls_forward.3} parent=43 // pred_fallthru
          _
        // Predicated region
        $region49: #{pointnet_dense_cls_forward.3} parent=43 // pred_check
          %p264 = pneg %p138
        $region50: #{pointnet_dense_cls_forward.3} parent=43 // pred_check_branch
          %266 = sbr.rel (%p264) target = $region52
        $region51: #{pointnet_dense_cls_forward.3} parent=43 // pred_region
          %268 = dma.done [#allocation5], 16
        $region52: #{pointnet_dense_cls_forward.3} parent=43 // pred_fallthru
          _
        %s269 = smul.u32 16, %s24
        %p270 = scmp.lt.s32.totalorder %s23, 1
        %s271 = scalar_select %p270, %s23, 1
        %p272 = scmp.lt.s32.totalorder %s269, 15
        %s273 = scalar_select %p272, %s269, 15
        %s274 = smul.addr %s271, 16
        %s275 = sadd.s32 %s273, %s274
        %s276 = smul.addr %s275, 4
        %s277 = scalar_lea.vmem %s0, %s276
        %p278 = pneg %p54
        %p279 = pneg %p51
        %p280 = pneg %p75
        %p281 = pneg %p72
        %p282 = pneg %p96
        %p283 = pneg %p93
        %p284 = pneg %p117
        %p285 = pneg %p114
        %p286 = pneg %p138
        %p287 = pneg %p135
        %p288 = pneg %p159
        %p289 = pneg %p156
        %p290 = pneg %p187
        %p291 = pneg %p184
        %p292 = scmp.lt.s32.totalorder %s23, 1
        %s293 = scalar_select %p292, %s23, 1
        %p294 = scmp.lt.s32.totalorder %s24, 0
        %s295 = scalar_select %p294, %s24, 0
        %s296 = smul.addr %s295, 8
        %s297 = smul.addr %s293, 8
        %s298 = sadd.s32 %s296, %s297
        %s299 = scalar_lea.vmem %s6, %s298
        %s300 = smul.u32 16, %s24
        %p301 = scmp.lt.s32.totalorder %s23, 1
        %s302 = scalar_select %p301, %s23, 1
        %p303 = scmp.lt.s32.totalorder %s300, 15
        %s304 = scalar_select %p303, %s300, 15
        %s305 = smul.addr %s302, 16
        %s306 = sadd.s32 %s304, %s305
        %s307 = smul.addr %s306, 4
        %s308 = scalar_lea.vmem %s0, %s307
        %s309 = smul.u32 16, %s24
        %p310 = scmp.lt.s32.totalorder %s23, 1
        %s311 = scalar_select %p310, %s23, 1
        %p312 = scmp.lt.s32.totalorder %s24, 0
        %s313 = scalar_select %p312, %s24, 0
        %s314 = smul.addr %s313, 8
        %s315 = smul.addr %s311, 8
        %s316 = sadd.s32 %s314, %s315
        %s317 = scalar_lea.vmem %s6, %s316
        %v319 = vld [vmem:[%s308] sm:$0xf]
        %v320 = vld [vmem:[%s308 + $0x4] sm:$0xf]
        %v321 = vld [vmem:[%s308 + $0x8] sm:$0xf]
        %v322 = vld [vmem:[%s308 + $0xc] sm:$0xf]
        %v323 = vld [vmem:[%s308 + $0x10] sm:$0xf]
        %v324 = vld [vmem:[%s308 + $0x14] sm:$0xf]
        %v325 = vld [vmem:[%s308 + $0x18] sm:$0xf]
        %v326 = vld [vmem:[%s308 + $0x1c] sm:$0xf]
        %v327 = vld [vmem:[%s308 + $0x20] sm:$0xf]
        %v328 = vld [vmem:[%s308 + $0x24] sm:$0xf]
        %v329 = vld [vmem:[%s308 + $0x28] sm:$0xf]
        %v330 = vld [vmem:[%s308 + $0x2c] sm:$0xf]
        %v331 = vld [vmem:[%s308 + $0x30] sm:$0xf]
        %v332 = vld [vmem:[%s308 + $0x34] sm:$0xf]
        %v333 = vld [vmem:[%s308 + $0x38] sm:$0xf]
        %v334 = vld [vmem:[%s308 + $0x3c] sm:$0xf]
        %v335 = vld [vmem:[%s1] sm:$0xf]
        %v336 = vld [vmem:[#allocation2] sm:$0x1]
        %v338 = vperm.slane %v336, 0
        %v356 = vunpack.c.l.b16 %v319
        %v357 = vunpack.c.l.b16 %v320
        %v358 = vunpack.c.l.b16 %v321
        %v359 = vunpack.c.l.b16 %v322
        %v360 = vunpack.c.l.b16 %v323
        %v361 = vunpack.c.l.b16 %v324
        %v362 = vunpack.c.l.b16 %v325
        %v363 = vunpack.c.l.b16 %v326
        %v364 = vunpack.c.l.b16 %v327
        %v365 = vunpack.c.l.b16 %v328
        %v366 = vunpack.c.l.b16 %v329
        %v367 = vunpack.c.l.b16 %v330
        %v368 = vunpack.c.l.b16 %v331
        %v369 = vunpack.c.l.b16 %v332
        %v370 = vunpack.c.l.b16 %v333
        %v371 = vunpack.c.l.b16 %v334
        %v372 = vpack.c.b16 %v357, %v356
        %v373 = vpack.c.b16 %v359, %v358
        %v374 = vpack.c.b16 %v361, %v360
        %v375 = vpack.c.b16 %v363, %v362
        %v376 = vpack.c.b16 %v365, %v364
        %v377 = vpack.c.b16 %v367, %v366
        %v378 = vpack.c.b16 %v369, %v368
        %v379 = vpack.c.b16 %v371, %v370
        %vm380 = vcmask 64512
        %v382 = vsel %vm380, %v372, 0
        %v385 = vsel %vm380, %v373, 0
        %v388 = vsel %vm380, %v374, 0
        %v391 = vsel %vm380, %v375, 0
        %v394 = vsel %vm380, %v376, 0
        %v397 = vsel %vm380, %v377, 0
        %v400 = vsel %vm380, %v378, 0
        %v403 = vsel %vm380, %v379, 0
        %vm405 = vcmask 1043456
        %v407 = vsel %vm405, %v335, 0
        %409 = vmatpush.bf16.msra.mxu0 0
        %410 = vmatpush.bf16.msra.mxu0 0
        %411 = vmatpush.bf16.msra.mxu0 0
        %412 = vmatpush.bf16.msra.mxu0 0
        %413 = vmatpush.bf16.msra.mxu0 0
        %414 = vmatpush.bf16.msra.mxu0 0
        %415 = vmatpush.bf16.msra.mxu0 0
        %416 = vmatpush.bf16.msra.mxu0 %v407
        %417 = vmatmul.bf16.gmra.mxu0 %v382
        %v418 = vpop.f32.mrf.mxu0
        %v419 = vadd.f32 %v338, %v418
        %v420 = vpop.f32.mrf.mxu0
        %v421 = vadd.f32 %v338, %v420
        %422 = vmatmul.bf16.gmra.mxu0 %v385
        %v423 = vpop.f32.mrf.mxu0
        %v424 = vadd.f32 %v338, %v423
        %v425 = vpop.f32.mrf.mxu0
        %v426 = vadd.f32 %v338, %v425
        %427 = vmatmul.bf16.gmra.mxu0 %v388
        %v428 = vpop.f32.mrf.mxu0
        %v429 = vadd.f32 %v338, %v428
        %v430 = vpop.f32.mrf.mxu0
        %v431 = vadd.f32 %v338, %v430
        %432 = vmatmul.bf16.gmra.mxu0 %v391
        %v433 = vpop.f32.mrf.mxu0
        %v434 = vadd.f32 %v338, %v433
        %v435 = vpop.f32.mrf.mxu0
        %v436 = vadd.f32 %v338, %v435
        %437 = vmatmul.bf16.gmra.mxu0 %v394
        %v438 = vpop.f32.mrf.mxu0
        %v439 = vadd.f32 %v338, %v438
        %v440 = vpop.f32.mrf.mxu0
        %v441 = vadd.f32 %v338, %v440
        %442 = vmatmul.bf16.gmra.mxu0 %v397
        %v443 = vpop.f32.mrf.mxu0
        %v444 = vadd.f32 %v338, %v443
        %v445 = vpop.f32.mrf.mxu0
        %v446 = vadd.f32 %v338, %v445
        %447 = vmatmul.bf16.gmra.mxu0 %v400
        %v448 = vpop.f32.mrf.mxu0
        %v449 = vadd.f32 %v338, %v448
        %v450 = vpop.f32.mrf.mxu0
        %v451 = vadd.f32 %v338, %v450
        %452 = vmatmul.bf16.gmra.mxu0 %v403
        %v453 = vpop.f32.mrf.mxu0
        %v454 = vadd.f32 %v338, %v453
        %v455 = vpop.f32.mrf.mxu0
        %v456 = vadd.f32 %v338, %v455
        %457 = vdwg.mxu0
        %v458 = vmax.f32 %v419, 0.0
        %v459 = vmax.f32 %v421, 0.0
        %v460 = vmax.f32 %v424, 0.0
        %v461 = vmax.f32 %v426, 0.0
        %v462 = vmax.f32 %v429, 0.0
        %v463 = vmax.f32 %v431, 0.0
        %v464 = vmax.f32 %v434, 0.0
        %v465 = vmax.f32 %v436, 0.0
        %v466 = vmax.f32 %v439, 0.0
        %v467 = vmax.f32 %v441, 0.0
        %v468 = vmax.f32 %v444, 0.0
        %v469 = vmax.f32 %v446, 0.0
        %v470 = vmax.f32 %v449, 0.0
        %v471 = vmax.f32 %v451, 0.0
        %v472 = vmax.f32 %v454, 0.0
        %v473 = vmax.f32 %v456, 0.0
        %v474 = vpack.c.bf16 %v459, %v458
        %v475 = vpack.c.bf16 %v461, %v460
        %v476 = vpack.c.bf16 %v463, %v462
        %v477 = vpack.c.bf16 %v465, %v464
        %v478 = vpack.c.bf16 %v467, %v466
        %v479 = vpack.c.bf16 %v469, %v468
        %v480 = vpack.c.bf16 %v471, %v470
        %v481 = vpack.c.bf16 %v473, %v472
        %v482 = vld [vmem:[%s3] sm:$0xf]
        %v483 = vld [vmem:[%s3 + $0x4] sm:$0xf]
        %v484 = vld [vmem:[%s3 + $0x8] sm:$0xf]
        %v485 = vld [vmem:[%s3 + $0xc] sm:$0xf]
        %v486 = vld [vmem:[%s3 + $0x10] sm:$0xf]
        %v487 = vld [vmem:[%s3 + $0x14] sm:$0xf]
        %v488 = vld [vmem:[%s3 + $0x18] sm:$0xf]
        %v489 = vld [vmem:[%s3 + $0x1c] sm:$0xf]
        %v490 = vld [vmem:[#allocation4] sm:$0x1]
        %v492 = vperm.slane %v490, 0
        %v502 = vunpack.c.l.b16 %v482
        %v503 = vunpack.c.l.b16 %v483
        %v504 = vunpack.c.l.b16 %v484
        %v505 = vunpack.c.l.b16 %v485
        %v506 = vunpack.c.l.b16 %v486
        %v507 = vunpack.c.l.b16 %v487
        %v508 = vunpack.c.l.b16 %v488
        %v509 = vunpack.c.l.b16 %v489
        %v510 = vpack.c.b16 %v503, %v502
        %v511 = vpack.c.b16 %v505, %v504
        %v512 = vpack.c.b16 %v507, %v506
        %v513 = vpack.c.b16 %v509, %v508
        %vm518 = vcmask 523264
        %v520 = vsel %vm518, %v474, 0
        %v523 = vsel %vm518, %v475, 0
        %v526 = vsel %vm518, %v476, 0
        %v529 = vsel %vm518, %v477, 0
        %v532 = vsel %vm518, %v478, 0
        %v535 = vsel %vm518, %v479, 0
        %v538 = vsel %vm518, %v480, 0
        %v541 = vsel %vm518, %v481, 0
        %543 = vmatpush.bf16.msra.mxu0 0
        %544 = vmatpush.bf16.msra.mxu0 0
        %545 = vmatpush.bf16.msra.mxu0 0
        %546 = vmatpush.bf16.msra.mxu0 0
        %547 = vmatpush.bf16.msra.mxu0 %v513
        %548 = vmatpush.bf16.msra.mxu0 %v512
        %549 = vmatpush.bf16.msra.mxu0 %v511
        %550 = vmatpush.bf16.msra.mxu0 %v510
        %551 = vmatmul.bf16.gmra.mxu0 %v520
        %v552 = vpop.f32.mrf.mxu0
        %v553 = vadd.f32 %v492, %v552
        %v554 = vpop.f32.mrf.mxu0
        %v555 = vadd.f32 %v492, %v554
        %556 = vmatmul.bf16.gmra.mxu0 %v523
        %v557 = vpop.f32.mrf.mxu0
        %v558 = vadd.f32 %v492, %v557
        %v559 = vpop.f32.mrf.mxu0
        %v560 = vadd.f32 %v492, %v559
        %561 = vmatmul.bf16.gmra.mxu0 %v526
        %v562 = vpop.f32.mrf.mxu0
        %v563 = vadd.f32 %v492, %v562
        %v564 = vpop.f32.mrf.mxu0
        %v565 = vadd.f32 %v492, %v564
        %566 = vmatmul.bf16.gmra.mxu0 %v529
        %v567 = vpop.f32.mrf.mxu0
        %v568 = vadd.f32 %v492, %v567
        %v569 = vpop.f32.mrf.mxu0
        %v570 = vadd.f32 %v492, %v569
        %571 = vmatmul.bf16.gmra.mxu0 %v532
        %v572 = vpop.f32.mrf.mxu0
        %v573 = vadd.f32 %v492, %v572
        %v574 = vpop.f32.mrf.mxu0
        %v575 = vadd.f32 %v492, %v574
        %576 = vmatmul.bf16.gmra.mxu0 %v535
        %v577 = vpop.f32.mrf.mxu0
        %v578 = vadd.f32 %v492, %v577
        %v579 = vpop.f32.mrf.mxu0
        %v580 = vadd.f32 %v492, %v579
        %581 = vmatmul.bf16.gmra.mxu0 %v538
        %v582 = vpop.f32.mrf.mxu0
        %v583 = vadd.f32 %v492, %v582
        %v584 = vpop.f32.mrf.mxu0
        %v585 = vadd.f32 %v492, %v584
        %586 = vmatmul.bf16.gmra.mxu0 %v541
        %v587 = vpop.f32.mrf.mxu0
        %v588 = vadd.f32 %v492, %v587
        %v589 = vpop.f32.mrf.mxu0
        %v590 = vadd.f32 %v492, %v589
        %591 = vdwg.mxu0
        %v592 = vmax.f32 %v553, 0.0
        %v593 = vmax.f32 %v555, 0.0
        %v594 = vmax.f32 %v558, 0.0
        %v595 = vmax.f32 %v560, 0.0
        %v596 = vmax.f32 %v563, 0.0
        %v597 = vmax.f32 %v565, 0.0
        %v598 = vmax.f32 %v568, 0.0
        %v599 = vmax.f32 %v570, 0.0
        %v600 = vmax.f32 %v573, 0.0
        %v601 = vmax.f32 %v575, 0.0
        %v602 = vmax.f32 %v578, 0.0
        %v603 = vmax.f32 %v580, 0.0
        %v604 = vmax.f32 %v583, 0.0
        %v605 = vmax.f32 %v585, 0.0
        %v606 = vmax.f32 %v588, 0.0
        %v607 = vmax.f32 %v590, 0.0
        %v608 = vpack.c.bf16 %v593, %v592
        %v609 = vpack.c.bf16 %v595, %v594
        %v610 = vpack.c.bf16 %v597, %v596
        %v611 = vpack.c.bf16 %v599, %v598
        %v612 = vpack.c.bf16 %v601, %v600
        %v613 = vpack.c.bf16 %v603, %v602
        %v614 = vpack.c.bf16 %v605, %v604
        %v615 = vpack.c.bf16 %v607, %v606
        %v616 = vld [vmem:[%s5] sm:$0xff]
        %v617 = vld [vmem:[%s5 + $0x8] sm:$0xff]
        %v618 = vld [vmem:[%s5 + $0x10] sm:$0xff]
        %v619 = vld [vmem:[%s5 + $0x18] sm:$0xff]
        %v620 = vld [vmem:[%s5 + $0x20] sm:$0xff]
        %v621 = vld [vmem:[%s5 + $0x28] sm:$0xff]
        %v622 = vld [vmem:[%s5 + $0x30] sm:$0xff]
        %v623 = vld [vmem:[%s5 + $0x38] sm:$0xff]
        %v624 = vld [vmem:[%s5 + $0x40] sm:$0xff]
        %v625 = vld [vmem:[%s5 + $0x48] sm:$0xff]
        %v626 = vld [vmem:[%s5 + $0x50] sm:$0xff]
        %v627 = vld [vmem:[%s5 + $0x58] sm:$0xff]
        %v628 = vld [vmem:[%s5 + $0x60] sm:$0xff]
        %v629 = vld [vmem:[%s5 + $0x68] sm:$0xff]
        %v630 = vld [vmem:[%s5 + $0x70] sm:$0xff]
        %v631 = vld [vmem:[%s5 + $0x78] sm:$0xff]
        %v632 = vld [vmem:[%s5 + $0x80] sm:$0xff]
        %v633 = vld [vmem:[%s5 + $0x88] sm:$0xff]
        %v634 = vld [vmem:[%s5 + $0x90] sm:$0xff]
        %v635 = vld [vmem:[%s5 + $0x98] sm:$0xff]
        %v636 = vld [vmem:[%s5 + $0xa0] sm:$0xff]
        %v637 = vld [vmem:[%s5 + $0xa8] sm:$0xff]
        %v638 = vld [vmem:[%s5 + $0xb0] sm:$0xff]
        %v639 = vld [vmem:[%s5 + $0xb8] sm:$0xff]
        %v640 = vld [vmem:[%s5 + $0xc0] sm:$0xff]
        %v641 = vld [vmem:[%s5 + $0xc8] sm:$0xff]
        %v642 = vld [vmem:[%s5 + $0xd0] sm:$0xff]
        %v643 = vld [vmem:[%s5 + $0xd8] sm:$0xff]
        %v644 = vld [vmem:[%s5 + $0xe0] sm:$0xff]
        %v645 = vld [vmem:[%s5 + $0xe8] sm:$0xff]
        %v646 = vld [vmem:[%s5 + $0xf0] sm:$0xff]
        %v647 = vld [vmem:[%s5 + $0xf8] sm:$0xff]
        %v648 = vld [vmem:[%s5 + $0x100] sm:$0xff]
        %v649 = vld [vmem:[%s5 + $0x108] sm:$0xff]
        %v650 = vld [vmem:[%s5 + $0x110] sm:$0xff]
        %v651 = vld [vmem:[%s5 + $0x118] sm:$0xff]
        %v652 = vld [vmem:[%s5 + $0x120] sm:$0xff]
        %v653 = vld [vmem:[%s5 + $0x128] sm:$0xff]
        %v654 = vld [vmem:[%s5 + $0x130] sm:$0xff]
        %v655 = vld [vmem:[%s5 + $0x138] sm:$0xff]
        %v656 = vld [vmem:[%s5 + $0x140] sm:$0xff]
        %v657 = vld [vmem:[%s5 + $0x148] sm:$0xff]
        %v658 = vld [vmem:[%s5 + $0x150] sm:$0xff]
        %v659 = vld [vmem:[%s5 + $0x158] sm:$0xff]
        %v660 = vld [vmem:[%s5 + $0x160] sm:$0xff]
        %v661 = vld [vmem:[%s5 + $0x168] sm:$0xff]
        %v662 = vld [vmem:[%s5 + $0x170] sm:$0xff]
        %v663 = vld [vmem:[%s5 + $0x178] sm:$0xff]
        %v664 = vld [vmem:[%s5 + $0x180] sm:$0xff]
        %v665 = vld [vmem:[%s5 + $0x188] sm:$0xff]
        %v666 = vld [vmem:[%s5 + $0x190] sm:$0xff]
        %v667 = vld [vmem:[%s5 + $0x198] sm:$0xff]
        %v668 = vld [vmem:[%s5 + $0x1a0] sm:$0xff]
        %v669 = vld [vmem:[%s5 + $0x1a8] sm:$0xff]
        %v670 = vld [vmem:[%s5 + $0x1b0] sm:$0xff]
        %v671 = vld [vmem:[%s5 + $0x1b8] sm:$0xff]
        %v672 = vld [vmem:[%s5 + $0x1c0] sm:$0xff]
        %v673 = vld [vmem:[%s5 + $0x1c8] sm:$0xff]
        %v674 = vld [vmem:[%s5 + $0x1d0] sm:$0xff]
        %v675 = vld [vmem:[%s5 + $0x1d8] sm:$0xff]
        %v676 = vld [vmem:[%s5 + $0x1e0] sm:$0xff]
        %v677 = vld [vmem:[%s5 + $0x1e8] sm:$0xff]
        %v678 = vld [vmem:[%s5 + $0x1f0] sm:$0xff]
        %v679 = vld [vmem:[%s5 + $0x1f8] sm:$0xff]
        %v744 = vunpack.c.l.b16 %v616
        %v745 = vunpack.c.h.b16 %v616
        %v746 = vunpack.c.l.b16 %v617
        %v747 = vunpack.c.h.b16 %v617
        %v748 = vunpack.c.l.b16 %v618
        %v749 = vunpack.c.h.b16 %v618
        %v750 = vunpack.c.l.b16 %v619
        %v751 = vunpack.c.h.b16 %v619
        %v752 = vunpack.c.l.b16 %v620
        %v753 = vunpack.c.h.b16 %v620
        %v754 = vunpack.c.l.b16 %v621
        %v755 = vunpack.c.h.b16 %v621
        %v756 = vunpack.c.l.b16 %v622
        %v757 = vunpack.c.h.b16 %v622
        %v758 = vunpack.c.l.b16 %v623
        %v759 = vunpack.c.h.b16 %v623
        %v760 = vunpack.c.l.b16 %v624
        %v761 = vunpack.c.h.b16 %v624
        %v762 = vunpack.c.l.b16 %v625
        %v763 = vunpack.c.h.b16 %v625
        %v764 = vunpack.c.l.b16 %v626
        %v765 = vunpack.c.h.b16 %v626
        %v766 = vunpack.c.l.b16 %v627
        %v767 = vunpack.c.h.b16 %v627
        %v768 = vunpack.c.l.b16 %v628
        %v769 = vunpack.c.h.b16 %v628
        %v770 = vunpack.c.l.b16 %v629
        %v771 = vunpack.c.h.b16 %v629
        %v772 = vunpack.c.l.b16 %v630
        %v773 = vunpack.c.h.b16 %v630
        %v774 = vunpack.c.l.b16 %v631
        %v775 = vunpack.c.h.b16 %v631
        %v776 = vunpack.c.l.b16 %v632
        %v777 = vunpack.c.h.b16 %v632
        %v778 = vunpack.c.l.b16 %v633
        %v779 = vunpack.c.h.b16 %v633
        %v780 = vunpack.c.l.b16 %v634
        %v781 = vunpack.c.h.b16 %v634
        %v782 = vunpack.c.l.b16 %v635
        %v783 = vunpack.c.h.b16 %v635
        %v784 = vunpack.c.l.b16 %v636
        %v785 = vunpack.c.h.b16 %v636
        %v786 = vunpack.c.l.b16 %v637
        %v787 = vunpack.c.h.b16 %v637
        %v788 = vunpack.c.l.b16 %v638
        %v789 = vunpack.c.h.b16 %v638
        %v790 = vunpack.c.l.b16 %v639
        %v791 = vunpack.c.h.b16 %v639
        %v792 = vunpack.c.l.b16 %v640
        %v793 = vunpack.c.h.b16 %v640
        %v794 = vunpack.c.l.b16 %v641
        %v795 = vunpack.c.h.b16 %v641
        %v796 = vunpack.c.l.b16 %v642
        %v797 = vunpack.c.h.b16 %v642
        %v798 = vunpack.c.l.b16 %v643
        %v799 = vunpack.c.h.b16 %v643
        %v800 = vunpack.c.l.b16 %v644
        %v801 = vunpack.c.h.b16 %v644
        %v802 = vunpack.c.l.b16 %v645
        %v803 = vunpack.c.h.b16 %v645
        %v804 = vunpack.c.l.b16 %v646
        %v805 = vunpack.c.h.b16 %v646
        %v806 = vunpack.c.l.b16 %v647
        %v807 = vunpack.c.h.b16 %v647
        %v808 = vunpack.c.l.b16 %v648
        %v809 = vunpack.c.h.b16 %v648
        %v810 = vunpack.c.l.b16 %v649
        %v811 = vunpack.c.h.b16 %v649
        %v812 = vunpack.c.l.b16 %v650
        %v813 = vunpack.c.h.b16 %v650
        %v814 = vunpack.c.l.b16 %v651
        %v815 = vunpack.c.h.b16 %v651
        %v816 = vunpack.c.l.b16 %v652
        %v817 = vunpack.c.h.b16 %v652
        %v818 = vunpack.c.l.b16 %v653
        %v819 = vunpack.c.h.b16 %v653
        %v820 = vunpack.c.l.b16 %v654
        %v821 = vunpack.c.h.b16 %v654
        %v822 = vunpack.c.l.b16 %v655
        %v823 = vunpack.c.h.b16 %v655
        %v824 = vunpack.c.l.b16 %v656
        %v825 = vunpack.c.h.b16 %v656
        %v826 = vunpack.c.l.b16 %v657
        %v827 = vunpack.c.h.b16 %v657
        %v828 = vunpack.c.l.b16 %v658
        %v829 = vunpack.c.h.b16 %v658
        %v830 = vunpack.c.l.b16 %v659
        %v831 = vunpack.c.h.b16 %v659
        %v832 = vunpack.c.l.b16 %v660
        %v833 = vunpack.c.h.b16 %v660
        %v834 = vunpack.c.l.b16 %v661
        %v835 = vunpack.c.h.b16 %v661
        %v836 = vunpack.c.l.b16 %v662
        %v837 = vunpack.c.h.b16 %v662
        %v838 = vunpack.c.l.b16 %v663
        %v839 = vunpack.c.h.b16 %v663
        %v840 = vunpack.c.l.b16 %v664
        %v841 = vunpack.c.h.b16 %v664
        %v842 = vunpack.c.l.b16 %v665
        %v843 = vunpack.c.h.b16 %v665
        %v844 = vunpack.c.l.b16 %v666
        %v845 = vunpack.c.h.b16 %v666
        %v846 = vunpack.c.l.b16 %v667
        %v847 = vunpack.c.h.b16 %v667
        %v848 = vunpack.c.l.b16 %v668
        %v849 = vunpack.c.h.b16 %v668
        %v850 = vunpack.c.l.b16 %v669
        %v851 = vunpack.c.h.b16 %v669
        %v852 = vunpack.c.l.b16 %v670
        %v853 = vunpack.c.h.b16 %v670
        %v854 = vunpack.c.l.b16 %v671
        %v855 = vunpack.c.h.b16 %v671
        %v856 = vunpack.c.l.b16 %v672
        %v857 = vunpack.c.h.b16 %v672
        %v858 = vunpack.c.l.b16 %v673
        %v859 = vunpack.c.h.b16 %v673
        %v860 = vunpack.c.l.b16 %v674
        %v861 = vunpack.c.h.b16 %v674
        %v862 = vunpack.c.l.b16 %v675
        %v863 = vunpack.c.h.b16 %v675
        %v864 = vunpack.c.l.b16 %v676
        %v865 = vunpack.c.h.b16 %v676
        %v866 = vunpack.c.l.b16 %v677
        %v867 = vunpack.c.h.b16 %v677
        %v868 = vunpack.c.l.b16 %v678
        %v869 = vunpack.c.h.b16 %v678
        %v870 = vunpack.c.l.b16 %v679
        %v871 = vunpack.c.h.b16 %v679
        %v872 = vpack.c.b16 %v752, %v744
        %v873 = vpack.c.b16 %v753, %v745
        %v874 = vpack.c.b16 %v754, %v746
        %v875 = vpack.c.b16 %v755, %v747
        %v876 = vpack.c.b16 %v756, %v748
        %v877 = vpack.c.b16 %v757, %v749
        %v878 = vpack.c.b16 %v758, %v750
        %v879 = vpack.c.b16 %v759, %v751
        %v880 = vpack.c.b16 %v768, %v760
        %v881 = vpack.c.b16 %v769, %v761
        %v882 = vpack.c.b16 %v770, %v762
        %v883 = vpack.c.b16 %v771, %v763
        %v884 = vpack.c.b16 %v772, %v764
        %v885 = vpack.c.b16 %v773, %v765
        %v886 = vpack.c.b16 %v774, %v766
        %v887 = vpack.c.b16 %v775, %v767
        %v888 = vpack.c.b16 %v784, %v776
        %v889 = vpack.c.b16 %v785, %v777
        %v890 = vpack.c.b16 %v786, %v778
        %v891 = vpack.c.b16 %v787, %v779
        %v892 = vpack.c.b16 %v788, %v780
        %v893 = vpack.c.b16 %v789, %v781
        %v894 = vpack.c.b16 %v790, %v782
        %v895 = vpack.c.b16 %v791, %v783
        %v896 = vpack.c.b16 %v800, %v792
        %v897 = vpack.c.b16 %v801, %v793
        %v898 = vpack.c.b16 %v802, %v794
        %v899 = vpack.c.b16 %v803, %v795
        %v900 = vpack.c.b16 %v804, %v796
        %v901 = vpack.c.b16 %v805, %v797
        %v902 = vpack.c.b16 %v806, %v798
        %v903 = vpack.c.b16 %v807, %v799
        %v904 = vpack.c.b16 %v816, %v808
        %v905 = vpack.c.b16 %v817, %v809
        %v906 = vpack.c.b16 %v818, %v810
        %v907 = vpack.c.b16 %v819, %v811
        %v908 = vpack.c.b16 %v820, %v812
        %v909 = vpack.c.b16 %v821, %v813
        %v910 = vpack.c.b16 %v822, %v814
        %v911 = vpack.c.b16 %v823, %v815
        %v912 = vpack.c.b16 %v832, %v824
        %v913 = vpack.c.b16 %v833, %v825
        %v914 = vpack.c.b16 %v834, %v826
        %v915 = vpack.c.b16 %v835, %v827
        %v916 = vpack.c.b16 %v836, %v828
        %v917 = vpack.c.b16 %v837, %v829
        %v918 = vpack.c.b16 %v838, %v830
        %v919 = vpack.c.b16 %v839, %v831
        %v920 = vpack.c.b16 %v848, %v840
        %v921 = vpack.c.b16 %v849, %v841
        %v922 = vpack.c.b16 %v850, %v842
        %v923 = vpack.c.b16 %v851, %v843
        %v924 = vpack.c.b16 %v852, %v844
        %v925 = vpack.c.b16 %v853, %v845
        %v926 = vpack.c.b16 %v854, %v846
        %v927 = vpack.c.b16 %v855, %v847
        %v928 = vpack.c.b16 %v864, %v856
        %v929 = vpack.c.b16 %v865, %v857
        %v930 = vpack.c.b16 %v866, %v858
        %v931 = vpack.c.b16 %v867, %v859
        %v932 = vpack.c.b16 %v868, %v860
        %v933 = vpack.c.b16 %v869, %v861
        %v934 = vpack.c.b16 %v870, %v862
        %v935 = vpack.c.b16 %v871, %v863
        %1000 = vmatpush.bf16.msra.mxu0 %v928
        %1001 = vmatpush.bf16.msra.mxu0 %v920
        %1002 = vmatpush.bf16.msra.mxu0 %v912
        %1003 = vmatpush.bf16.msra.mxu0 %v904
        %1004 = vmatpush.bf16.msra.mxu0 %v896
        %1005 = vmatpush.bf16.msra.mxu0 %v888
        %1006 = vmatpush.bf16.msra.mxu0 %v880
        %1007 = vmatpush.bf16.msra.mxu0 %v872
        %1008 = vmatmul.bf16.gmra.mxu0 %v608
        %v1009 = vpop.f32.mrf.mxu0
        %v1010 = vadd.f32 0.0, %v1009
        %v1011 = vpop.f32.mrf.mxu0
        %v1012 = vadd.f32 0.0, %v1011
        %1013 = vmatmul.bf16.gmra.mxu0 %v609
        %v1014 = vpop.f32.mrf.mxu0
        %v1015 = vadd.f32 0.0, %v1014
        %v1016 = vpop.f32.mrf.mxu0
        %v1017 = vadd.f32 0.0, %v1016
        %1018 = vmatmul.bf16.gmra.mxu0 %v610
        %v1019 = vpop.f32.mrf.mxu0
        %v1020 = vadd.f32 0.0, %v1019
        %v1021 = vpop.f32.mrf.mxu0
        %v1022 = vadd.f32 0.0, %v1021
        %1023 = vmatmul.bf16.gmra.mxu0 %v611
        %v1024 = vpop.f32.mrf.mxu0
        %v1025 = vadd.f32 0.0, %v1024
        %v1026 = vpop.f32.mrf.mxu0
        %v1027 = vadd.f32 0.0, %v1026
        %1028 = vmatmul.bf16.gmra.mxu0 %v612
        %v1029 = vpop.f32.mrf.mxu0
        %v1030 = vadd.f32 0.0, %v1029
        %v1031 = vpop.f32.mrf.mxu0
        %v1032 = vadd.f32 0.0, %v1031
        %1033 = vmatmul.bf16.gmra.mxu0 %v613
        %v1034 = vpop.f32.mrf.mxu0
        %v1035 = vadd.f32 0.0, %v1034
        %v1036 = vpop.f32.mrf.mxu0
        %v1037 = vadd.f32 0.0, %v1036
        %1038 = vmatmul.bf16.gmra.mxu0 %v614
        %v1039 = vpop.f32.mrf.mxu0
        %v1040 = vadd.f32 0.0, %v1039
        %v1041 = vpop.f32.mrf.mxu0
        %v1042 = vadd.f32 0.0, %v1041
        %1043 = vmatmul.bf16.gmra.mxu0 %v615
        %v1044 = vpop.f32.mrf.mxu0
        %v1045 = vadd.f32 0.0, %v1044
        %v1046 = vpop.f32.mrf.mxu0
        %v1047 = vadd.f32 0.0, %v1046
        %1048 = vdwg.mxu0
        %1049 = vmatpush.bf16.msra.mxu0 %v929
        %1050 = vmatpush.bf16.msra.mxu0 %v921
        %1051 = vmatpush.bf16.msra.mxu0 %v913
        %1052 = vmatpush.bf16.msra.mxu0 %v905
        %1053 = vmatpush.bf16.msra.mxu0 %v897
        %1054 = vmatpush.bf16.msra.mxu0 %v889
        %1055 = vmatpush.bf16.msra.mxu0 %v881
        %1056 = vmatpush.bf16.msra.mxu0 %v873
        %1057 = vmatmul.bf16.gmra.mxu0 %v608
        %v1058 = vpop.f32.mrf.mxu0
        %v1059 = vadd.f32 0.0, %v1058
        %v1060 = vpop.f32.mrf.mxu0
        %v1061 = vadd.f32 0.0, %v1060
        %1062 = vmatmul.bf16.gmra.mxu0 %v609
        %v1063 = vpop.f32.mrf.mxu0
        %v1064 = vadd.f32 0.0, %v1063
        %v1065 = vpop.f32.mrf.mxu0
        %v1066 = vadd.f32 0.0, %v1065
        %1067 = vmatmul.bf16.gmra.mxu0 %v610
        %v1068 = vpop.f32.mrf.mxu0
        %v1069 = vadd.f32 0.0, %v1068
        %v1070 = vpop.f32.mrf.mxu0
        %v1071 = vadd.f32 0.0, %v1070
        %1072 = vmatmul.bf16.gmra.mxu0 %v611
        %v1073 = vpop.f32.mrf.mxu0
        %v1074 = vadd.f32 0.0, %v1073
        %v1075 = vpop.f32.mrf.mxu0
        %v1076 = vadd.f32 0.0, %v1075
        %1077 = vmatmul.bf16.gmra.mxu0 %v612
        %v1078 = vpop.f32.mrf.mxu0
        %v1079 = vadd.f32 0.0, %v1078
        %v1080 = vpop.f32.mrf.mxu0
        %v1081 = vadd.f32 0.0, %v1080
        %1082 = vmatmul.bf16.gmra.mxu0 %v613
        %v1083 = vpop.f32.mrf.mxu0
        %v1084 = vadd.f32 0.0, %v1083
        %v1085 = vpop.f32.mrf.mxu0
        %v1086 = vadd.f32 0.0, %v1085
        %1087 = vmatmul.bf16.gmra.mxu0 %v614
        %v1088 = vpop.f32.mrf.mxu0
        %v1089 = vadd.f32 0.0, %v1088
        %v1090 = vpop.f32.mrf.mxu0
        %v1091 = vadd.f32 0.0, %v1090
        %1092 = vmatmul.bf16.gmra.mxu0 %v615
        %v1093 = vpop.f32.mrf.mxu0
        %v1094 = vadd.f32 0.0, %v1093
        %v1095 = vpop.f32.mrf.mxu0
        %v1096 = vadd.f32 0.0, %v1095
        %1097 = vdwg.mxu0
        %1098 = vmatpush.bf16.msra.mxu0 %v930
        %1099 = vmatpush.bf16.msra.mxu0 %v922
        %1100 = vmatpush.bf16.msra.mxu0 %v914
        %1101 = vmatpush.bf16.msra.mxu0 %v906
        %1102 = vmatpush.bf16.msra.mxu0 %v898
        %1103 = vmatpush.bf16.msra.mxu0 %v890
        %1104 = vmatpush.bf16.msra.mxu0 %v882
        %1105 = vmatpush.bf16.msra.mxu0 %v874
        %1106 = vmatmul.bf16.gmra.mxu0 %v608
        %v1107 = vpop.f32.mrf.mxu0
        %v1108 = vadd.f32 0.0, %v1107
        %v1109 = vpop.f32.mrf.mxu0
        %v1110 = vadd.f32 0.0, %v1109
        %1111 = vmatmul.bf16.gmra.mxu0 %v609
        %v1112 = vpop.f32.mrf.mxu0
        %v1113 = vadd.f32 0.0, %v1112
        %v1114 = vpop.f32.mrf.mxu0
        %v1115 = vadd.f32 0.0, %v1114
        %1116 = vmatmul.bf16.gmra.mxu0 %v610
        %v1117 = vpop.f32.mrf.mxu0
        %v1118 = vadd.f32 0.0, %v1117
        %v1119 = vpop.f32.mrf.mxu0
        %v1120 = vadd.f32 0.0, %v1119
        %1121 = vmatmul.bf16.gmra.mxu0 %v611
        %v1122 = vpop.f32.mrf.mxu0
        %v1123 = vadd.f32 0.0, %v1122
        %v1124 = vpop.f32.mrf.mxu0
        %v1125 = vadd.f32 0.0, %v1124
        %1126 = vmatmul.bf16.gmra.mxu0 %v612
        %v1127 = vpop.f32.mrf.mxu0
        %v1128 = vadd.f32 0.0, %v1127
        %v1129 = vpop.f32.mrf.mxu0
        %v1130 = vadd.f32 0.0, %v1129
        %1131 = vmatmul.bf16.gmra.mxu0 %v613
        %v1132 = vpop.f32.mrf.mxu0
        %v1133 = vadd.f32 0.0, %v1132
        %v1134 = vpop.f32.mrf.mxu0
        %v1135 = vadd.f32 0.0, %v1134
        %1136 = vmatmul.bf16.gmra.mxu0 %v614
        %v1137 = vpop.f32.mrf.mxu0
        %v1138 = vadd.f32 0.0, %v1137
        %v1139 = vpop.f32.mrf.mxu0
        %v1140 = vadd.f32 0.0, %v1139
        %1141 = vmatmul.bf16.gmra.mxu0 %v615
        %v1142 = vpop.f32.mrf.mxu0
        %v1143 = vadd.f32 0.0, %v1142
        %v1144 = vpop.f32.mrf.mxu0
        %v1145 = vadd.f32 0.0, %v1144
        %1146 = vdwg.mxu0
        %1147 = vmatpush.bf16.msra.mxu0 %v931
        %1148 = vmatpush.bf16.msra.mxu0 %v923
        %1149 = vmatpush.bf16.msra.mxu0 %v915
        %1150 = vmatpush.bf16.msra.mxu0 %v907
        %1151 = vmatpush.bf16.msra.mxu0 %v899
        %1152 = vmatpush.bf16.msra.mxu0 %v891
        %1153 = vmatpush.bf16.msra.mxu0 %v883
        %1154 = vmatpush.bf16.msra.mxu0 %v875
        %1155 = vmatmul.bf16.gmra.mxu0 %v608
        %v1156 = vpop.f32.mrf.mxu0
        %v1157 = vadd.f32 0.0, %v1156
        %v1158 = vpop.f32.mrf.mxu0
        %v1159 = vadd.f32 0.0, %v1158
        %1160 = vmatmul.bf16.gmra.mxu0 %v609
        %v1161 = vpop.f32.mrf.mxu0
        %v1162 = vadd.f32 0.0, %v1161
        %v1163 = vpop.f32.mrf.mxu0
        %v1164 = vadd.f32 0.0, %v1163
        %1165 = vmatmul.bf16.gmra.mxu0 %v610
        %v1166 = vpop.f32.mrf.mxu0
        %v1167 = vadd.f32 0.0, %v1166
        %v1168 = vpop.f32.mrf.mxu0
        %v1169 = vadd.f32 0.0, %v1168
        %1170 = vmatmul.bf16.gmra.mxu0 %v611
        %v1171 = vpop.f32.mrf.mxu0
        %v1172 = vadd.f32 0.0, %v1171
        %v1173 = vpop.f32.mrf.mxu0
        %v1174 = vadd.f32 0.0, %v1173
        %1175 = vmatmul.bf16.gmra.mxu0 %v612
        %v1176 = vpop.f32.mrf.mxu0
        %v1177 = vadd.f32 0.0, %v1176
        %v1178 = vpop.f32.mrf.mxu0
        %v1179 = vadd.f32 0.0, %v1178
        %1180 = vmatmul.bf16.gmra.mxu0 %v613
        %v1181 = vpop.f32.mrf.mxu0
        %v1182 = vadd.f32 0.0, %v1181
        %v1183 = vpop.f32.mrf.mxu0
        %v1184 = vadd.f32 0.0, %v1183
        %1185 = vmatmul.bf16.gmra.mxu0 %v614
        %v1186 = vpop.f32.mrf.mxu0
        %v1187 = vadd.f32 0.0, %v1186
        %v1188 = vpop.f32.mrf.mxu0
        %v1189 = vadd.f32 0.0, %v1188
        %1190 = vmatmul.bf16.gmra.mxu0 %v615
        %v1191 = vpop.f32.mrf.mxu0
        %v1192 = vadd.f32 0.0, %v1191
        %v1193 = vpop.f32.mrf.mxu0
        %v1194 = vadd.f32 0.0, %v1193
        %1195 = vdwg.mxu0
        %1196 = vmatpush.bf16.msra.mxu0 %v932
        %1197 = vmatpush.bf16.msra.mxu0 %v924
        %1198 = vmatpush.bf16.msra.mxu0 %v916
        %1199 = vmatpush.bf16.msra.mxu0 %v908
        %1200 = vmatpush.bf16.msra.mxu0 %v900
        %1201 = vmatpush.bf16.msra.mxu0 %v892
        %1202 = vmatpush.bf16.msra.mxu0 %v884
        %1203 = vmatpush.bf16.msra.mxu0 %v876
        %1204 = vmatmul.bf16.gmra.mxu0 %v608
        %v1205 = vpop.f32.mrf.mxu0
        %v1206 = vadd.f32 0.0, %v1205
        %v1207 = vpop.f32.mrf.mxu0
        %v1208 = vadd.f32 0.0, %v1207
        %1209 = vmatmul.bf16.gmra.mxu0 %v609
        %v1210 = vpop.f32.mrf.mxu0
        %v1211 = vadd.f32 0.0, %v1210
        %v1212 = vpop.f32.mrf.mxu0
        %v1213 = vadd.f32 0.0, %v1212
        %1214 = vmatmul.bf16.gmra.mxu0 %v610
        %v1215 = vpop.f32.mrf.mxu0
        %v1216 = vadd.f32 0.0, %v1215
        %v1217 = vpop.f32.mrf.mxu0
        %v1218 = vadd.f32 0.0, %v1217
        %1219 = vmatmul.bf16.gmra.mxu0 %v611
        %v1220 = vpop.f32.mrf.mxu0
        %v1221 = vadd.f32 0.0, %v1220
        %v1222 = vpop.f32.mrf.mxu0
        %v1223 = vadd.f32 0.0, %v1222
        %1224 = vmatmul.bf16.gmra.mxu0 %v612
        %v1225 = vpop.f32.mrf.mxu0
        %v1226 = vadd.f32 0.0, %v1225
        %v1227 = vpop.f32.mrf.mxu0
        %v1228 = vadd.f32 0.0, %v1227
        %1229 = vmatmul.bf16.gmra.mxu0 %v613
        %v1230 = vpop.f32.mrf.mxu0
        %v1231 = vadd.f32 0.0, %v1230
        %v1232 = vpop.f32.mrf.mxu0
        %v1233 = vadd.f32 0.0, %v1232
        %1234 = vmatmul.bf16.gmra.mxu0 %v614
        %v1235 = vpop.f32.mrf.mxu0
        %v1236 = vadd.f32 0.0, %v1235
        %v1237 = vpop.f32.mrf.mxu0
        %v1238 = vadd.f32 0.0, %v1237
        %1239 = vmatmul.bf16.gmra.mxu0 %v615
        %v1240 = vpop.f32.mrf.mxu0
        %v1241 = vadd.f32 0.0, %v1240
        %v1242 = vpop.f32.mrf.mxu0
        %v1243 = vadd.f32 0.0, %v1242
        %1244 = vdwg.mxu0
        %1245 = vmatpush.bf16.msra.mxu0 %v933
        %1246 = vmatpush.bf16.msra.mxu0 %v925
        %1247 = vmatpush.bf16.msra.mxu0 %v917
        %1248 = vmatpush.bf16.msra.mxu0 %v909
        %1249 = vmatpush.bf16.msra.mxu0 %v901
        %1250 = vmatpush.bf16.msra.mxu0 %v893
        %1251 = vmatpush.bf16.msra.mxu0 %v885
        %1252 = vmatpush.bf16.msra.mxu0 %v877
        %1253 = vmatmul.bf16.gmra.mxu0 %v608
        %v1254 = vpop.f32.mrf.mxu0
        %v1255 = vadd.f32 0.0, %v1254
        %v1256 = vpop.f32.mrf.mxu0
        %v1257 = vadd.f32 0.0, %v1256
        %1258 = vmatmul.bf16.gmra.mxu0 %v609
        %v1259 = vpop.f32.mrf.mxu0
        %v1260 = vadd.f32 0.0, %v1259
        %v1261 = vpop.f32.mrf.mxu0
        %v1262 = vadd.f32 0.0, %v1261
        %1263 = vmatmul.bf16.gmra.mxu0 %v610
        %v1264 = vpop.f32.mrf.mxu0
        %v1265 = vadd.f32 0.0, %v1264
        %v1266 = vpop.f32.mrf.mxu0
        %v1267 = vadd.f32 0.0, %v1266
        %1268 = vmatmul.bf16.gmra.mxu0 %v611
        %v1269 = vpop.f32.mrf.mxu0
        %v1270 = vadd.f32 0.0, %v1269
        %v1271 = vpop.f32.mrf.mxu0
        %v1272 = vadd.f32 0.0, %v1271
        %1273 = vmatmul.bf16.gmra.mxu0 %v612
        %v1274 = vpop.f32.mrf.mxu0
        %v1275 = vadd.f32 0.0, %v1274
        %v1276 = vpop.f32.mrf.mxu0
        %v1277 = vadd.f32 0.0, %v1276
        %1278 = vmatmul.bf16.gmra.mxu0 %v613
        %v1279 = vpop.f32.mrf.mxu0
        %v1280 = vadd.f32 0.0, %v1279
        %v1281 = vpop.f32.mrf.mxu0
        %v1282 = vadd.f32 0.0, %v1281
        %1283 = vmatmul.bf16.gmra.mxu0 %v614
        %v1284 = vpop.f32.mrf.mxu0
        %v1285 = vadd.f32 0.0, %v1284
        %v1286 = vpop.f32.mrf.mxu0
        %v1287 = vadd.f32 0.0, %v1286
        %1288 = vmatmul.bf16.gmra.mxu0 %v615
        %v1289 = vpop.f32.mrf.mxu0
        %v1290 = vadd.f32 0.0, %v1289
        %v1291 = vpop.f32.mrf.mxu0
        %v1292 = vadd.f32 0.0, %v1291
        %1293 = vdwg.mxu0
        %1294 = vmatpush.bf16.msra.mxu0 %v934
        %1295 = vmatpush.bf16.msra.mxu0 %v926
        %1296 = vmatpush.bf16.msra.mxu0 %v918
        %1297 = vmatpush.bf16.msra.mxu0 %v910
        %1298 = vmatpush.bf16.msra.mxu0 %v902
        %1299 = vmatpush.bf16.msra.mxu0 %v894
        %1300 = vmatpush.bf16.msra.mxu0 %v886
        %1301 = vmatpush.bf16.msra.mxu0 %v878
        %1302 = vmatmul.bf16.gmra.mxu0 %v608
        %v1303 = vpop.f32.mrf.mxu0
        %v1304 = vadd.f32 0.0, %v1303
        %v1305 = vpop.f32.mrf.mxu0
        %v1306 = vadd.f32 0.0, %v1305
        %1307 = vmatmul.bf16.gmra.mxu0 %v609
        %v1308 = vpop.f32.mrf.mxu0
        %v1309 = vadd.f32 0.0, %v1308
        %v1310 = vpop.f32.mrf.mxu0
        %v1311 = vadd.f32 0.0, %v1310
        %1312 = vmatmul.bf16.gmra.mxu0 %v610
        %v1313 = vpop.f32.mrf.mxu0
        %v1314 = vadd.f32 0.0, %v1313
        %v1315 = vpop.f32.mrf.mxu0
        %v1316 = vadd.f32 0.0, %v1315
        %1317 = vmatmul.bf16.gmra.mxu0 %v611
        %v1318 = vpop.f32.mrf.mxu0
        %v1319 = vadd.f32 0.0, %v1318
        %v1320 = vpop.f32.mrf.mxu0
        %v1321 = vadd.f32 0.0, %v1320
        %1322 = vmatmul.bf16.gmra.mxu0 %v612
        %v1323 = vpop.f32.mrf.mxu0
        %v1324 = vadd.f32 0.0, %v1323
        %v1325 = vpop.f32.mrf.mxu0
        %v1326 = vadd.f32 0.0, %v1325
        %1327 = vmatmul.bf16.gmra.mxu0 %v613
        %v1328 = vpop.f32.mrf.mxu0
        %v1329 = vadd.f32 0.0, %v1328
        %v1330 = vpop.f32.mrf.mxu0
        %v1331 = vadd.f32 0.0, %v1330
        %1332 = vmatmul.bf16.gmra.mxu0 %v614
        %v1333 = vpop.f32.mrf.mxu0
        %v1334 = vadd.f32 0.0, %v1333
        %v1335 = vpop.f32.mrf.mxu0
        %v1336 = vadd.f32 0.0, %v1335
        %1337 = vmatmul.bf16.gmra.mxu0 %v615
        %v1338 = vpop.f32.mrf.mxu0
        %v1339 = vadd.f32 0.0, %v1338
        %v1340 = vpop.f32.mrf.mxu0
        %v1341 = vadd.f32 0.0, %v1340
        %1342 = vdwg.mxu0
        %1343 = vmatpush.bf16.msra.mxu0 %v935
        %1344 = vmatpush.bf16.msra.mxu0 %v927
        %1345 = vmatpush.bf16.msra.mxu0 %v919
        %1346 = vmatpush.bf16.msra.mxu0 %v911
        %1347 = vmatpush.bf16.msra.mxu0 %v903
        %1348 = vmatpush.bf16.msra.mxu0 %v895
        %1349 = vmatpush.bf16.msra.mxu0 %v887
        %1350 = vmatpush.bf16.msra.mxu0 %v879
        %1351 = vmatmul.bf16.gmra.mxu0 %v608
        %v1352 = vpop.f32.mrf.mxu0
        %v1353 = vadd.f32 0.0, %v1352
        %v1354 = vpop.f32.mrf.mxu0
        %v1355 = vadd.f32 0.0, %v1354
        %1356 = vmatmul.bf16.gmra.mxu0 %v609
        %v1357 = vpop.f32.mrf.mxu0
        %v1358 = vadd.f32 0.0, %v1357
        %v1359 = vpop.f32.mrf.mxu0
        %v1360 = vadd.f32 0.0, %v1359
        %1361 = vmatmul.bf16.gmra.mxu0 %v610
        %v1362 = vpop.f32.mrf.mxu0
        %v1363 = vadd.f32 0.0, %v1362
        %v1364 = vpop.f32.mrf.mxu0
        %v1365 = vadd.f32 0.0, %v1364
        %1366 = vmatmul.bf16.gmra.mxu0 %v611
        %v1367 = vpop.f32.mrf.mxu0
        %v1368 = vadd.f32 0.0, %v1367
        %v1369 = vpop.f32.mrf.mxu0
        %v1370 = vadd.f32 0.0, %v1369
        %1371 = vmatmul.bf16.gmra.mxu0 %v612
        %v1372 = vpop.f32.mrf.mxu0
        %v1373 = vadd.f32 0.0, %v1372
        %v1374 = vpop.f32.mrf.mxu0
        %v1375 = vadd.f32 0.0, %v1374
        %1376 = vmatmul.bf16.gmra.mxu0 %v613
        %v1377 = vpop.f32.mrf.mxu0
        %v1378 = vadd.f32 0.0, %v1377
        %v1379 = vpop.f32.mrf.mxu0
        %v1380 = vadd.f32 0.0, %v1379
        %1381 = vmatmul.bf16.gmra.mxu0 %v614
        %v1382 = vpop.f32.mrf.mxu0
        %v1383 = vadd.f32 0.0, %v1382
        %v1384 = vpop.f32.mrf.mxu0
        %v1385 = vadd.f32 0.0, %v1384
        %1386 = vmatmul.bf16.gmra.mxu0 %v615
        %v1387 = vpop.f32.mrf.mxu0
        %v1388 = vadd.f32 0.0, %v1387
        %v1389 = vpop.f32.mrf.mxu0
        %v1390 = vadd.f32 0.0, %v1389
        %1391 = vdwg.mxu0
        %v1392 = vmax.f32 %v1010, %v1012
        %v1393 = vmax.f32 %v1392, %v1015
        %v1394 = vmax.f32 %v1393, %v1017
        %v1395 = vmax.f32 %v1394, %v1020
        %v1396 = vmax.f32 %v1395, %v1022
        %v1397 = vmax.f32 %v1396, %v1025
        %v1398 = vmax.f32 %v1397, %v1027
        %v1399 = vmax.f32 %v1398, %v1030
        %v1400 = vmax.f32 %v1399, %v1032
        %v1401 = vmax.f32 %v1400, %v1035
        %v1402 = vmax.f32 %v1401, %v1037
        %v1403 = vmax.f32 %v1402, %v1040
        %v1404 = vmax.f32 %v1403, %v1042
        %v1405 = vmax.f32 %v1404, %v1045
        %v1406 = vmax.f32 %v1405, %v1047
        %v1407 = vrot.slane %v1406, 4
        %v1408 = vmax.f32 %v1406, %v1407
        %v1409 = vrot.slane %v1408, 2
        %v1410 = vmax.f32 %v1408, %v1409
        %v1411 = vrot.slane %v1410, 1
        %v1412 = vmax.f32 %v1410, %v1411
        %v1413 = vmax.f32 %v1059, %v1061
        %v1414 = vmax.f32 %v1413, %v1064
        %v1415 = vmax.f32 %v1414, %v1066
        %v1416 = vmax.f32 %v1415, %v1069
        %v1417 = vmax.f32 %v1416, %v1071
        %v1418 = vmax.f32 %v1417, %v1074
        %v1419 = vmax.f32 %v1418, %v1076
        %v1420 = vmax.f32 %v1419, %v1079
        %v1421 = vmax.f32 %v1420, %v1081
        %v1422 = vmax.f32 %v1421, %v1084
        %v1423 = vmax.f32 %v1422, %v1086
        %v1424 = vmax.f32 %v1423, %v1089
        %v1425 = vmax.f32 %v1424, %v1091
        %v1426 = vmax.f32 %v1425, %v1094
        %v1427 = vmax.f32 %v1426, %v1096
        %v1428 = vrot.slane %v1427, 4
        %v1429 = vmax.f32 %v1427, %v1428
        %v1430 = vrot.slane %v1429, 2
        %v1431 = vmax.f32 %v1429, %v1430
        %v1432 = vrot.slane %v1431, 1
        %v1433 = vmax.f32 %v1431, %v1432
        %v1434 = vmax.f32 %v1108, %v1110
        %v1435 = vmax.f32 %v1434, %v1113
        %v1436 = vmax.f32 %v1435, %v1115
        %v1437 = vmax.f32 %v1436, %v1118
        %v1438 = vmax.f32 %v1437, %v1120
        %v1439 = vmax.f32 %v1438, %v1123
        %v1440 = vmax.f32 %v1439, %v1125
        %v1441 = vmax.f32 %v1440, %v1128
        %v1442 = vmax.f32 %v1441, %v1130
        %v1443 = vmax.f32 %v1442, %v1133
        %v1444 = vmax.f32 %v1443, %v1135
        %v1445 = vmax.f32 %v1444, %v1138
        %v1446 = vmax.f32 %v1445, %v1140
        %v1447 = vmax.f32 %v1446, %v1143
        %v1448 = vmax.f32 %v1447, %v1145
        %v1449 = vrot.slane %v1448, 4
        %v1450 = vmax.f32 %v1448, %v1449
        %v1451 = vrot.slane %v1450, 2
        %v1452 = vmax.f32 %v1450, %v1451
        %v1453 = vrot.slane %v1452, 1
        %v1454 = vmax.f32 %v1452, %v1453
        %v1455 = vmax.f32 %v1157, %v1159
        %v1456 = vmax.f32 %v1455, %v1162
        %v1457 = vmax.f32 %v1456, %v1164
        %v1458 = vmax.f32 %v1457, %v1167
        %v1459 = vmax.f32 %v1458, %v1169
        %v1460 = vmax.f32 %v1459, %v1172
        %v1461 = vmax.f32 %v1460, %v1174
        %v1462 = vmax.f32 %v1461, %v1177
        %v1463 = vmax.f32 %v1462, %v1179
        %v1464 = vmax.f32 %v1463, %v1182
        %v1465 = vmax.f32 %v1464, %v1184
        %v1466 = vmax.f32 %v1465, %v1187
        %v1467 = vmax.f32 %v1466, %v1189
        %v1468 = vmax.f32 %v1467, %v1192
        %v1469 = vmax.f32 %v1468, %v1194
        %v1470 = vrot.slane %v1469, 4
        %v1471 = vmax.f32 %v1469, %v1470
        %v1472 = vrot.slane %v1471, 2
        %v1473 = vmax.f32 %v1471, %v1472
        %v1474 = vrot.slane %v1473, 1
        %v1475 = vmax.f32 %v1473, %v1474
        %v1476 = vmax.f32 %v1206, %v1208
        %v1477 = vmax.f32 %v1476, %v1211
        %v1478 = vmax.f32 %v1477, %v1213
        %v1479 = vmax.f32 %v1478, %v1216
        %v1480 = vmax.f32 %v1479, %v1218
        %v1481 = vmax.f32 %v1480, %v1221
        %v1482 = vmax.f32 %v1481, %v1223
        %v1483 = vmax.f32 %v1482, %v1226
        %v1484 = vmax.f32 %v1483, %v1228
        %v1485 = vmax.f32 %v1484, %v1231
        %v1486 = vmax.f32 %v1485, %v1233
        %v1487 = vmax.f32 %v1486, %v1236
        %v1488 = vmax.f32 %v1487, %v1238
        %v1489 = vmax.f32 %v1488, %v1241
        %v1490 = vmax.f32 %v1489, %v1243
        %v1491 = vrot.slane %v1490, 4
        %v1492 = vmax.f32 %v1490, %v1491
        %v1493 = vrot.slane %v1492, 2
        %v1494 = vmax.f32 %v1492, %v1493
        %v1495 = vrot.slane %v1494, 1
        %v1496 = vmax.f32 %v1494, %v1495
        %v1497 = vmax.f32 %v1255, %v1257
        %v1498 = vmax.f32 %v1497, %v1260
        %v1499 = vmax.f32 %v1498, %v1262
        %v1500 = vmax.f32 %v1499, %v1265
        %v1501 = vmax.f32 %v1500, %v1267
        %v1502 = vmax.f32 %v1501, %v1270
        %v1503 = vmax.f32 %v1502, %v1272
        %v1504 = vmax.f32 %v1503, %v1275
        %v1505 = vmax.f32 %v1504, %v1277
        %v1506 = vmax.f32 %v1505, %v1280
        %v1507 = vmax.f32 %v1506, %v1282
        %v1508 = vmax.f32 %v1507, %v1285
        %v1509 = vmax.f32 %v1508, %v1287
        %v1510 = vmax.f32 %v1509, %v1290
        %v1511 = vmax.f32 %v1510, %v1292
        %v1512 = vrot.slane %v1511, 4
        %v1513 = vmax.f32 %v1511, %v1512
        %v1514 = vrot.slane %v1513, 2
        %v1515 = vmax.f32 %v1513, %v1514
        %v1516 = vrot.slane %v1515, 1
        %v1517 = vmax.f32 %v1515, %v1516
        %v1518 = vmax.f32 %v1304, %v1306
        %v1519 = vmax.f32 %v1518, %v1309
        %v1520 = vmax.f32 %v1519, %v1311
        %v1521 = vmax.f32 %v1520, %v1314
        %v1522 = vmax.f32 %v1521, %v1316
        %v1523 = vmax.f32 %v1522, %v1319
        %v1524 = vmax.f32 %v1523, %v1321
        %v1525 = vmax.f32 %v1524, %v1324
        %v1526 = vmax.f32 %v1525, %v1326
        %v1527 = vmax.f32 %v1526, %v1329
        %v1528 = vmax.f32 %v1527, %v1331
        %v1529 = vmax.f32 %v1528, %v1334
        %v1530 = vmax.f32 %v1529, %v1336
        %v1531 = vmax.f32 %v1530, %v1339
        %v1532 = vmax.f32 %v1531, %v1341
        %v1533 = vrot.slane %v1532, 4
        %v1534 = vmax.f32 %v1532, %v1533
        %v1535 = vrot.slane %v1534, 2
        %v1536 = vmax.f32 %v1534, %v1535
        %v1537 = vrot.slane %v1536, 1
        %v1538 = vmax.f32 %v1536, %v1537
        %v1539 = vmax.f32 %v1353, %v1355
        %v1540 = vmax.f32 %v1539, %v1358
        %v1541 = vmax.f32 %v1540, %v1360
        %v1542 = vmax.f32 %v1541, %v1363
        %v1543 = vmax.f32 %v1542, %v1365
        %v1544 = vmax.f32 %v1543, %v1368
        %v1545 = vmax.f32 %v1544, %v1370
        %v1546 = vmax.f32 %v1545, %v1373
        %v1547 = vmax.f32 %v1546, %v1375
        %v1548 = vmax.f32 %v1547, %v1378
        %v1549 = vmax.f32 %v1548, %v1380
        %v1550 = vmax.f32 %v1549, %v1383
        %v1551 = vmax.f32 %v1550, %v1385
        %v1552 = vmax.f32 %v1551, %v1388
        %v1553 = vmax.f32 %v1552, %v1390
        %v1554 = vrot.slane %v1553, 4
        %v1555 = vmax.f32 %v1553, %v1554
        %v1556 = vrot.slane %v1555, 2
        %v1557 = vmax.f32 %v1555, %v1556
        %v1558 = vrot.slane %v1557, 1
        %v1559 = vmax.f32 %v1557, %v1558
        %v1568 = vrot.slane %v1433, 7
        %v1569 = vrot.slane %v1454, 6
        %v1570 = vrot.slane %v1475, 5
        %v1571 = vrot.slane %v1496, 4
        %v1572 = vrot.slane %v1517, 3
        %v1573 = vrot.slane %v1538, 2
        %v1574 = vrot.slane %v1559, 1
        %vm1575 = vcmask 1040384
        %v1576 = vsel %vm1575, %v1412, %v1568
        %vm1577 = vcmask 1042434
        %v1578 = vsel %vm1577, %v1569, %v1570
        %vm1579 = vcmask 1041408
        %v1580 = vsel %vm1579, %v1576, %v1578
        %vm1581 = vcmask 1044484
        %v1582 = vsel %vm1581, %v1571, %v1572
        %vm1583 = vcmask 1046534
        %v1584 = vsel %vm1583, %v1573, %v1574
        %vm1585 = vcmask 1045508
        %v1586 = vsel %vm1585, %v1582, %v1584
        %v1587 = vsel %vm405, %v1580, %v1586
        %1589 = vst [vmem:[%s317] sm:$0xff] %v1587
        %p1590 = scmp.lt.s32.totalorder %s23, 1
        %s1591 = scalar_select %p1590, %s23, 1
        %p1592 = scmp.lt.s32.totalorder %s24, 0
        %s1593 = scalar_select %p1592, %s24, 0
        %s1594 = smul.addr %s1593, 8
        %s1595 = smul.addr %s1591, 8
        %s1596 = sadd.s32 %s1594, %s1595
        %s1597 = scalar_lea.vmem %s6, %s1596
        // Predicated region
        $region53: #{pointnet_dense_cls_forward.3} parent=43 // pred_check
          %p1598 = pneg %p184
        $region54: #{pointnet_dense_cls_forward.3} parent=43 // pred_check_branch
          %1600 = sbr.rel (%p1598) target = $region56
        $region55: #{pointnet_dense_cls_forward.3} parent=43 // pred_region
          _
        $region56: #{pointnet_dense_cls_forward.3} parent=43 // pred_fallthru
          _
      $region44: #{pointnet_dense_cls_forward.3} parent=5 // pred_fallthru
        _
      %p1601 = scmp.le.s32.totalorder 2, %s14
      // Predicated region
      $region57: #{pointnet_dense_cls_forward.3} parent=5 // pred_check
        %p1602 = pneg %p1601
      $region58: #{pointnet_dense_cls_forward.3} parent=5 // pred_check_branch
        %1604 = sbr.rel (%p1602) target = $region60
      $region59: #{pointnet_dense_cls_forward.3} parent=5 // pred_region
        %s1605 = ssub.s32 %s14, 2
        // Predicated region
        $region61: #{pointnet_dense_cls_forward.3} parent=59 // pred_check
          %p1606 = pneg %p190
        $region62: #{pointnet_dense_cls_forward.3} parent=59 // pred_check_branch
          %1608 = sbr.rel (%p1606) target = $region64
        $region63: #{pointnet_dense_cls_forward.3} parent=59 // pred_region
          %p1609 = scmp.lt.s32.totalorder %s25, 1
          %s1610 = scalar_select %p1609, %s25, 1
          %p1611 = scmp.lt.s32.totalorder %s26, 0
          %s1612 = scalar_select %p1611, %s26, 0
          %s1613 = smul.addr %s1612, 8
          %s1614 = smul.addr %s1610, 8
          %s1615 = sadd.s32 %s1613, %s1614
          %s1616 = scalar_lea.vmem %s6, %s1615
        $region64: #{pointnet_dense_cls_forward.3} parent=59 // pred_fallthru
          _
      $region60: #{pointnet_dense_cls_forward.3} parent=5 // pred_fallthru
        _
    $region6: #{pointnet_dense_cls_forward.3} parent=1 // loop_footer
      %s18 = sadd.s32 1, %s14
    $region7: #{pointnet_dense_cls_forward.3} parent=1 // loop_footer_branch
      %13 = sbr.rel target = $region3
    $region8: #{pointnet_dense_cls_forward.3} parent=1 // loop_exit
      _
    %1617 = vsyncpa [#allocation3], 1
    %s1618 = scalar_lea.sflag [#allocation3], 1
    %1619 = vsyncpa %s1618, 1
    %1620 = vsyncpa [#allocation5], 1

// kernel: pointnet_dense_cls_forward.4
$region0: #{pointnet_dense_cls_forward.4}
  #allocation0 [shape = 'u32[]', space=smem, size = 0x4, offset = 0x4, fixed_abs, tag = 'smem constant byte address 0x4 - core index']
  #allocation1 [shape = 'u32[72,128]{1,0:T(1,128)}', space=vmem, size = 0x9000, scoped, tag = 'internal scratch']
  %s0 = inlined_call_operand.vmem [shape: bf16[2,128,8], index: 0, kind: input, shape index: {}]
  %s1 = inlined_call_operand.vmem [shape: bf16[2,8,64], index: 1, kind: input, shape index: {}]
  %s2 = inlined_call_operand.vmem [shape: f32[1,64], index: 2, kind: input, shape index: {}]
  %s3 = inlined_call_operand.vmem [shape: bf16[64,128], index: 3, kind: input, shape index: {}]
  %s4 = inlined_call_operand.vmem [shape: f32[1,128], index: 4, kind: input, shape index: {}]
  %s5 = inlined_call_operand.vmem [shape: bf16[128,1024], index: 5, kind: input, shape index: {}]
  %s6 = inlined_call_operand.vmem [shape: f32[2,1,1,1024], index: 6, kind: output, shape index: {}]
  %s7 = sld [smem:[#allocation0]]
  $region57: #{pointnet_dense_cls_forward.4} parent=0
    _
  %s9 = ssub.s32 1, %s7
  %s10 = scalar_select 0, %s9, %s7
  loop: start=0, step=1, limit=4
  $region2: #{pointnet_dense_cls_forward.4} parent=0 // loop_pre_header
    _
  $region3: #{pointnet_dense_cls_forward.4} parent=0 // loop_header
    %s12 = sphi 0, %s16
    %p13 = scmp.ge.s32.totalorder %s12, 4
    %s19 = sphi 0, %s31
    %s20 = sphi 0, %s27
    %s21 = sphi 0, %s19
    %s22 = sphi 0, %s20
    %s23 = sphi 0, %s21
    %s24 = sphi 0, %s22
    %s36 = sphi 0, %s38
    %s39 = sphi 0, %s36
    %s40 = sphi 0, %s39
    %s56 = sphi 0, %s40
    %s62 = sphi 0, %s64
    %s65 = sphi 0, %s62
    %s66 = sphi 0, %s65
    %s82 = sphi 0, %s66
    %s86 = sphi 0, %s86
    %s88 = sphi 0, %s86
    %s89 = sphi 0, %s88
    %s103 = sphi 0, %s89
    %s107 = sphi 0, %s107
    %s109 = sphi 0, %s107
    %s110 = sphi 0, %s109
    %s124 = sphi 0, %s110
    %s128 = sphi 0, %s128
    %s130 = sphi 0, %s128
    %s131 = sphi 0, %s130
    %s145 = sphi 0, %s131
    %s149 = sphi 0, %s149
    %s151 = sphi 0, %s149
    %s152 = sphi 0, %s151
    %s166 = sphi 0, %s152
    %s174 = sphi 0, %s176
    %s177 = sphi 0, %s174
    %s178 = sphi 0, %s177
    %s194 = sphi 0, %s178
  $region4: #{pointnet_dense_cls_forward.4} parent=0 // loop_header_branch
    %15 = sbr.rel (%p13) target = $region8
  $region5: #{pointnet_dense_cls_forward.4} parent=0 // loop_body
    %s17 = ssub.s32 %s12, 1
    %s18 = ssub.s32 %s12, 2
    %s25 = sadd.s32 1, %s20
    %p26 = scmp.ge.s32.totalorder %s25, 1
    %s27 = scalar_select %p26, 0, %s25
    %s28 = sadd.s32 1, %s19
    %s29 = scalar_select %p26, %s28, %s19
    %p30 = scmp.ge.s32.totalorder %s29, 2
    %s31 = scalar_select %p30, 0, %s29
    %s32 = ssub.s32 %s19, %s31
    %s33 = ssub.s32 %s20, %s27
    %s34 = sor.u32 %s32, %s33
    %p35 = scmp.eq.s32.totalorder %s34, 0
    %s37 = sadd.s32 %s36, 1
    %s38 = scalar_select %p35, %s36, %s37
    %p41 = pneg %p35
    %p42 = scmp.eq.s32.totalorder %s12, 1
    %p43 = por %p41, %p42
    %p44 = scmp.ne.s32.totalorder %s36, %s39
    %p45 = scmp.eq.s32.totalorder %s12, 0
    %p46 = por %p44, %p45
    %p47 = scmp.ne.s32.totalorder %s36, %s39
    %p48 = scmp.eq.s32.totalorder %s17, 1
    %p49 = por %p47, %p48
    %p50 = scmp.ne.s32.totalorder %s39, %s40
    %p51 = scmp.eq.s32.totalorder %s17, 0
    %p52 = por %p50, %p51
    %p53 = scmp.ne.s32.totalorder %s39, %s40
    %p54 = scmp.eq.s32.totalorder %s18, 1
    %p55 = por %p53, %p54
    %p57 = scmp.ne.s32.totalorder %s40, %s56
    %p58 = scmp.eq.s32.totalorder %s18, 0
    %p59 = por %p57, %p58
    %s60 = ssub.s32 %s19, %s31
    %p61 = scmp.eq.s32.totalorder %s60, 0
    %s63 = sadd.s32 %s62, 1
    %s64 = scalar_select %p61, %s62, %s63
    %p67 = pneg %p61
    %p68 = scmp.eq.s32.totalorder %s12, 1
    %p69 = por %p67, %p68
    %p70 = scmp.ne.s32.totalorder %s62, %s65
    %p71 = scmp.eq.s32.totalorder %s12, 0
    %p72 = por %p70, %p71
    %p73 = scmp.ne.s32.totalorder %s62, %s65
    %p74 = scmp.eq.s32.totalorder %s17, 1
    %p75 = por %p73, %p74
    %p76 = scmp.ne.s32.totalorder %s65, %s66
    %p77 = scmp.eq.s32.totalorder %s17, 0
    %p78 = por %p76, %p77
    %p79 = scmp.ne.s32.totalorder %s65, %s66
    %p80 = scmp.eq.s32.totalorder %s18, 1
    %p81 = por %p79, %p80
    %p83 = scmp.ne.s32.totalorder %s66, %s82
    %p84 = scmp.eq.s32.totalorder %s18, 0
    %p85 = por %p83, %p84
    %s87 = sadd.s32 %s86, 1
    %p90 = scmp.eq.s32.totalorder %s12, 1
    %p91 = scmp.ne.s32.totalorder %s86, %s88
    %p92 = scmp.eq.s32.totalorder %s12, 0
    %p93 = por %p91, %p92
    %p94 = scmp.ne.s32.totalorder %s86, %s88
    %p95 = scmp.eq.s32.totalorder %s17, 1
    %p96 = por %p94, %p95
    %p97 = scmp.ne.s32.totalorder %s88, %s89
    %p98 = scmp.eq.s32.totalorder %s17, 0
    %p99 = por %p97, %p98
    %p100 = scmp.ne.s32.totalorder %s88, %s89
    %p101 = scmp.eq.s32.totalorder %s18, 1
    %p102 = por %p100, %p101
    %p104 = scmp.ne.s32.totalorder %s89, %s103
    %p105 = scmp.eq.s32.totalorder %s18, 0
    %p106 = por %p104, %p105
    %s108 = sadd.s32 %s107, 1
    %p111 = scmp.eq.s32.totalorder %s12, 1
    %p112 = scmp.ne.s32.totalorder %s107, %s109
    %p113 = scmp.eq.s32.totalorder %s12, 0
    %p114 = por %p112, %p113
    %p115 = scmp.ne.s32.totalorder %s107, %s109
    %p116 = scmp.eq.s32.totalorder %s17, 1
    %p117 = por %p115, %p116
    %p118 = scmp.ne.s32.totalorder %s109, %s110
    %p119 = scmp.eq.s32.totalorder %s17, 0
    %p120 = por %p118, %p119
    %p121 = scmp.ne.s32.totalorder %s109, %s110
    %p122 = scmp.eq.s32.totalorder %s18, 1
    %p123 = por %p121, %p122
    %p125 = scmp.ne.s32.totalorder %s110, %s124
    %p126 = scmp.eq.s32.totalorder %s18, 0
    %p127 = por %p125, %p126
    %s129 = sadd.s32 %s128, 1
    %p132 = scmp.eq.s32.totalorder %s12, 1
    %p133 = scmp.ne.s32.totalorder %s128, %s130
    %p134 = scmp.eq.s32.totalorder %s12, 0
    %p135 = por %p133, %p134
    %p136 = scmp.ne.s32.totalorder %s128, %s130
    %p137 = scmp.eq.s32.totalorder %s17, 1
    %p138 = por %p136, %p137
    %p139 = scmp.ne.s32.totalorder %s130, %s131
    %p140 = scmp.eq.s32.totalorder %s17, 0
    %p141 = por %p139, %p140
    %p142 = scmp.ne.s32.totalorder %s130, %s131
    %p143 = scmp.eq.s32.totalorder %s18, 1
    %p144 = por %p142, %p143
    %p146 = scmp.ne.s32.totalorder %s131, %s145
    %p147 = scmp.eq.s32.totalorder %s18, 0
    %p148 = por %p146, %p147
    %s150 = sadd.s32 %s149, 1
    %p153 = scmp.eq.s32.totalorder %s12, 1
    %p154 = scmp.ne.s32.totalorder %s149, %s151
    %p155 = scmp.eq.s32.totalorder %s12, 0
    %p156 = por %p154, %p155
    %p157 = scmp.ne.s32.totalorder %s149, %s151
    %p158 = scmp.eq.s32.totalorder %s17, 1
    %p159 = por %p157, %p158
    %p160 = scmp.ne.s32.totalorder %s151, %s152
    %p161 = scmp.eq.s32.totalorder %s17, 0
    %p162 = por %p160, %p161
    %p163 = scmp.ne.s32.totalorder %s151, %s152
    %p164 = scmp.eq.s32.totalorder %s18, 1
    %p165 = por %p163, %p164
    %p167 = scmp.ne.s32.totalorder %s152, %s166
    %p168 = scmp.eq.s32.totalorder %s18, 0
    %p169 = por %p167, %p168
    %s170 = ssub.s32 %s19, %s31
    %s171 = ssub.s32 %s20, %s27
    %s172 = sor.u32 %s170, %s171
    %p173 = scmp.eq.s32.totalorder %s172, 0
    %s175 = sadd.s32 %s174, 1
    %s176 = scalar_select %p173, %s174, %s175
    %p179 = pneg %p173
    %p180 = scmp.eq.s32.totalorder %s12, 1
    %p181 = por %p179, %p180
    %p182 = scmp.ne.s32.totalorder %s174, %s177
    %p183 = scmp.eq.s32.totalorder %s12, 0
    %p184 = por %p182, %p183
    %p185 = scmp.ne.s32.totalorder %s174, %s177
    %p186 = scmp.eq.s32.totalorder %s17, 1
    %p187 = por %p185, %p186
    %p188 = scmp.ne.s32.totalorder %s177, %s178
    %p189 = scmp.eq.s32.totalorder %s17, 0
    %p190 = por %p188, %p189
    %p191 = scmp.ne.s32.totalorder %s177, %s178
    %p192 = scmp.eq.s32.totalorder %s18, 1
    %p193 = por %p191, %p192
    %p195 = scmp.ne.s32.totalorder %s178, %s194
    %p196 = scmp.eq.s32.totalorder %s18, 0
    %p197 = por %p195, %p196
    %p198 = scmp.le.s32.totalorder 1, %s12
    %p199 = scmp.lt.s32.totalorder %s12, 3
    %p200 = pnand %p198, %p199
    %p201 = pneg %p200
    // Predicated region
    $region9: #{pointnet_dense_cls_forward.4} parent=5 // pred_check
      _
    $region10: #{pointnet_dense_cls_forward.4} parent=5 // pred_check_branch
      %203 = sbr.rel (%p200) target = $region12
    $region11: #{pointnet_dense_cls_forward.4} parent=5 // pred_region
      %s204 = ssub.s32 %s12, 1
      // Predicated region
      $region13: #{pointnet_dense_cls_forward.4} parent=11 // pred_check
        %p205 = pneg %p99
      $region14: #{pointnet_dense_cls_forward.4} parent=11 // pred_check_branch
        %207 = sbr.rel (%p205) target = $region16
      $region15: #{pointnet_dense_cls_forward.4} parent=11 // pred_region
        _
      $region16: #{pointnet_dense_cls_forward.4} parent=11 // pred_fallthru
        _
      // Predicated region
      $region17: #{pointnet_dense_cls_forward.4} parent=11 // pred_check
        %p208 = pneg %p120
      $region18: #{pointnet_dense_cls_forward.4} parent=11 // pred_check_branch
        %210 = sbr.rel (%p208) target = $region20
      $region19: #{pointnet_dense_cls_forward.4} parent=11 // pred_region
        _
      $region20: #{pointnet_dense_cls_forward.4} parent=11 // pred_fallthru
        _
      // Predicated region
      $region21: #{pointnet_dense_cls_forward.4} parent=11 // pred_check
        %p211 = pneg %p141
      $region22: #{pointnet_dense_cls_forward.4} parent=11 // pred_check_branch
        %213 = sbr.rel (%p211) target = $region24
      $region23: #{pointnet_dense_cls_forward.4} parent=11 // pred_region
        _
      $region24: #{pointnet_dense_cls_forward.4} parent=11 // pred_fallthru
        _
      // Predicated region
      $region25: #{pointnet_dense_cls_forward.4} parent=11 // pred_check
        %p214 = pneg %p162
      $region26: #{pointnet_dense_cls_forward.4} parent=11 // pred_check_branch
        %216 = sbr.rel (%p214) target = $region28
      $region27: #{pointnet_dense_cls_forward.4} parent=11 // pred_region
        _
      $region28: #{pointnet_dense_cls_forward.4} parent=11 // pred_fallthru
        _
    $region12: #{pointnet_dense_cls_forward.4} parent=5 // pred_fallthru
      _
    %p217 = scmp.lt.s32.totalorder %s12, 2
    // Predicated region
    $region29: #{pointnet_dense_cls_forward.4} parent=5 // pred_check
      %p218 = pneg %p217
    $region30: #{pointnet_dense_cls_forward.4} parent=5 // pred_check_branch
      %220 = sbr.rel (%p218) target = $region32
    $region31: #{pointnet_dense_cls_forward.4} parent=5 // pred_region
      // Predicated region
      $region33: #{pointnet_dense_cls_forward.4} parent=31 // pred_check
        %p221 = pneg %p46
      $region34: #{pointnet_dense_cls_forward.4} parent=31 // pred_check_branch
        %223 = sbr.rel (%p221) target = $region36
      $region35: #{pointnet_dense_cls_forward.4} parent=31 // pred_region
        %s224 = smul.u32 16, %s20
        %p225 = scmp.lt.s32.totalorder %s19, 1
        %s226 = scalar_select %p225, %s19, 1
        %p227 = scmp.lt.s32.totalorder %s224, 15
        %s228 = scalar_select %p227, %s224, 15
        %s229 = smul.addr %s226, 16
        %s230 = sadd.s32 %s228, %s229
        %s231 = smul.addr %s230, 4
        %s232 = scalar_lea.vmem %s0, %s231
        %s233 = smul.u32 16, %s20
      $region36: #{pointnet_dense_cls_forward.4} parent=31 // pred_fallthru
        _
      // Predicated region
      $region37: #{pointnet_dense_cls_forward.4} parent=31 // pred_check
        %p234 = pneg %p72
      $region38: #{pointnet_dense_cls_forward.4} parent=31 // pred_check_branch
        %236 = sbr.rel (%p234) target = $region40
      $region39: #{pointnet_dense_cls_forward.4} parent=31 // pred_region
        %p237 = scmp.lt.s32.totalorder %s19, 1
        %s238 = scalar_select %p237, %s19, 1
        %s239 = smul.addr %s238, 4
        %s240 = scalar_lea.vmem %s1, %s239
      $region40: #{pointnet_dense_cls_forward.4} parent=31 // pred_fallthru
        _
    $region32: #{pointnet_dense_cls_forward.4} parent=5 // pred_fallthru
      _
    %p241 = scmp.le.s32.totalorder 1, %s12
    %p242 = scmp.lt.s32.totalorder %s12, 3
    %p243 = pnand %p241, %p242
    %p244 = pneg %p243
    // Predicated region
    $region41: #{pointnet_dense_cls_forward.4} parent=5 // pred_check
      _
    $region42: #{pointnet_dense_cls_forward.4} parent=5 // pred_check_branch
      %246 = sbr.rel (%p243) target = $region44
    $region43: #{pointnet_dense_cls_forward.4} parent=5 // pred_region
      %s247 = ssub.s32 %s12, 1
      %s248 = smul.u32 16, %s22
      %p249 = scmp.lt.s32.totalorder %s21, 1
      %s250 = scalar_select %p249, %s21, 1
      %p251 = scmp.lt.s32.totalorder %s248, 15
      %s252 = scalar_select %p251, %s248, 15
      %s253 = smul.addr %s250, 16
      %s254 = sadd.s32 %s252, %s253
      %s255 = smul.addr %s254, 4
      %s256 = scalar_lea.vmem %s0, %s255
      %p257 = pneg %p52
      %p258 = pneg %p49
      %p259 = scmp.lt.s32.totalorder %s21, 1
      %s260 = scalar_select %p259, %s21, 1
      %s261 = smul.addr %s260, 4
      %s262 = scalar_lea.vmem %s1, %s261
      %p263 = pneg %p78
      %p264 = pneg %p75
      %p265 = pneg %p99
      %p266 = pneg %p96
      %p267 = pneg %p120
      %p268 = pneg %p117
      %p269 = pneg %p141
      %p270 = pneg %p138
      %p271 = pneg %p162
      %p272 = pneg %p159
      %p273 = pneg %p190
      %p274 = pneg %p187
      %p275 = scmp.lt.s32.totalorder %s21, 1
      %s276 = scalar_select %p275, %s21, 1
      %p277 = scmp.lt.s32.totalorder %s22, 0
      %s278 = scalar_select %p277, %s22, 0
      %s279 = smul.addr %s278, 8
      %s280 = smul.addr %s276, 8
      %s281 = sadd.s32 %s279, %s280
      %s282 = scalar_lea.vmem %s6, %s281
      %s283 = smul.u32 16, %s22
      %p284 = scmp.lt.s32.totalorder %s21, 1
      %s285 = scalar_select %p284, %s21, 1
      %p286 = scmp.lt.s32.totalorder %s283, 15
      %s287 = scalar_select %p286, %s283, 15
      %s288 = smul.addr %s285, 16
      %s289 = sadd.s32 %s287, %s288
      %s290 = smul.addr %s289, 4
      %s291 = scalar_lea.vmem %s0, %s290
      %s292 = smul.u32 16, %s22
      %p293 = scmp.lt.s32.totalorder %s21, 1
      %s294 = scalar_select %p293, %s21, 1
      %s295 = smul.addr %s294, 4
      %s296 = scalar_lea.vmem %s1, %s295
      %p297 = scmp.lt.s32.totalorder %s21, 1
      %s298 = scalar_select %p297, %s21, 1
      %p299 = scmp.lt.s32.totalorder %s22, 0
      %s300 = scalar_select %p299, %s22, 0
      %s301 = smul.addr %s300, 8
      %s302 = smul.addr %s298, 8
      %s303 = sadd.s32 %s301, %s302
      %s304 = scalar_lea.vmem %s6, %s303
      %v306 = vld [vmem:[%s291] sm:$0xf]
      %v307 = vld [vmem:[%s291 + $0x4] sm:$0xf]
      %v308 = vld [vmem:[%s291 + $0x8] sm:$0xf]
      %v309 = vld [vmem:[%s291 + $0xc] sm:$0xf]
      %v310 = vld [vmem:[%s291 + $0x10] sm:$0xf]
      %v311 = vld [vmem:[%s291 + $0x14] sm:$0xf]
      %v312 = vld [vmem:[%s291 + $0x18] sm:$0xf]
      %v313 = vld [vmem:[%s291 + $0x1c] sm:$0xf]
      %v314 = vld [vmem:[%s291 + $0x20] sm:$0xf]
      %v315 = vld [vmem:[%s291 + $0x24] sm:$0xf]
      %v316 = vld [vmem:[%s291 + $0x28] sm:$0xf]
      %v317 = vld [vmem:[%s291 + $0x2c] sm:$0xf]
      %v318 = vld [vmem:[%s291 + $0x30] sm:$0xf]
      %v319 = vld [vmem:[%s291 + $0x34] sm:$0xf]
      %v320 = vld [vmem:[%s291 + $0x38] sm:$0xf]
      %v321 = vld [vmem:[%s291 + $0x3c] sm:$0xf]
      %v322 = vld [vmem:[%s296] sm:$0xf]
      %v323 = vld [vmem:[%s2] sm:$0x1]
      %v325 = vperm.slane %v323, 0
      %v343 = vunpack.c.l.b16 %v306
      %v344 = vunpack.c.l.b16 %v307
      %v345 = vunpack.c.l.b16 %v308
      %v346 = vunpack.c.l.b16 %v309
      %v347 = vunpack.c.l.b16 %v310
      %v348 = vunpack.c.l.b16 %v311
      %v349 = vunpack.c.l.b16 %v312
      %v350 = vunpack.c.l.b16 %v313
      %v351 = vunpack.c.l.b16 %v314
      %v352 = vunpack.c.l.b16 %v315
      %v353 = vunpack.c.l.b16 %v316
      %v354 = vunpack.c.l.b16 %v317
      %v355 = vunpack.c.l.b16 %v318
      %v356 = vunpack.c.l.b16 %v319
      %v357 = vunpack.c.l.b16 %v320
      %v358 = vunpack.c.l.b16 %v321
      %v359 = vpack.c.b16 %v344, %v343
      %v360 = vpack.c.b16 %v346, %v345
      %v361 = vpack.c.b16 %v348, %v347
      %v362 = vpack.c.b16 %v350, %v349
      %v363 = vpack.c.b16 %v352, %v351
      %v364 = vpack.c.b16 %v354, %v353
      %v365 = vpack.c.b16 %v356, %v355
      %v366 = vpack.c.b16 %v358, %v357
      %vm367 = vcmask 64512
      %v369 = vsel %vm367, %v359, 0
      %v372 = vsel %vm367, %v360, 0
      %v375 = vsel %vm367, %v361, 0
      %v378 = vsel %vm367, %v362, 0
      %v381 = vsel %vm367, %v363, 0
      %v384 = vsel %vm367, %v364, 0
      %v387 = vsel %vm367, %v365, 0
      %v390 = vsel %vm367, %v366, 0
      %vm392 = vcmask 1043456
      %v394 = vsel %vm392, %v322, 0
      %396 = vmatpush.bf16.msra.mxu0 0
      %397 = vmatpush.bf16.msra.mxu0 0
      %398 = vmatpush.bf16.msra.mxu0 0
      %399 = vmatpush.bf16.msra.mxu0 0
      %400 = vmatpush.bf16.msra.mxu0 0
      %401 = vmatpush.bf16.msra.mxu0 0
      %402 = vmatpush.bf16.msra.mxu0 0
      %403 = vmatpush.bf16.msra.mxu0 %v394
      %404 = vmatmul.bf16.gmra.mxu0 %v369
      %v405 = vpop.f32.mrf.mxu0
      %v406 = vadd.f32 %v325, %v405
      %v407 = vpop.f32.mrf.mxu0
      %v408 = vadd.f32 %v325, %v407
      %409 = vmatmul.bf16.gmra.mxu0 %v372
      %v410 = vpop.f32.mrf.mxu0
      %v411 = vadd.f32 %v325, %v410
      %v412 = vpop.f32.mrf.mxu0
      %v413 = vadd.f32 %v325, %v412
      %414 = vmatmul.bf16.gmra.mxu0 %v375
      %v415 = vpop.f32.mrf.mxu0
      %v416 = vadd.f32 %v325, %v415
      %v417 = vpop.f32.mrf.mxu0
      %v418 = vadd.f32 %v325, %v417
      %419 = vmatmul.bf16.gmra.mxu0 %v378
      %v420 = vpop.f32.mrf.mxu0
      %v421 = vadd.f32 %v325, %v420
      %v422 = vpop.f32.mrf.mxu0
      %v423 = vadd.f32 %v325, %v422
      %424 = vmatmul.bf16.gmra.mxu0 %v381
      %v425 = vpop.f32.mrf.mxu0
      %v426 = vadd.f32 %v325, %v425
      %v427 = vpop.f32.mrf.mxu0
      %v428 = vadd.f32 %v325, %v427
      %429 = vmatmul.bf16.gmra.mxu0 %v384
      %v430 = vpop.f32.mrf.mxu0
      %v431 = vadd.f32 %v325, %v430
      %v432 = vpop.f32.mrf.mxu0
      %v433 = vadd.f32 %v325, %v432
      %434 = vmatmul.bf16.gmra.mxu0 %v387
      %v435 = vpop.f32.mrf.mxu0
      %v436 = vadd.f32 %v325, %v435
      %v437 = vpop.f32.mrf.mxu0
      %v438 = vadd.f32 %v325, %v437
      %439 = vmatmul.bf16.gmra.mxu0 %v390
      %v440 = vpop.f32.mrf.mxu0
      %v441 = vadd.f32 %v325, %v440
      %v442 = vpop.f32.mrf.mxu0
      %v443 = vadd.f32 %v325, %v442
      %444 = vdwg.mxu0
      %v445 = vmax.f32 %v406, 0.0
      %v446 = vmax.f32 %v408, 0.0
      %v447 = vmax.f32 %v411, 0.0
      %v448 = vmax.f32 %v413, 0.0
      %v449 = vmax.f32 %v416, 0.0
      %v450 = vmax.f32 %v418, 0.0
      %v451 = vmax.f32 %v421, 0.0
      %v452 = vmax.f32 %v423, 0.0
      %v453 = vmax.f32 %v426, 0.0
      %v454 = vmax.f32 %v428, 0.0
      %v455 = vmax.f32 %v431, 0.0
      %v456 = vmax.f32 %v433, 0.0
      %v457 = vmax.f32 %v436, 0.0
      %v458 = vmax.f32 %v438, 0.0
      %v459 = vmax.f32 %v441, 0.0
      %v460 = vmax.f32 %v443, 0.0
      %v461 = vpack.c.bf16 %v446, %v445
      %v462 = vpack.c.bf16 %v448, %v447
      %v463 = vpack.c.bf16 %v450, %v449
      %v464 = vpack.c.bf16 %v452, %v451
      %v465 = vpack.c.bf16 %v454, %v453
      %v466 = vpack.c.bf16 %v456, %v455
      %v467 = vpack.c.bf16 %v458, %v457
      %v468 = vpack.c.bf16 %v460, %v459
      %v469 = vld [vmem:[%s3] sm:$0xf]
      %v470 = vld [vmem:[%s3 + $0x4] sm:$0xf]
      %v471 = vld [vmem:[%s3 + $0x8] sm:$0xf]
      %v472 = vld [vmem:[%s3 + $0xc] sm:$0xf]
      %v473 = vld [vmem:[%s3 + $0x10] sm:$0xf]
      %v474 = vld [vmem:[%s3 + $0x14] sm:$0xf]
      %v475 = vld [vmem:[%s3 + $0x18] sm:$0xf]
      %v476 = vld [vmem:[%s3 + $0x1c] sm:$0xf]
      %v477 = vld [vmem:[%s4] sm:$0x1]
      %v479 = vperm.slane %v477, 0
      %v489 = vunpack.c.l.b16 %v469
      %v490 = vunpack.c.l.b16 %v470
      %v491 = vunpack.c.l.b16 %v471
      %v492 = vunpack.c.l.b16 %v472
      %v493 = vunpack.c.l.b16 %v473
      %v494 = vunpack.c.l.b16 %v474
      %v495 = vunpack.c.l.b16 %v475
      %v496 = vunpack.c.l.b16 %v476
      %v497 = vpack.c.b16 %v490, %v489
      %v498 = vpack.c.b16 %v492, %v491
      %v499 = vpack.c.b16 %v494, %v493
      %v500 = vpack.c.b16 %v496, %v495
      %vm505 = vcmask 523264
      %v507 = vsel %vm505, %v461, 0
      %v510 = vsel %vm505, %v462, 0
      %v513 = vsel %vm505, %v463, 0
      %v516 = vsel %vm505, %v464, 0
      %v519 = vsel %vm505, %v465, 0
      %v522 = vsel %vm505, %v466, 0
      %v525 = vsel %vm505, %v467, 0
      %v528 = vsel %vm505, %v468, 0
      %530 = vmatpush.bf16.msra.mxu0 0
      %531 = vmatpush.bf16.msra.mxu0 0
      %532 = vmatpush.bf16.msra.mxu0 0
      %533 = vmatpush.bf16.msra.mxu0 0
      %534 = vmatpush.bf16.msra.mxu0 %v500
      %535 = vmatpush.bf16.msra.mxu0 %v499
      %536 = vmatpush.bf16.msra.mxu0 %v498
      %537 = vmatpush.bf16.msra.mxu0 %v497
      %538 = vmatmul.bf16.gmra.mxu0 %v507
      %v539 = vpop.f32.mrf.mxu0
      %v540 = vadd.f32 %v479, %v539
      %v541 = vpop.f32.mrf.mxu0
      %v542 = vadd.f32 %v479, %v541
      %543 = vmatmul.bf16.gmra.mxu0 %v510
      %v544 = vpop.f32.mrf.mxu0
      %v545 = vadd.f32 %v479, %v544
      %v546 = vpop.f32.mrf.mxu0
      %v547 = vadd.f32 %v479, %v546
      %548 = vmatmul.bf16.gmra.mxu0 %v513
      %v549 = vpop.f32.mrf.mxu0
      %v550 = vadd.f32 %v479, %v549
      %v551 = vpop.f32.mrf.mxu0
      %v552 = vadd.f32 %v479, %v551
      %553 = vmatmul.bf16.gmra.mxu0 %v516
      %v554 = vpop.f32.mrf.mxu0
      %v555 = vadd.f32 %v479, %v554
      %v556 = vpop.f32.mrf.mxu0
      %v557 = vadd.f32 %v479, %v556
      %558 = vmatmul.bf16.gmra.mxu0 %v519
      %v559 = vpop.f32.mrf.mxu0
      %v560 = vadd.f32 %v479, %v559
      %v561 = vpop.f32.mrf.mxu0
      %v562 = vadd.f32 %v479, %v561
      %563 = vmatmul.bf16.gmra.mxu0 %v522
      %v564 = vpop.f32.mrf.mxu0
      %v565 = vadd.f32 %v479, %v564
      %v566 = vpop.f32.mrf.mxu0
      %v567 = vadd.f32 %v479, %v566
      %568 = vmatmul.bf16.gmra.mxu0 %v525
      %v569 = vpop.f32.mrf.mxu0
      %v570 = vadd.f32 %v479, %v569
      %v571 = vpop.f32.mrf.mxu0
      %v572 = vadd.f32 %v479, %v571
      %573 = vmatmul.bf16.gmra.mxu0 %v528
      %v574 = vpop.f32.mrf.mxu0
      %v575 = vadd.f32 %v479, %v574
      %v576 = vpop.f32.mrf.mxu0
      %v577 = vadd.f32 %v479, %v576
      %578 = vdwg.mxu0
      %v579 = vmax.f32 %v540, 0.0
      %v580 = vmax.f32 %v542, 0.0
      %v581 = vmax.f32 %v545, 0.0
      %v582 = vmax.f32 %v547, 0.0
      %v583 = vmax.f32 %v550, 0.0
      %v584 = vmax.f32 %v552, 0.0
      %v585 = vmax.f32 %v555, 0.0
      %v586 = vmax.f32 %v557, 0.0
      %v587 = vmax.f32 %v560, 0.0
      %v588 = vmax.f32 %v562, 0.0
      %v589 = vmax.f32 %v565, 0.0
      %v590 = vmax.f32 %v567, 0.0
      %v591 = vmax.f32 %v570, 0.0
      %v592 = vmax.f32 %v572, 0.0
      %v593 = vmax.f32 %v575, 0.0
      %v594 = vmax.f32 %v577, 0.0
      %v595 = vpack.c.bf16 %v580, %v579
      %v596 = vpack.c.bf16 %v582, %v581
      %v597 = vpack.c.bf16 %v584, %v583
      %v598 = vpack.c.bf16 %v586, %v585
      %v599 = vpack.c.bf16 %v588, %v587
      %v600 = vpack.c.bf16 %v590, %v589
      %v601 = vpack.c.bf16 %v592, %v591
      %v602 = vpack.c.bf16 %v594, %v593
      %v603 = vld [vmem:[%s5] sm:$0xff]
      %v604 = vld [vmem:[%s5 + $0x8] sm:$0xff]
      %v605 = vld [vmem:[%s5 + $0x10] sm:$0xff]
      %v606 = vld [vmem:[%s5 + $0x18] sm:$0xff]
      %v607 = vld [vmem:[%s5 + $0x20] sm:$0xff]
      %v608 = vld [vmem:[%s5 + $0x28] sm:$0xff]
      %v609 = vld [vmem:[%s5 + $0x30] sm:$0xff]
      %v610 = vld [vmem:[%s5 + $0x38] sm:$0xff]
      %v611 = vld [vmem:[%s5 + $0x40] sm:$0xff]
      %v612 = vld [vmem:[%s5 + $0x48] sm:$0xff]
      %v613 = vld [vmem:[%s5 + $0x50] sm:$0xff]
      %v614 = vld [vmem:[%s5 + $0x58] sm:$0xff]
      %v615 = vld [vmem:[%s5 + $0x60] sm:$0xff]
      %v616 = vld [vmem:[%s5 + $0x68] sm:$0xff]
      %v617 = vld [vmem:[%s5 + $0x70] sm:$0xff]
      %v618 = vld [vmem:[%s5 + $0x78] sm:$0xff]
      %v619 = vld [vmem:[%s5 + $0x80] sm:$0xff]
      %v620 = vld [vmem:[%s5 + $0x88] sm:$0xff]
      %v621 = vld [vmem:[%s5 + $0x90] sm:$0xff]
      %v622 = vld [vmem:[%s5 + $0x98] sm:$0xff]
      %v623 = vld [vmem:[%s5 + $0xa0] sm:$0xff]
      %v624 = vld [vmem:[%s5 + $0xa8] sm:$0xff]
      %v625 = vld [vmem:[%s5 + $0xb0] sm:$0xff]
      %v626 = vld [vmem:[%s5 + $0xb8] sm:$0xff]
      %v627 = vld [vmem:[%s5 + $0xc0] sm:$0xff]
      %v628 = vld [vmem:[%s5 + $0xc8] sm:$0xff]
      %v629 = vld [vmem:[%s5 + $0xd0] sm:$0xff]
      %v630 = vld [vmem:[%s5 + $0xd8] sm:$0xff]
      %v631 = vld [vmem:[%s5 + $0xe0] sm:$0xff]
      %v632 = vld [vmem:[%s5 + $0xe8] sm:$0xff]
      %v633 = vld [vmem:[%s5 + $0xf0] sm:$0xff]
      %v634 = vld [vmem:[%s5 + $0xf8] sm:$0xff]
      %v635 = vld [vmem:[%s5 + $0x100] sm:$0xff]
      %v636 = vld [vmem:[%s5 + $0x108] sm:$0xff]
      %v637 = vld [vmem:[%s5 + $0x110] sm:$0xff]
      %v638 = vld [vmem:[%s5 + $0x118] sm:$0xff]
      %v639 = vld [vmem:[%s5 + $0x120] sm:$0xff]
      %v640 = vld [vmem:[%s5 + $0x128] sm:$0xff]
      %v641 = vld [vmem:[%s5 + $0x130] sm:$0xff]
      %v642 = vld [vmem:[%s5 + $0x138] sm:$0xff]
      %v643 = vld [vmem:[%s5 + $0x140] sm:$0xff]
      %v644 = vld [vmem:[%s5 + $0x148] sm:$0xff]
      %v645 = vld [vmem:[%s5 + $0x150] sm:$0xff]
      %v646 = vld [vmem:[%s5 + $0x158] sm:$0xff]
      %v647 = vld [vmem:[%s5 + $0x160] sm:$0xff]
      %v648 = vld [vmem:[%s5 + $0x168] sm:$0xff]
      %v649 = vld [vmem:[%s5 + $0x170] sm:$0xff]
      %v650 = vld [vmem:[%s5 + $0x178] sm:$0xff]
      %v651 = vld [vmem:[%s5 + $0x180] sm:$0xff]
      %v652 = vld [vmem:[%s5 + $0x188] sm:$0xff]
      %v653 = vld [vmem:[%s5 + $0x190] sm:$0xff]
      %v654 = vld [vmem:[%s5 + $0x198] sm:$0xff]
      %v655 = vld [vmem:[%s5 + $0x1a0] sm:$0xff]
      %v656 = vld [vmem:[%s5 + $0x1a8] sm:$0xff]
      %v657 = vld [vmem:[%s5 + $0x1b0] sm:$0xff]
      %v658 = vld [vmem:[%s5 + $0x1b8] sm:$0xff]
      %v659 = vld [vmem:[%s5 + $0x1c0] sm:$0xff]
      %v660 = vld [vmem:[%s5 + $0x1c8] sm:$0xff]
      %v661 = vld [vmem:[%s5 + $0x1d0] sm:$0xff]
      %v662 = vld [vmem:[%s5 + $0x1d8] sm:$0xff]
      %v663 = vld [vmem:[%s5 + $0x1e0] sm:$0xff]
      %v664 = vld [vmem:[%s5 + $0x1e8] sm:$0xff]
      %v665 = vld [vmem:[%s5 + $0x1f0] sm:$0xff]
      %v666 = vld [vmem:[%s5 + $0x1f8] sm:$0xff]
      %v731 = vunpack.c.l.b16 %v603
      %v732 = vunpack.c.h.b16 %v603
      %v733 = vunpack.c.l.b16 %v604
      %v734 = vunpack.c.h.b16 %v604
      %v735 = vunpack.c.l.b16 %v605
      %v736 = vunpack.c.h.b16 %v605
      %v737 = vunpack.c.l.b16 %v606
      %v738 = vunpack.c.h.b16 %v606
      %v739 = vunpack.c.l.b16 %v607
      %v740 = vunpack.c.h.b16 %v607
      %v741 = vunpack.c.l.b16 %v608
      %v742 = vunpack.c.h.b16 %v608
      %v743 = vunpack.c.l.b16 %v609
      %v744 = vunpack.c.h.b16 %v609
      %v745 = vunpack.c.l.b16 %v610
      %v746 = vunpack.c.h.b16 %v610
      %v747 = vunpack.c.l.b16 %v611
      %v748 = vunpack.c.h.b16 %v611
      %v749 = vunpack.c.l.b16 %v612
      %v750 = vunpack.c.h.b16 %v612
      %v751 = vunpack.c.l.b16 %v613
      %v752 = vunpack.c.h.b16 %v613
      %v753 = vunpack.c.l.b16 %v614
      %v754 = vunpack.c.h.b16 %v614
      %v755 = vunpack.c.l.b16 %v615
      %v756 = vunpack.c.h.b16 %v615
      %v757 = vunpack.c.l.b16 %v616
      %v758 = vunpack.c.h.b16 %v616
      %v759 = vunpack.c.l.b16 %v617
      %v760 = vunpack.c.h.b16 %v617
      %v761 = vunpack.c.l.b16 %v618
      %v762 = vunpack.c.h.b16 %v618
      %v763 = vunpack.c.l.b16 %v619
      %v764 = vunpack.c.h.b16 %v619
      %v765 = vunpack.c.l.b16 %v620
      %v766 = vunpack.c.h.b16 %v620
      %v767 = vunpack.c.l.b16 %v621
      %v768 = vunpack.c.h.b16 %v621
      %v769 = vunpack.c.l.b16 %v622
      %v770 = vunpack.c.h.b16 %v622
      %v771 = vunpack.c.l.b16 %v623
      %v772 = vunpack.c.h.b16 %v623
      %v773 = vunpack.c.l.b16 %v624
      %v774 = vunpack.c.h.b16 %v624
      %v775 = vunpack.c.l.b16 %v625
      %v776 = vunpack.c.h.b16 %v625
      %v777 = vunpack.c.l.b16 %v626
      %v778 = vunpack.c.h.b16 %v626
      %v779 = vunpack.c.l.b16 %v627
      %v780 = vunpack.c.h.b16 %v627
      %v781 = vunpack.c.l.b16 %v628
      %v782 = vunpack.c.h.b16 %v628
      %v783 = vunpack.c.l.b16 %v629
      %v784 = vunpack.c.h.b16 %v629
      %v785 = vunpack.c.l.b16 %v630
      %v786 = vunpack.c.h.b16 %v630
      %v787 = vunpack.c.l.b16 %v631
      %v788 = vunpack.c.h.b16 %v631
      %v789 = vunpack.c.l.b16 %v632
      %v790 = vunpack.c.h.b16 %v632
      %v791 = vunpack.c.l.b16 %v633
      %v792 = vunpack.c.h.b16 %v633
      %v793 = vunpack.c.l.b16 %v634
      %v794 = vunpack.c.h.b16 %v634
      %v795 = vunpack.c.l.b16 %v635
      %v796 = vunpack.c.h.b16 %v635
      %v797 = vunpack.c.l.b16 %v636
      %v798 = vunpack.c.h.b16 %v636
      %v799 = vunpack.c.l.b16 %v637
      %v800 = vunpack.c.h.b16 %v637
      %v801 = vunpack.c.l.b16 %v638
      %v802 = vunpack.c.h.b16 %v638
      %v803 = vunpack.c.l.b16 %v639
      %v804 = vunpack.c.h.b16 %v639
      %v805 = vunpack.c.l.b16 %v640
      %v806 = vunpack.c.h.b16 %v640
      %v807 = vunpack.c.l.b16 %v641
      %v808 = vunpack.c.h.b16 %v641
      %v809 = vunpack.c.l.b16 %v642
      %v810 = vunpack.c.h.b16 %v642
      %v811 = vunpack.c.l.b16 %v643
      %v812 = vunpack.c.h.b16 %v643
      %v813 = vunpack.c.l.b16 %v644
      %v814 = vunpack.c.h.b16 %v644
      %v815 = vunpack.c.l.b16 %v645
      %v816 = vunpack.c.h.b16 %v645
      %v817 = vunpack.c.l.b16 %v646
      %v818 = vunpack.c.h.b16 %v646
      %v819 = vunpack.c.l.b16 %v647
      %v820 = vunpack.c.h.b16 %v647
      %v821 = vunpack.c.l.b16 %v648
      %v822 = vunpack.c.h.b16 %v648
      %v823 = vunpack.c.l.b16 %v649
      %v824 = vunpack.c.h.b16 %v649
      %v825 = vunpack.c.l.b16 %v650
      %v826 = vunpack.c.h.b16 %v650
      %v827 = vunpack.c.l.b16 %v651
      %v828 = vunpack.c.h.b16 %v651
      %v829 = vunpack.c.l.b16 %v652
      %v830 = vunpack.c.h.b16 %v652
      %v831 = vunpack.c.l.b16 %v653
      %v832 = vunpack.c.h.b16 %v653
      %v833 = vunpack.c.l.b16 %v654
      %v834 = vunpack.c.h.b16 %v654
      %v835 = vunpack.c.l.b16 %v655
      %v836 = vunpack.c.h.b16 %v655
      %v837 = vunpack.c.l.b16 %v656
      %v838 = vunpack.c.h.b16 %v656
      %v839 = vunpack.c.l.b16 %v657
      %v840 = vunpack.c.h.b16 %v657
      %v841 = vunpack.c.l.b16 %v658
      %v842 = vunpack.c.h.b16 %v658
      %v843 = vunpack.c.l.b16 %v659
      %v844 = vunpack.c.h.b16 %v659
      %v845 = vunpack.c.l.b16 %v660
      %v846 = vunpack.c.h.b16 %v660
      %v847 = vunpack.c.l.b16 %v661
      %v848 = vunpack.c.h.b16 %v661
      %v849 = vunpack.c.l.b16 %v662
      %v850 = vunpack.c.h.b16 %v662
      %v851 = vunpack.c.l.b16 %v663
      %v852 = vunpack.c.h.b16 %v663
      %v853 = vunpack.c.l.b16 %v664
      %v854 = vunpack.c.h.b16 %v664
      %v855 = vunpack.c.l.b16 %v665
      %v856 = vunpack.c.h.b16 %v665
      %v857 = vunpack.c.l.b16 %v666
      %v858 = vunpack.c.h.b16 %v666
      %v859 = vpack.c.b16 %v739, %v731
      %v860 = vpack.c.b16 %v740, %v732
      %v861 = vpack.c.b16 %v741, %v733
      %v862 = vpack.c.b16 %v742, %v734
      %v863 = vpack.c.b16 %v743, %v735
      %v864 = vpack.c.b16 %v744, %v736
      %v865 = vpack.c.b16 %v745, %v737
      %v866 = vpack.c.b16 %v746, %v738
      %v867 = vpack.c.b16 %v755, %v747
      %v868 = vpack.c.b16 %v756, %v748
      %v869 = vpack.c.b16 %v757, %v749
      %v870 = vpack.c.b16 %v758, %v750
      %v871 = vpack.c.b16 %v759, %v751
      %v872 = vpack.c.b16 %v760, %v752
      %v873 = vpack.c.b16 %v761, %v753
      %v874 = vpack.c.b16 %v762, %v754
      %v875 = vpack.c.b16 %v771, %v763
      %v876 = vpack.c.b16 %v772, %v764
      %v877 = vpack.c.b16 %v773, %v765
      %v878 = vpack.c.b16 %v774, %v766
      %v879 = vpack.c.b16 %v775, %v767
      %v880 = vpack.c.b16 %v776, %v768
      %v881 = vpack.c.b16 %v777, %v769
      %v882 = vpack.c.b16 %v778, %v770
      %v883 = vpack.c.b16 %v787, %v779
      %v884 = vpack.c.b16 %v788, %v780
      %v885 = vpack.c.b16 %v789, %v781
      %v886 = vpack.c.b16 %v790, %v782
      %v887 = vpack.c.b16 %v791, %v783
      %v888 = vpack.c.b16 %v792, %v784
      %v889 = vpack.c.b16 %v793, %v785
      %v890 = vpack.c.b16 %v794, %v786
      %v891 = vpack.c.b16 %v803, %v795
      %v892 = vpack.c.b16 %v804, %v796
      %v893 = vpack.c.b16 %v805, %v797
      %v894 = vpack.c.b16 %v806, %v798
      %v895 = vpack.c.b16 %v807, %v799
      %v896 = vpack.c.b16 %v808, %v800
      %v897 = vpack.c.b16 %v809, %v801
      %v898 = vpack.c.b16 %v810, %v802
      %v899 = vpack.c.b16 %v819, %v811
      %v900 = vpack.c.b16 %v820, %v812
      %v901 = vpack.c.b16 %v821, %v813
      %v902 = vpack.c.b16 %v822, %v814
      %v903 = vpack.c.b16 %v823, %v815
      %v904 = vpack.c.b16 %v824, %v816
      %v905 = vpack.c.b16 %v825, %v817
      %v906 = vpack.c.b16 %v826, %v818
      %v907 = vpack.c.b16 %v835, %v827
      %v908 = vpack.c.b16 %v836, %v828
      %v909 = vpack.c.b16 %v837, %v829
      %v910 = vpack.c.b16 %v838, %v830
      %v911 = vpack.c.b16 %v839, %v831
      %v912 = vpack.c.b16 %v840, %v832
      %v913 = vpack.c.b16 %v841, %v833
      %v914 = vpack.c.b16 %v842, %v834
      %v915 = vpack.c.b16 %v851, %v843
      %v916 = vpack.c.b16 %v852, %v844
      %v917 = vpack.c.b16 %v853, %v845
      %v918 = vpack.c.b16 %v854, %v846
      %v919 = vpack.c.b16 %v855, %v847
      %v920 = vpack.c.b16 %v856, %v848
      %v921 = vpack.c.b16 %v857, %v849
      %v922 = vpack.c.b16 %v858, %v850
      %987 = vmatpush.bf16.msra.mxu0 %v915
      %988 = vmatpush.bf16.msra.mxu0 %v907
      %989 = vmatpush.bf16.msra.mxu0 %v899
      %990 = vmatpush.bf16.msra.mxu0 %v891
      %991 = vmatpush.bf16.msra.mxu0 %v883
      %992 = vmatpush.bf16.msra.mxu0 %v875
      %993 = vmatpush.bf16.msra.mxu0 %v867
      %994 = vmatpush.bf16.msra.mxu0 %v859
      %995 = vmatmul.bf16.gmra.mxu0 %v595
      %v996 = vpop.f32.mrf.mxu0
      %v997 = vadd.f32 0.0, %v996
      %v998 = vpop.f32.mrf.mxu0
      %v999 = vadd.f32 0.0, %v998
      %1000 = vmatmul.bf16.gmra.mxu0 %v596
      %v1001 = vpop.f32.mrf.mxu0
      %v1002 = vadd.f32 0.0, %v1001
      %v1003 = vpop.f32.mrf.mxu0
      %v1004 = vadd.f32 0.0, %v1003
      %1005 = vmatmul.bf16.gmra.mxu0 %v597
      %v1006 = vpop.f32.mrf.mxu0
      %v1007 = vadd.f32 0.0, %v1006
      %v1008 = vpop.f32.mrf.mxu0
      %v1009 = vadd.f32 0.0, %v1008
      %1010 = vmatmul.bf16.gmra.mxu0 %v598
      %v1011 = vpop.f32.mrf.mxu0
      %v1012 = vadd.f32 0.0, %v1011
      %v1013 = vpop.f32.mrf.mxu0
      %v1014 = vadd.f32 0.0, %v1013
      %1015 = vmatmul.bf16.gmra.mxu0 %v599
      %v1016 = vpop.f32.mrf.mxu0
      %v1017 = vadd.f32 0.0, %v1016
      %v1018 = vpop.f32.mrf.mxu0
      %v1019 = vadd.f32 0.0, %v1018
      %1020 = vmatmul.bf16.gmra.mxu0 %v600
      %v1021 = vpop.f32.mrf.mxu0
      %v1022 = vadd.f32 0.0, %v1021
      %v1023 = vpop.f32.mrf.mxu0
      %v1024 = vadd.f32 0.0, %v1023
      %1025 = vmatmul.bf16.gmra.mxu0 %v601
      %v1026 = vpop.f32.mrf.mxu0
      %v1027 = vadd.f32 0.0, %v1026
      %v1028 = vpop.f32.mrf.mxu0
      %v1029 = vadd.f32 0.0, %v1028
      %1030 = vmatmul.bf16.gmra.mxu0 %v602
      %v1031 = vpop.f32.mrf.mxu0
      %v1032 = vadd.f32 0.0, %v1031
      %v1033 = vpop.f32.mrf.mxu0
      %v1034 = vadd.f32 0.0, %v1033
      %1035 = vdwg.mxu0
      %1036 = vmatpush.bf16.msra.mxu0 %v916
      %1037 = vmatpush.bf16.msra.mxu0 %v908
      %1038 = vmatpush.bf16.msra.mxu0 %v900
      %1039 = vmatpush.bf16.msra.mxu0 %v892
      %1040 = vmatpush.bf16.msra.mxu0 %v884
      %1041 = vmatpush.bf16.msra.mxu0 %v876
      %1042 = vmatpush.bf16.msra.mxu0 %v868
      %1043 = vmatpush.bf16.msra.mxu0 %v860
      %1044 = vmatmul.bf16.gmra.mxu0 %v595
      %v1045 = vpop.f32.mrf.mxu0
      %v1046 = vadd.f32 0.0, %v1045
      %v1047 = vpop.f32.mrf.mxu0
      %v1048 = vadd.f32 0.0, %v1047
      %1049 = vmatmul.bf16.gmra.mxu0 %v596
      %v1050 = vpop.f32.mrf.mxu0
      %v1051 = vadd.f32 0.0, %v1050
      %v1052 = vpop.f32.mrf.mxu0
      %v1053 = vadd.f32 0.0, %v1052
      %1054 = vmatmul.bf16.gmra.mxu0 %v597
      %v1055 = vpop.f32.mrf.mxu0
      %v1056 = vadd.f32 0.0, %v1055
      %v1057 = vpop.f32.mrf.mxu0
      %v1058 = vadd.f32 0.0, %v1057
      %1059 = vmatmul.bf16.gmra.mxu0 %v598
      %v1060 = vpop.f32.mrf.mxu0
      %v1061 = vadd.f32 0.0, %v1060
      %v1062 = vpop.f32.mrf.mxu0
      %v1063 = vadd.f32 0.0, %v1062
      %1064 = vmatmul.bf16.gmra.mxu0 %v599
      %v1065 = vpop.f32.mrf.mxu0
      %v1066 = vadd.f32 0.0, %v1065
      %v1067 = vpop.f32.mrf.mxu0
      %v1068 = vadd.f32 0.0, %v1067
      %1069 = vmatmul.bf16.gmra.mxu0 %v600
      %v1070 = vpop.f32.mrf.mxu0
      %v1071 = vadd.f32 0.0, %v1070
      %v1072 = vpop.f32.mrf.mxu0
      %v1073 = vadd.f32 0.0, %v1072
      %1074 = vmatmul.bf16.gmra.mxu0 %v601
      %v1075 = vpop.f32.mrf.mxu0
      %v1076 = vadd.f32 0.0, %v1075
      %v1077 = vpop.f32.mrf.mxu0
      %v1078 = vadd.f32 0.0, %v1077
      %1079 = vmatmul.bf16.gmra.mxu0 %v602
      %v1080 = vpop.f32.mrf.mxu0
      %v1081 = vadd.f32 0.0, %v1080
      %v1082 = vpop.f32.mrf.mxu0
      %v1083 = vadd.f32 0.0, %v1082
      %1084 = vdwg.mxu0
      %1085 = vmatpush.bf16.msra.mxu0 %v917
      %1086 = vmatpush.bf16.msra.mxu0 %v909
      %1087 = vmatpush.bf16.msra.mxu0 %v901
      %1088 = vmatpush.bf16.msra.mxu0 %v893
      %1089 = vmatpush.bf16.msra.mxu0 %v885
      %1090 = vmatpush.bf16.msra.mxu0 %v877
      %1091 = vmatpush.bf16.msra.mxu0 %v869
      %1092 = vmatpush.bf16.msra.mxu0 %v861
      %1093 = vmatmul.bf16.gmra.mxu0 %v595
      %v1094 = vpop.f32.mrf.mxu0
      %v1095 = vadd.f32 0.0, %v1094
      %v1096 = vpop.f32.mrf.mxu0
      %v1097 = vadd.f32 0.0, %v1096
      %1098 = vmatmul.bf16.gmra.mxu0 %v596
      %v1099 = vpop.f32.mrf.mxu0
      %v1100 = vadd.f32 0.0, %v1099
      %v1101 = vpop.f32.mrf.mxu0
      %v1102 = vadd.f32 0.0, %v1101
      %1103 = vmatmul.bf16.gmra.mxu0 %v597
      %v1104 = vpop.f32.mrf.mxu0
      %v1105 = vadd.f32 0.0, %v1104
      %v1106 = vpop.f32.mrf.mxu0
      %v1107 = vadd.f32 0.0, %v1106
      %1108 = vmatmul.bf16.gmra.mxu0 %v598
      %v1109 = vpop.f32.mrf.mxu0
      %v1110 = vadd.f32 0.0, %v1109
      %v1111 = vpop.f32.mrf.mxu0
      %v1112 = vadd.f32 0.0, %v1111
      %1113 = vmatmul.bf16.gmra.mxu0 %v599
      %v1114 = vpop.f32.mrf.mxu0
      %v1115 = vadd.f32 0.0, %v1114
      %v1116 = vpop.f32.mrf.mxu0
      %v1117 = vadd.f32 0.0, %v1116
      %1118 = vmatmul.bf16.gmra.mxu0 %v600
      %v1119 = vpop.f32.mrf.mxu0
      %v1120 = vadd.f32 0.0, %v1119
      %v1121 = vpop.f32.mrf.mxu0
      %v1122 = vadd.f32 0.0, %v1121
      %1123 = vmatmul.bf16.gmra.mxu0 %v601
      %v1124 = vpop.f32.mrf.mxu0
      %v1125 = vadd.f32 0.0, %v1124
      %v1126 = vpop.f32.mrf.mxu0
      %v1127 = vadd.f32 0.0, %v1126
      %1128 = vmatmul.bf16.gmra.mxu0 %v602
      %v1129 = vpop.f32.mrf.mxu0
      %v1130 = vadd.f32 0.0, %v1129
      %v1131 = vpop.f32.mrf.mxu0
      %v1132 = vadd.f32 0.0, %v1131
      %1133 = vdwg.mxu0
      %1134 = vmatpush.bf16.msra.mxu0 %v918
      %1135 = vmatpush.bf16.msra.mxu0 %v910
      %1136 = vmatpush.bf16.msra.mxu0 %v902
      %1137 = vmatpush.bf16.msra.mxu0 %v894
      %1138 = vmatpush.bf16.msra.mxu0 %v886
      %1139 = vmatpush.bf16.msra.mxu0 %v878
      %1140 = vmatpush.bf16.msra.mxu0 %v870
      %1141 = vmatpush.bf16.msra.mxu0 %v862
      %1142 = vmatmul.bf16.gmra.mxu0 %v595
      %v1143 = vpop.f32.mrf.mxu0
      %v1144 = vadd.f32 0.0, %v1143
      %v1145 = vpop.f32.mrf.mxu0
      %v1146 = vadd.f32 0.0, %v1145
      %1147 = vmatmul.bf16.gmra.mxu0 %v596
      %v1148 = vpop.f32.mrf.mxu0
      %v1149 = vadd.f32 0.0, %v1148
      %v1150 = vpop.f32.mrf.mxu0
      %v1151 = vadd.f32 0.0, %v1150
      %1152 = vmatmul.bf16.gmra.mxu0 %v597
      %v1153 = vpop.f32.mrf.mxu0
      %v1154 = vadd.f32 0.0, %v1153
      %v1155 = vpop.f32.mrf.mxu0
      %v1156 = vadd.f32 0.0, %v1155
      %1157 = vmatmul.bf16.gmra.mxu0 %v598
      %v1158 = vpop.f32.mrf.mxu0
      %v1159 = vadd.f32 0.0, %v1158
      %v1160 = vpop.f32.mrf.mxu0
      %v1161 = vadd.f32 0.0, %v1160
      %1162 = vmatmul.bf16.gmra.mxu0 %v599
      %v1163 = vpop.f32.mrf.mxu0
      %v1164 = vadd.f32 0.0, %v1163
      %v1165 = vpop.f32.mrf.mxu0
      %v1166 = vadd.f32 0.0, %v1165
      %1167 = vmatmul.bf16.gmra.mxu0 %v600
      %v1168 = vpop.f32.mrf.mxu0
      %v1169 = vadd.f32 0.0, %v1168
      %v1170 = vpop.f32.mrf.mxu0
      %v1171 = vadd.f32 0.0, %v1170
      %1172 = vmatmul.bf16.gmra.mxu0 %v601
      %v1173 = vpop.f32.mrf.mxu0
      %v1174 = vadd.f32 0.0, %v1173
      %v1175 = vpop.f32.mrf.mxu0
      %v1176 = vadd.f32 0.0, %v1175
      %1177 = vmatmul.bf16.gmra.mxu0 %v602
      %v1178 = vpop.f32.mrf.mxu0
      %v1179 = vadd.f32 0.0, %v1178
      %v1180 = vpop.f32.mrf.mxu0
      %v1181 = vadd.f32 0.0, %v1180
      %1182 = vdwg.mxu0
      %1183 = vmatpush.bf16.msra.mxu0 %v919
      %1184 = vmatpush.bf16.msra.mxu0 %v911
      %1185 = vmatpush.bf16.msra.mxu0 %v903
      %1186 = vmatpush.bf16.msra.mxu0 %v895
      %1187 = vmatpush.bf16.msra.mxu0 %v887
      %1188 = vmatpush.bf16.msra.mxu0 %v879
      %1189 = vmatpush.bf16.msra.mxu0 %v871
      %1190 = vmatpush.bf16.msra.mxu0 %v863
      %1191 = vmatmul.bf16.gmra.mxu0 %v595
      %v1192 = vpop.f32.mrf.mxu0
      %v1193 = vadd.f32 0.0, %v1192
      %v1194 = vpop.f32.mrf.mxu0
      %v1195 = vadd.f32 0.0, %v1194
      %1196 = vmatmul.bf16.gmra.mxu0 %v596
      %v1197 = vpop.f32.mrf.mxu0
      %v1198 = vadd.f32 0.0, %v1197
      %v1199 = vpop.f32.mrf.mxu0
      %v1200 = vadd.f32 0.0, %v1199
      %1201 = vmatmul.bf16.gmra.mxu0 %v597
      %v1202 = vpop.f32.mrf.mxu0
      %v1203 = vadd.f32 0.0, %v1202
      %v1204 = vpop.f32.mrf.mxu0
      %v1205 = vadd.f32 0.0, %v1204
      %1206 = vmatmul.bf16.gmra.mxu0 %v598
      %v1207 = vpop.f32.mrf.mxu0
      %v1208 = vadd.f32 0.0, %v1207
      %v1209 = vpop.f32.mrf.mxu0
      %v1210 = vadd.f32 0.0, %v1209
      %1211 = vmatmul.bf16.gmra.mxu0 %v599
      %v1212 = vpop.f32.mrf.mxu0
      %v1213 = vadd.f32 0.0, %v1212
      %v1214 = vpop.f32.mrf.mxu0
      %v1215 = vadd.f32 0.0, %v1214
      %1216 = vmatmul.bf16.gmra.mxu0 %v600
      %v1217 = vpop.f32.mrf.mxu0
      %v1218 = vadd.f32 0.0, %v1217
      %v1219 = vpop.f32.mrf.mxu0
      %v1220 = vadd.f32 0.0, %v1219
      %1221 = vmatmul.bf16.gmra.mxu0 %v601
      %v1222 = vpop.f32.mrf.mxu0
      %v1223 = vadd.f32 0.0, %v1222
      %v1224 = vpop.f32.mrf.mxu0
      %v1225 = vadd.f32 0.0, %v1224
      %1226 = vmatmul.bf16.gmra.mxu0 %v602
      %v1227 = vpop.f32.mrf.mxu0
      %v1228 = vadd.f32 0.0, %v1227
      %v1229 = vpop.f32.mrf.mxu0
      %v1230 = vadd.f32 0.0, %v1229
      %1231 = vdwg.mxu0
      %1232 = vmatpush.bf16.msra.mxu0 %v920
      %1233 = vmatpush.bf16.msra.mxu0 %v912
      %1234 = vmatpush.bf16.msra.mxu0 %v904
      %1235 = vmatpush.bf16.msra.mxu0 %v896
      %1236 = vmatpush.bf16.msra.mxu0 %v888
      %1237 = vmatpush.bf16.msra.mxu0 %v880
      %1238 = vmatpush.bf16.msra.mxu0 %v872
      %1239 = vmatpush.bf16.msra.mxu0 %v864
      %1240 = vmatmul.bf16.gmra.mxu0 %v595
      %v1241 = vpop.f32.mrf.mxu0
      %v1242 = vadd.f32 0.0, %v1241
      %v1243 = vpop.f32.mrf.mxu0
      %v1244 = vadd.f32 0.0, %v1243
      %1245 = vmatmul.bf16.gmra.mxu0 %v596
      %v1246 = vpop.f32.mrf.mxu0
      %v1247 = vadd.f32 0.0, %v1246
      %v1248 = vpop.f32.mrf.mxu0
      %v1249 = vadd.f32 0.0, %v1248
      %1250 = vmatmul.bf16.gmra.mxu0 %v597
      %v1251 = vpop.f32.mrf.mxu0
      %v1252 = vadd.f32 0.0, %v1251
      %v1253 = vpop.f32.mrf.mxu0
      %v1254 = vadd.f32 0.0, %v1253
      %1255 = vmatmul.bf16.gmra.mxu0 %v598
      %v1256 = vpop.f32.mrf.mxu0
      %v1257 = vadd.f32 0.0, %v1256
      %v1258 = vpop.f32.mrf.mxu0
      %v1259 = vadd.f32 0.0, %v1258
      %1260 = vmatmul.bf16.gmra.mxu0 %v599
      %v1261 = vpop.f32.mrf.mxu0
      %v1262 = vadd.f32 0.0, %v1261
      %v1263 = vpop.f32.mrf.mxu0
      %v1264 = vadd.f32 0.0, %v1263
      %1265 = vmatmul.bf16.gmra.mxu0 %v600
      %v1266 = vpop.f32.mrf.mxu0
      %v1267 = vadd.f32 0.0, %v1266
      %v1268 = vpop.f32.mrf.mxu0
      %v1269 = vadd.f32 0.0, %v1268
      %1270 = vmatmul.bf16.gmra.mxu0 %v601
      %v1271 = vpop.f32.mrf.mxu0
      %v1272 = vadd.f32 0.0, %v1271
      %v1273 = vpop.f32.mrf.mxu0
      %v1274 = vadd.f32 0.0, %v1273
      %1275 = vmatmul.bf16.gmra.mxu0 %v602
      %v1276 = vpop.f32.mrf.mxu0
      %v1277 = vadd.f32 0.0, %v1276
      %v1278 = vpop.f32.mrf.mxu0
      %v1279 = vadd.f32 0.0, %v1278
      %1280 = vdwg.mxu0
      %1281 = vmatpush.bf16.msra.mxu0 %v921
      %1282 = vmatpush.bf16.msra.mxu0 %v913
      %1283 = vmatpush.bf16.msra.mxu0 %v905
      %1284 = vmatpush.bf16.msra.mxu0 %v897
      %1285 = vmatpush.bf16.msra.mxu0 %v889
      %1286 = vmatpush.bf16.msra.mxu0 %v881
      %1287 = vmatpush.bf16.msra.mxu0 %v873
      %1288 = vmatpush.bf16.msra.mxu0 %v865
      %1289 = vmatmul.bf16.gmra.mxu0 %v595
      %v1290 = vpop.f32.mrf.mxu0
      %v1291 = vadd.f32 0.0, %v1290
      %v1292 = vpop.f32.mrf.mxu0
      %v1293 = vadd.f32 0.0, %v1292
      %1294 = vmatmul.bf16.gmra.mxu0 %v596
      %v1295 = vpop.f32.mrf.mxu0
      %v1296 = vadd.f32 0.0, %v1295
      %v1297 = vpop.f32.mrf.mxu0
      %v1298 = vadd.f32 0.0, %v1297
      %1299 = vmatmul.bf16.gmra.mxu0 %v597
      %v1300 = vpop.f32.mrf.mxu0
      %v1301 = vadd.f32 0.0, %v1300
      %v1302 = vpop.f32.mrf.mxu0
      %v1303 = vadd.f32 0.0, %v1302
      %1304 = vmatmul.bf16.gmra.mxu0 %v598
      %v1305 = vpop.f32.mrf.mxu0
      %v1306 = vadd.f32 0.0, %v1305
      %v1307 = vpop.f32.mrf.mxu0
      %v1308 = vadd.f32 0.0, %v1307
      %1309 = vmatmul.bf16.gmra.mxu0 %v599
      %v1310 = vpop.f32.mrf.mxu0
      %v1311 = vadd.f32 0.0, %v1310
      %v1312 = vpop.f32.mrf.mxu0
      %v1313 = vadd.f32 0.0, %v1312
      %1314 = vmatmul.bf16.gmra.mxu0 %v600
      %v1315 = vpop.f32.mrf.mxu0
      %v1316 = vadd.f32 0.0, %v1315
      %v1317 = vpop.f32.mrf.mxu0
      %v1318 = vadd.f32 0.0, %v1317
      %1319 = vmatmul.bf16.gmra.mxu0 %v601
      %v1320 = vpop.f32.mrf.mxu0
      %v1321 = vadd.f32 0.0, %v1320
      %v1322 = vpop.f32.mrf.mxu0
      %v1323 = vadd.f32 0.0, %v1322
      %1324 = vmatmul.bf16.gmra.mxu0 %v602
      %v1325 = vpop.f32.mrf.mxu0
      %v1326 = vadd.f32 0.0, %v1325
      %v1327 = vpop.f32.mrf.mxu0
      %v1328 = vadd.f32 0.0, %v1327
      %1329 = vdwg.mxu0
      %1330 = vmatpush.bf16.msra.mxu0 %v922
      %1331 = vmatpush.bf16.msra.mxu0 %v914
      %1332 = vmatpush.bf16.msra.mxu0 %v906
      %1333 = vmatpush.bf16.msra.mxu0 %v898
      %1334 = vmatpush.bf16.msra.mxu0 %v890
      %1335 = vmatpush.bf16.msra.mxu0 %v882
      %1336 = vmatpush.bf16.msra.mxu0 %v874
      %1337 = vmatpush.bf16.msra.mxu0 %v866
      %1338 = vmatmul.bf16.gmra.mxu0 %v595
      %v1339 = vpop.f32.mrf.mxu0
      %v1340 = vadd.f32 0.0, %v1339
      %v1341 = vpop.f32.mrf.mxu0
      %v1342 = vadd.f32 0.0, %v1341
      %1343 = vmatmul.bf16.gmra.mxu0 %v596
      %v1344 = vpop.f32.mrf.mxu0
      %v1345 = vadd.f32 0.0, %v1344
      %v1346 = vpop.f32.mrf.mxu0
      %v1347 = vadd.f32 0.0, %v1346
      %1348 = vmatmul.bf16.gmra.mxu0 %v597
      %v1349 = vpop.f32.mrf.mxu0
      %v1350 = vadd.f32 0.0, %v1349
      %v1351 = vpop.f32.mrf.mxu0
      %v1352 = vadd.f32 0.0, %v1351
      %1353 = vmatmul.bf16.gmra.mxu0 %v598
      %v1354 = vpop.f32.mrf.mxu0
      %v1355 = vadd.f32 0.0, %v1354
      %v1356 = vpop.f32.mrf.mxu0
      %v1357 = vadd.f32 0.0, %v1356
      %1358 = vmatmul.bf16.gmra.mxu0 %v599
      %v1359 = vpop.f32.mrf.mxu0
      %v1360 = vadd.f32 0.0, %v1359
      %v1361 = vpop.f32.mrf.mxu0
      %v1362 = vadd.f32 0.0, %v1361
      %1363 = vmatmul.bf16.gmra.mxu0 %v600
      %v1364 = vpop.f32.mrf.mxu0
      %v1365 = vadd.f32 0.0, %v1364
      %v1366 = vpop.f32.mrf.mxu0
      %v1367 = vadd.f32 0.0, %v1366
      %1368 = vmatmul.bf16.gmra.mxu0 %v601
      %v1369 = vpop.f32.mrf.mxu0
      %v1370 = vadd.f32 0.0, %v1369
      %v1371 = vpop.f32.mrf.mxu0
      %v1372 = vadd.f32 0.0, %v1371
      %1373 = vmatmul.bf16.gmra.mxu0 %v602
      %v1374 = vpop.f32.mrf.mxu0
      %v1375 = vadd.f32 0.0, %v1374
      %v1376 = vpop.f32.mrf.mxu0
      %v1377 = vadd.f32 0.0, %v1376
      %1378 = vdwg.mxu0
      %v1379 = vmax.f32 %v997, %v999
      %v1380 = vmax.f32 %v1379, %v1002
      %v1381 = vmax.f32 %v1380, %v1004
      %v1382 = vmax.f32 %v1381, %v1007
      %v1383 = vmax.f32 %v1382, %v1009
      %v1384 = vmax.f32 %v1383, %v1012
      %v1385 = vmax.f32 %v1384, %v1014
      %v1386 = vmax.f32 %v1385, %v1017
      %v1387 = vmax.f32 %v1386, %v1019
      %v1388 = vmax.f32 %v1387, %v1022
      %v1389 = vmax.f32 %v1388, %v1024
      %v1390 = vmax.f32 %v1389, %v1027
      %v1391 = vmax.f32 %v1390, %v1029
      %v1392 = vmax.f32 %v1391, %v1032
      %v1393 = vmax.f32 %v1392, %v1034
      %v1394 = vrot.slane %v1393, 4
      %v1395 = vmax.f32 %v1393, %v1394
      %v1396 = vrot.slane %v1395, 2
      %v1397 = vmax.f32 %v1395, %v1396
      %v1398 = vrot.slane %v1397, 1
      %v1399 = vmax.f32 %v1397, %v1398
      %v1400 = vmax.f32 %v1046, %v1048
      %v1401 = vmax.f32 %v1400, %v1051
      %v1402 = vmax.f32 %v1401, %v1053
      %v1403 = vmax.f32 %v1402, %v1056
      %v1404 = vmax.f32 %v1403, %v1058
      %v1405 = vmax.f32 %v1404, %v1061
      %v1406 = vmax.f32 %v1405, %v1063
      %v1407 = vmax.f32 %v1406, %v1066
      %v1408 = vmax.f32 %v1407, %v1068
      %v1409 = vmax.f32 %v1408, %v1071
      %v1410 = vmax.f32 %v1409, %v1073
      %v1411 = vmax.f32 %v1410, %v1076
      %v1412 = vmax.f32 %v1411, %v1078
      %v1413 = vmax.f32 %v1412, %v1081
      %v1414 = vmax.f32 %v1413, %v1083
      %v1415 = vrot.slane %v1414, 4
      %v1416 = vmax.f32 %v1414, %v1415
      %v1417 = vrot.slane %v1416, 2
      %v1418 = vmax.f32 %v1416, %v1417
      %v1419 = vrot.slane %v1418, 1
      %v1420 = vmax.f32 %v1418, %v1419
      %v1421 = vmax.f32 %v1095, %v1097
      %v1422 = vmax.f32 %v1421, %v1100
      %v1423 = vmax.f32 %v1422, %v1102
      %v1424 = vmax.f32 %v1423, %v1105
      %v1425 = vmax.f32 %v1424, %v1107
      %v1426 = vmax.f32 %v1425, %v1110
      %v1427 = vmax.f32 %v1426, %v1112
      %v1428 = vmax.f32 %v1427, %v1115
      %v1429 = vmax.f32 %v1428, %v1117
      %v1430 = vmax.f32 %v1429, %v1120
      %v1431 = vmax.f32 %v1430, %v1122
      %v1432 = vmax.f32 %v1431, %v1125
      %v1433 = vmax.f32 %v1432, %v1127
      %v1434 = vmax.f32 %v1433, %v1130
      %v1435 = vmax.f32 %v1434, %v1132
      %v1436 = vrot.slane %v1435, 4
      %v1437 = vmax.f32 %v1435, %v1436
      %v1438 = vrot.slane %v1437, 2
      %v1439 = vmax.f32 %v1437, %v1438
      %v1440 = vrot.slane %v1439, 1
      %v1441 = vmax.f32 %v1439, %v1440
      %v1442 = vmax.f32 %v1144, %v1146
      %v1443 = vmax.f32 %v1442, %v1149
      %v1444 = vmax.f32 %v1443, %v1151
      %v1445 = vmax.f32 %v1444, %v1154
      %v1446 = vmax.f32 %v1445, %v1156
      %v1447 = vmax.f32 %v1446, %v1159
      %v1448 = vmax.f32 %v1447, %v1161
      %v1449 = vmax.f32 %v1448, %v1164
      %v1450 = vmax.f32 %v1449, %v1166
      %v1451 = vmax.f32 %v1450, %v1169
      %v1452 = vmax.f32 %v1451, %v1171
      %v1453 = vmax.f32 %v1452, %v1174
      %v1454 = vmax.f32 %v1453, %v1176
      %v1455 = vmax.f32 %v1454, %v1179
      %v1456 = vmax.f32 %v1455, %v1181
      %v1457 = vrot.slane %v1456, 4
      %v1458 = vmax.f32 %v1456, %v1457
      %v1459 = vrot.slane %v1458, 2
      %v1460 = vmax.f32 %v1458, %v1459
      %v1461 = vrot.slane %v1460, 1
      %v1462 = vmax.f32 %v1460, %v1461
      %v1463 = vmax.f32 %v1193, %v1195
      %v1464 = vmax.f32 %v1463, %v1198
      %v1465 = vmax.f32 %v1464, %v1200
      %v1466 = vmax.f32 %v1465, %v1203
      %v1467 = vmax.f32 %v1466, %v1205
      %v1468 = vmax.f32 %v1467, %v1208
      %v1469 = vmax.f32 %v1468, %v1210
      %v1470 = vmax.f32 %v1469, %v1213
      %v1471 = vmax.f32 %v1470, %v1215
      %v1472 = vmax.f32 %v1471, %v1218
      %v1473 = vmax.f32 %v1472, %v1220
      %v1474 = vmax.f32 %v1473, %v1223
      %v1475 = vmax.f32 %v1474, %v1225
      %v1476 = vmax.f32 %v1475, %v1228
      %v1477 = vmax.f32 %v1476, %v1230
      %v1478 = vrot.slane %v1477, 4
      %v1479 = vmax.f32 %v1477, %v1478
      %v1480 = vrot.slane %v1479, 2
      %v1481 = vmax.f32 %v1479, %v1480
      %v1482 = vrot.slane %v1481, 1
      %v1483 = vmax.f32 %v1481, %v1482
      %v1484 = vmax.f32 %v1242, %v1244
      %v1485 = vmax.f32 %v1484, %v1247
      %v1486 = vmax.f32 %v1485, %v1249
      %v1487 = vmax.f32 %v1486, %v1252
      %v1488 = vmax.f32 %v1487, %v1254
      %v1489 = vmax.f32 %v1488, %v1257
      %v1490 = vmax.f32 %v1489, %v1259
      %v1491 = vmax.f32 %v1490, %v1262
      %v1492 = vmax.f32 %v1491, %v1264
      %v1493 = vmax.f32 %v1492, %v1267
      %v1494 = vmax.f32 %v1493, %v1269
      %v1495 = vmax.f32 %v1494, %v1272
      %v1496 = vmax.f32 %v1495, %v1274
      %v1497 = vmax.f32 %v1496, %v1277
      %v1498 = vmax.f32 %v1497, %v1279
      %v1499 = vrot.slane %v1498, 4
      %v1500 = vmax.f32 %v1498, %v1499
      %v1501 = vrot.slane %v1500, 2
      %v1502 = vmax.f32 %v1500, %v1501
      %v1503 = vrot.slane %v1502, 1
      %v1504 = vmax.f32 %v1502, %v1503
      %v1505 = vmax.f32 %v1291, %v1293
      %v1506 = vmax.f32 %v1505, %v1296
      %v1507 = vmax.f32 %v1506, %v1298
      %v1508 = vmax.f32 %v1507, %v1301
      %v1509 = vmax.f32 %v1508, %v1303
      %v1510 = vmax.f32 %v1509, %v1306
      %v1511 = vmax.f32 %v1510, %v1308
      %v1512 = vmax.f32 %v1511, %v1311
      %v1513 = vmax.f32 %v1512, %v1313
      %v1514 = vmax.f32 %v1513, %v1316
      %v1515 = vmax.f32 %v1514, %v1318
      %v1516 = vmax.f32 %v1515, %v1321
      %v1517 = vmax.f32 %v1516, %v1323
      %v1518 = vmax.f32 %v1517, %v1326
      %v1519 = vmax.f32 %v1518, %v1328
      %v1520 = vrot.slane %v1519, 4
      %v1521 = vmax.f32 %v1519, %v1520
      %v1522 = vrot.slane %v1521, 2
      %v1523 = vmax.f32 %v1521, %v1522
      %v1524 = vrot.slane %v1523, 1
      %v1525 = vmax.f32 %v1523, %v1524
      %v1526 = vmax.f32 %v1340, %v1342
      %v1527 = vmax.f32 %v1526, %v1345
      %v1528 = vmax.f32 %v1527, %v1347
      %v1529 = vmax.f32 %v1528, %v1350
      %v1530 = vmax.f32 %v1529, %v1352
      %v1531 = vmax.f32 %v1530, %v1355
      %v1532 = vmax.f32 %v1531, %v1357
      %v1533 = vmax.f32 %v1532, %v1360
      %v1534 = vmax.f32 %v1533, %v1362
      %v1535 = vmax.f32 %v1534, %v1365
      %v1536 = vmax.f32 %v1535, %v1367
      %v1537 = vmax.f32 %v1536, %v1370
      %v1538 = vmax.f32 %v1537, %v1372
      %v1539 = vmax.f32 %v1538, %v1375
      %v1540 = vmax.f32 %v1539, %v1377
      %v1541 = vrot.slane %v1540, 4
      %v1542 = vmax.f32 %v1540, %v1541
      %v1543 = vrot.slane %v1542, 2
      %v1544 = vmax.f32 %v1542, %v1543
      %v1545 = vrot.slane %v1544, 1
      %v1546 = vmax.f32 %v1544, %v1545
      %v1555 = vrot.slane %v1420, 7
      %v1556 = vrot.slane %v1441, 6
      %v1557 = vrot.slane %v1462, 5
      %v1558 = vrot.slane %v1483, 4
      %v1559 = vrot.slane %v1504, 3
      %v1560 = vrot.slane %v1525, 2
      %v1561 = vrot.slane %v1546, 1
      %vm1562 = vcmask 1040384
      %v1563 = vsel %vm1562, %v1399, %v1555
      %vm1564 = vcmask 1042434
      %v1565 = vsel %vm1564, %v1556, %v1557
      %vm1566 = vcmask 1041408
      %v1567 = vsel %vm1566, %v1563, %v1565
      %vm1568 = vcmask 1044484
      %v1569 = vsel %vm1568, %v1558, %v1559
      %vm1570 = vcmask 1046534
      %v1571 = vsel %vm1570, %v1560, %v1561
      %vm1572 = vcmask 1045508
      %v1573 = vsel %vm1572, %v1569, %v1571
      %v1574 = vsel %vm392, %v1567, %v1573
      %1576 = vst [vmem:[%s304] sm:$0xff] %v1574
      %p1577 = scmp.lt.s32.totalorder %s21, 1
      %s1578 = scalar_select %p1577, %s21, 1
      %p1579 = scmp.lt.s32.totalorder %s22, 0
      %s1580 = scalar_select %p1579, %s22, 0
      %s1581 = smul.addr %s1580, 8
      %s1582 = smul.addr %s1578, 8
      %s1583 = sadd.s32 %s1581, %s1582
      %s1584 = scalar_lea.vmem %s6, %s1583
      // Predicated region
      $region45: #{pointnet_dense_cls_forward.4} parent=43 // pred_check
        %p1585 = pneg %p187
      $region46: #{pointnet_dense_cls_forward.4} parent=43 // pred_check_branch
        %1587 = sbr.rel (%p1585) target = $region48
      $region47: #{pointnet_dense_cls_forward.4} parent=43 // pred_region
        _
      $region48: #{pointnet_dense_cls_forward.4} parent=43 // pred_fallthru
        _
    $region44: #{pointnet_dense_cls_forward.4} parent=5 // pred_fallthru
      _
    %p1588 = scmp.le.s32.totalorder 2, %s12
    // Predicated region
    $region49: #{pointnet_dense_cls_forward.4} parent=5 // pred_check
      %p1589 = pneg %p1588
    $region50: #{pointnet_dense_cls_forward.4} parent=5 // pred_check_branch
      %1591 = sbr.rel (%p1589) target = $region52
    $region51: #{pointnet_dense_cls_forward.4} parent=5 // pred_region
      %s1592 = ssub.s32 %s12, 2
      // Predicated region
      $region53: #{pointnet_dense_cls_forward.4} parent=51 // pred_check
        %p1593 = pneg %p193
      $region54: #{pointnet_dense_cls_forward.4} parent=51 // pred_check_branch
        %1595 = sbr.rel (%p1593) target = $region56
      $region55: #{pointnet_dense_cls_forward.4} parent=51 // pred_region
        %p1596 = scmp.lt.s32.totalorder %s23, 1
        %s1597 = scalar_select %p1596, %s23, 1
        %p1598 = scmp.lt.s32.totalorder %s24, 0
        %s1599 = scalar_select %p1598, %s24, 0
        %s1600 = smul.addr %s1599, 8
        %s1601 = smul.addr %s1597, 8
        %s1602 = sadd.s32 %s1600, %s1601
        %s1603 = scalar_lea.vmem %s6, %s1602
      $region56: #{pointnet_dense_cls_forward.4} parent=51 // pred_fallthru
        _
    $region52: #{pointnet_dense_cls_forward.4} parent=5 // pred_fallthru
      _
  $region6: #{pointnet_dense_cls_forward.4} parent=0 // loop_footer
    %s16 = sadd.s32 1, %s12
  $region7: #{pointnet_dense_cls_forward.4} parent=0 // loop_footer_branch
    %11 = sbr.rel target = $region3
  $region8: #{pointnet_dense_cls_forward.4} parent=0 // loop_exit
    _

// kernel: pointnet_dense_cls_forward.5
$region0: #{pointnet_dense_cls_forward.5}
  #allocation0 [shape = 'u32[]', space=smem, size = 0x4, offset = 0x4, fixed_abs, tag = 'smem constant byte address 0x4 - core index']
  #allocation1 [shape = 'u32[72,128]{1,0:T(1,128)}', space=vmem, size = 0x9000, scoped, tag = 'internal scratch']
  %s0 = inlined_call_operand.vmem [shape: bf16[2,128,8], index: 0, kind: input, shape index: {}]
  %s1 = inlined_call_operand.vmem [shape: bf16[2,8,64], index: 1, kind: input, shape index: {}]
  %s2 = inlined_call_operand.vmem [shape: f32[1,64], index: 2, kind: input, shape index: {}]
  %s3 = inlined_call_operand.vmem [shape: f32[2,1,512], index: 3, kind: input, shape index: {}]
  %s4 = inlined_call_operand.vmem [shape: bf16[64,512], index: 4, kind: input, shape index: {}]
  %s5 = inlined_call_operand.vmem [shape: bf16[512,256], index: 5, kind: input, shape index: {}]
  %s6 = inlined_call_operand.vmem [shape: f32[1,256], index: 6, kind: input, shape index: {}]
  %s7 = inlined_call_operand.vmem [shape: bf16[256,128], index: 7, kind: input, shape index: {}]
  %s8 = inlined_call_operand.vmem [shape: f32[1,128], index: 8, kind: input, shape index: {}]
  %s9 = inlined_call_operand.vmem [shape: bf16[128,128], index: 9, kind: input, shape index: {}]
  %s10 = inlined_call_operand.vmem [shape: f32[1,128], index: 10, kind: input, shape index: {}]
  %s11 = inlined_call_operand.hbm [shape: f32[2,2,128], index: 11, kind: output, shape index: {}]
  %s12 = sld [smem:[#allocation0]]
  $region77: #{pointnet_dense_cls_forward.5} parent=0
    _
  %s14 = ssub.s32 1, %s12
  %s15 = scalar_select 0, %s14, %s12
  $region1: #{pointnet_dense_cls_forward.5} parent=0
    #allocation2 [shape = 'u8[2048]{0}', space=vmem, size = 0x800, scoped, tag = 'output window, operand 0']
    #allocation3 [shape = 's32[2]{0}', space=sflag, size = 0x8, scoped, tag = 'scoped memory for pointnet_dense_cls_forward.5']
    %16 = vsyncpa [#allocation3], 0
    %s17 = scalar_lea.sflag [#allocation3], 1
    %18 = vsyncpa %s17, 0
    loop: start=0, step=1, limit=4
    $region2: #{pointnet_dense_cls_forward.5} parent=1 // loop_pre_header
      _
    $region3: #{pointnet_dense_cls_forward.5} parent=1 // loop_header
      %s20 = sphi 0, %s24
      %p21 = scmp.ge.s32.totalorder %s20, 4
      %s27 = sphi 0, %s39
      %s28 = sphi 0, %s35
      %s29 = sphi 0, %s27
      %s30 = sphi 0, %s28
      %s31 = sphi 0, %s29
      %s32 = sphi 0, %s30
      %s44 = sphi 0, %s46
      %s47 = sphi 0, %s44
      %s48 = sphi 0, %s47
      %s64 = sphi 0, %s48
      %s70 = sphi 0, %s72
      %s73 = sphi 0, %s70
      %s74 = sphi 0, %s73
      %s90 = sphi 0, %s74
      %s94 = sphi 0, %s94
      %s96 = sphi 0, %s94
      %s97 = sphi 0, %s96
      %s111 = sphi 0, %s97
      %s117 = sphi 0, %s119
      %s120 = sphi 0, %s117
      %s121 = sphi 0, %s120
      %s137 = sphi 0, %s121
      %s141 = sphi 0, %s141
      %s143 = sphi 0, %s141
      %s144 = sphi 0, %s143
      %s158 = sphi 0, %s144
      %s162 = sphi 0, %s162
      %s164 = sphi 0, %s162
      %s165 = sphi 0, %s164
      %s179 = sphi 0, %s165
      %s183 = sphi 0, %s183
      %s185 = sphi 0, %s183
      %s186 = sphi 0, %s185
      %s200 = sphi 0, %s186
      %s204 = sphi 0, %s204
      %s206 = sphi 0, %s204
      %s207 = sphi 0, %s206
      %s221 = sphi 0, %s207
      %s225 = sphi 0, %s225
      %s227 = sphi 0, %s225
      %s228 = sphi 0, %s227
      %s242 = sphi 0, %s228
      %s246 = sphi 0, %s246
      %s248 = sphi 0, %s246
      %s249 = sphi 0, %s248
      %s263 = sphi 0, %s249
      %s267 = sphi 0, %s267
      %s269 = sphi 0, %s267
      %s270 = sphi 0, %s269
      %s284 = sphi 0, %s270
      %s292 = sphi 0, %s294
      %s295 = sphi 0, %s292
      %s296 = sphi 0, %s295
      %s312 = sphi 0, %s296
    $region4: #{pointnet_dense_cls_forward.5} parent=1 // loop_header_branch
      %23 = sbr.rel (%p21) target = $region8
    $region5: #{pointnet_dense_cls_forward.5} parent=1 // loop_body
      %s25 = ssub.s32 %s20, 1
      %s26 = ssub.s32 %s20, 2
      %s33 = sadd.s32 1, %s28
      %p34 = scmp.ge.s32.totalorder %s33, 1
      %s35 = scalar_select %p34, 0, %s33
      %s36 = sadd.s32 1, %s27
      %s37 = scalar_select %p34, %s36, %s27
      %p38 = scmp.ge.s32.totalorder %s37, 2
      %s39 = scalar_select %p38, 0, %s37
      %s40 = ssub.s32 %s27, %s39
      %s41 = ssub.s32 %s28, %s35
      %s42 = sor.u32 %s40, %s41
      %p43 = scmp.eq.s32.totalorder %s42, 0
      %s45 = sadd.s32 %s44, 1
      %s46 = scalar_select %p43, %s44, %s45
      %p49 = pneg %p43
      %p50 = scmp.eq.s32.totalorder %s20, 1
      %p51 = por %p49, %p50
      %p52 = scmp.ne.s32.totalorder %s44, %s47
      %p53 = scmp.eq.s32.totalorder %s20, 0
      %p54 = por %p52, %p53
      %p55 = scmp.ne.s32.totalorder %s44, %s47
      %p56 = scmp.eq.s32.totalorder %s25, 1
      %p57 = por %p55, %p56
      %p58 = scmp.ne.s32.totalorder %s47, %s48
      %p59 = scmp.eq.s32.totalorder %s25, 0
      %p60 = por %p58, %p59
      %p61 = scmp.ne.s32.totalorder %s47, %s48
      %p62 = scmp.eq.s32.totalorder %s26, 1
      %p63 = por %p61, %p62
      %p65 = scmp.ne.s32.totalorder %s48, %s64
      %p66 = scmp.eq.s32.totalorder %s26, 0
      %p67 = por %p65, %p66
      %s68 = ssub.s32 %s27, %s39
      %p69 = scmp.eq.s32.totalorder %s68, 0
      %s71 = sadd.s32 %s70, 1
      %s72 = scalar_select %p69, %s70, %s71
      %p75 = pneg %p69
      %p76 = scmp.eq.s32.totalorder %s20, 1
      %p77 = por %p75, %p76
      %p78 = scmp.ne.s32.totalorder %s70, %s73
      %p79 = scmp.eq.s32.totalorder %s20, 0
      %p80 = por %p78, %p79
      %p81 = scmp.ne.s32.totalorder %s70, %s73
      %p82 = scmp.eq.s32.totalorder %s25, 1
      %p83 = por %p81, %p82
      %p84 = scmp.ne.s32.totalorder %s73, %s74
      %p85 = scmp.eq.s32.totalorder %s25, 0
      %p86 = por %p84, %p85
      %p87 = scmp.ne.s32.totalorder %s73, %s74
      %p88 = scmp.eq.s32.totalorder %s26, 1
      %p89 = por %p87, %p88
      %p91 = scmp.ne.s32.totalorder %s74, %s90
      %p92 = scmp.eq.s32.totalorder %s26, 0
      %p93 = por %p91, %p92
      %s95 = sadd.s32 %s94, 1
      %p98 = scmp.eq.s32.totalorder %s20, 1
      %p99 = scmp.ne.s32.totalorder %s94, %s96
      %p100 = scmp.eq.s32.totalorder %s20, 0
      %p101 = por %p99, %p100
      %p102 = scmp.ne.s32.totalorder %s94, %s96
      %p103 = scmp.eq.s32.totalorder %s25, 1
      %p104 = por %p102, %p103
      %p105 = scmp.ne.s32.totalorder %s96, %s97
      %p106 = scmp.eq.s32.totalorder %s25, 0
      %p107 = por %p105, %p106
      %p108 = scmp.ne.s32.totalorder %s96, %s97
      %p109 = scmp.eq.s32.totalorder %s26, 1
      %p110 = por %p108, %p109
      %p112 = scmp.ne.s32.totalorder %s97, %s111
      %p113 = scmp.eq.s32.totalorder %s26, 0
      %p114 = por %p112, %p113
      %s115 = ssub.s32 %s27, %s39
      %p116 = scmp.eq.s32.totalorder %s115, 0
      %s118 = sadd.s32 %s117, 1
      %s119 = scalar_select %p116, %s117, %s118
      %p122 = pneg %p116
      %p123 = scmp.eq.s32.totalorder %s20, 1
      %p124 = por %p122, %p123
      %p125 = scmp.ne.s32.totalorder %s117, %s120
      %p126 = scmp.eq.s32.totalorder %s20, 0
      %p127 = por %p125, %p126
      %p128 = scmp.ne.s32.totalorder %s117, %s120
      %p129 = scmp.eq.s32.totalorder %s25, 1
      %p130 = por %p128, %p129
      %p131 = scmp.ne.s32.totalorder %s120, %s121
      %p132 = scmp.eq.s32.totalorder %s25, 0
      %p133 = por %p131, %p132
      %p134 = scmp.ne.s32.totalorder %s120, %s121
      %p135 = scmp.eq.s32.totalorder %s26, 1
      %p136 = por %p134, %p135
      %p138 = scmp.ne.s32.totalorder %s121, %s137
      %p139 = scmp.eq.s32.totalorder %s26, 0
      %p140 = por %p138, %p139
      %s142 = sadd.s32 %s141, 1
      %p145 = scmp.eq.s32.totalorder %s20, 1
      %p146 = scmp.ne.s32.totalorder %s141, %s143
      %p147 = scmp.eq.s32.totalorder %s20, 0
      %p148 = por %p146, %p147
      %p149 = scmp.ne.s32.totalorder %s141, %s143
      %p150 = scmp.eq.s32.totalorder %s25, 1
      %p151 = por %p149, %p150
      %p152 = scmp.ne.s32.totalorder %s143, %s144
      %p153 = scmp.eq.s32.totalorder %s25, 0
      %p154 = por %p152, %p153
      %p155 = scmp.ne.s32.totalorder %s143, %s144
      %p156 = scmp.eq.s32.totalorder %s26, 1
      %p157 = por %p155, %p156
      %p159 = scmp.ne.s32.totalorder %s144, %s158
      %p160 = scmp.eq.s32.totalorder %s26, 0
      %p161 = por %p159, %p160
      %s163 = sadd.s32 %s162, 1
      %p166 = scmp.eq.s32.totalorder %s20, 1
      %p167 = scmp.ne.s32.totalorder %s162, %s164
      %p168 = scmp.eq.s32.totalorder %s20, 0
      %p169 = por %p167, %p168
      %p170 = scmp.ne.s32.totalorder %s162, %s164
      %p171 = scmp.eq.s32.totalorder %s25, 1
      %p172 = por %p170, %p171
      %p173 = scmp.ne.s32.totalorder %s164, %s165
      %p174 = scmp.eq.s32.totalorder %s25, 0
      %p175 = por %p173, %p174
      %p176 = scmp.ne.s32.totalorder %s164, %s165
      %p177 = scmp.eq.s32.totalorder %s26, 1
      %p178 = por %p176, %p177
      %p180 = scmp.ne.s32.totalorder %s165, %s179
      %p181 = scmp.eq.s32.totalorder %s26, 0
      %p182 = por %p180, %p181
      %s184 = sadd.s32 %s183, 1
      %p187 = scmp.eq.s32.totalorder %s20, 1
      %p188 = scmp.ne.s32.totalorder %s183, %s185
      %p189 = scmp.eq.s32.totalorder %s20, 0
      %p190 = por %p188, %p189
      %p191 = scmp.ne.s32.totalorder %s183, %s185
      %p192 = scmp.eq.s32.totalorder %s25, 1
      %p193 = por %p191, %p192
      %p194 = scmp.ne.s32.totalorder %s185, %s186
      %p195 = scmp.eq.s32.totalorder %s25, 0
      %p196 = por %p194, %p195
      %p197 = scmp.ne.s32.totalorder %s185, %s186
      %p198 = scmp.eq.s32.totalorder %s26, 1
      %p199 = por %p197, %p198
      %p201 = scmp.ne.s32.totalorder %s186, %s200
      %p202 = scmp.eq.s32.totalorder %s26, 0
      %p203 = por %p201, %p202
      %s205 = sadd.s32 %s204, 1
      %p208 = scmp.eq.s32.totalorder %s20, 1
      %p209 = scmp.ne.s32.totalorder %s204, %s206
      %p210 = scmp.eq.s32.totalorder %s20, 0
      %p211 = por %p209, %p210
      %p212 = scmp.ne.s32.totalorder %s204, %s206
      %p213 = scmp.eq.s32.totalorder %s25, 1
      %p214 = por %p212, %p213
      %p215 = scmp.ne.s32.totalorder %s206, %s207
      %p216 = scmp.eq.s32.totalorder %s25, 0
      %p217 = por %p215, %p216
      %p218 = scmp.ne.s32.totalorder %s206, %s207
      %p219 = scmp.eq.s32.totalorder %s26, 1
      %p220 = por %p218, %p219
      %p222 = scmp.ne.s32.totalorder %s207, %s221
      %p223 = scmp.eq.s32.totalorder %s26, 0
      %p224 = por %p222, %p223
      %s226 = sadd.s32 %s225, 1
      %p229 = scmp.eq.s32.totalorder %s20, 1
      %p230 = scmp.ne.s32.totalorder %s225, %s227
      %p231 = scmp.eq.s32.totalorder %s20, 0
      %p232 = por %p230, %p231
      %p233 = scmp.ne.s32.totalorder %s225, %s227
      %p234 = scmp.eq.s32.totalorder %s25, 1
      %p235 = por %p233, %p234
      %p236 = scmp.ne.s32.totalorder %s227, %s228
      %p237 = scmp.eq.s32.totalorder %s25, 0
      %p238 = por %p236, %p237
      %p239 = scmp.ne.s32.totalorder %s227, %s228
      %p240 = scmp.eq.s32.totalorder %s26, 1
      %p241 = por %p239, %p240
      %p243 = scmp.ne.s32.totalorder %s228, %s242
      %p244 = scmp.eq.s32.totalorder %s26, 0
      %p245 = por %p243, %p244
      %s247 = sadd.s32 %s246, 1
      %p250 = scmp.eq.s32.totalorder %s20, 1
      %p251 = scmp.ne.s32.totalorder %s246, %s248
      %p252 = scmp.eq.s32.totalorder %s20, 0
      %p253 = por %p251, %p252
      %p254 = scmp.ne.s32.totalorder %s246, %s248
      %p255 = scmp.eq.s32.totalorder %s25, 1
      %p256 = por %p254, %p255
      %p257 = scmp.ne.s32.totalorder %s248, %s249
      %p258 = scmp.eq.s32.totalorder %s25, 0
      %p259 = por %p257, %p258
      %p260 = scmp.ne.s32.totalorder %s248, %s249
      %p261 = scmp.eq.s32.totalorder %s26, 1
      %p262 = por %p260, %p261
      %p264 = scmp.ne.s32.totalorder %s249, %s263
      %p265 = scmp.eq.s32.totalorder %s26, 0
      %p266 = por %p264, %p265
      %s268 = sadd.s32 %s267, 1
      %p271 = scmp.eq.s32.totalorder %s20, 1
      %p272 = scmp.ne.s32.totalorder %s267, %s269
      %p273 = scmp.eq.s32.totalorder %s20, 0
      %p274 = por %p272, %p273
      %p275 = scmp.ne.s32.totalorder %s267, %s269
      %p276 = scmp.eq.s32.totalorder %s25, 1
      %p277 = por %p275, %p276
      %p278 = scmp.ne.s32.totalorder %s269, %s270
      %p279 = scmp.eq.s32.totalorder %s25, 0
      %p280 = por %p278, %p279
      %p281 = scmp.ne.s32.totalorder %s269, %s270
      %p282 = scmp.eq.s32.totalorder %s26, 1
      %p283 = por %p281, %p282
      %p285 = scmp.ne.s32.totalorder %s270, %s284
      %p286 = scmp.eq.s32.totalorder %s26, 0
      %p287 = por %p285, %p286
      %s288 = ssub.s32 %s27, %s39
      %s289 = ssub.s32 %s28, %s35
      %s290 = sor.u32 %s288, %s289
      %p291 = scmp.eq.s32.totalorder %s290, 0
      %s293 = sadd.s32 %s292, 1
      %s294 = scalar_select %p291, %s292, %s293
      %p297 = pneg %p291
      %p298 = scmp.eq.s32.totalorder %s20, 1
      %p299 = por %p297, %p298
      %p300 = scmp.ne.s32.totalorder %s292, %s295
      %p301 = scmp.eq.s32.totalorder %s20, 0
      %p302 = por %p300, %p301
      %p303 = scmp.ne.s32.totalorder %s292, %s295
      %p304 = scmp.eq.s32.totalorder %s25, 1
      %p305 = por %p303, %p304
      %p306 = scmp.ne.s32.totalorder %s295, %s296
      %p307 = scmp.eq.s32.totalorder %s25, 0
      %p308 = por %p306, %p307
      %p309 = scmp.ne.s32.totalorder %s295, %s296
      %p310 = scmp.eq.s32.totalorder %s26, 1
      %p311 = por %p309, %p310
      %p313 = scmp.ne.s32.totalorder %s296, %s312
      %p314 = scmp.eq.s32.totalorder %s26, 0
      %p315 = por %p313, %p314
      %p316 = scmp.le.s32.totalorder 1, %s20
      %p317 = scmp.lt.s32.totalorder %s20, 3
      %p318 = pnand %p316, %p317
      %p319 = pneg %p318
      // Predicated region
      $region9: #{pointnet_dense_cls_forward.5} parent=5 // pred_check
        _
      $region10: #{pointnet_dense_cls_forward.5} parent=5 // pred_check_branch
        %321 = sbr.rel (%p318) target = $region12
      $region11: #{pointnet_dense_cls_forward.5} parent=5 // pred_region
        %s322 = ssub.s32 %s20, 1
        // Predicated region
        $region13: #{pointnet_dense_cls_forward.5} parent=11 // pred_check
          %p323 = pneg %p107
        $region14: #{pointnet_dense_cls_forward.5} parent=11 // pred_check_branch
          %325 = sbr.rel (%p323) target = $region16
        $region15: #{pointnet_dense_cls_forward.5} parent=11 // pred_region
          _
        $region16: #{pointnet_dense_cls_forward.5} parent=11 // pred_fallthru
          _
        // Predicated region
        $region17: #{pointnet_dense_cls_forward.5} parent=11 // pred_check
          %p326 = pneg %p154
        $region18: #{pointnet_dense_cls_forward.5} parent=11 // pred_check_branch
          %328 = sbr.rel (%p326) target = $region20
        $region19: #{pointnet_dense_cls_forward.5} parent=11 // pred_region
          _
        $region20: #{pointnet_dense_cls_forward.5} parent=11 // pred_fallthru
          _
        // Predicated region
        $region21: #{pointnet_dense_cls_forward.5} parent=11 // pred_check
          %p329 = pneg %p175
        $region22: #{pointnet_dense_cls_forward.5} parent=11 // pred_check_branch
          %331 = sbr.rel (%p329) target = $region24
        $region23: #{pointnet_dense_cls_forward.5} parent=11 // pred_region
          _
        $region24: #{pointnet_dense_cls_forward.5} parent=11 // pred_fallthru
          _
        // Predicated region
        $region25: #{pointnet_dense_cls_forward.5} parent=11 // pred_check
          %p332 = pneg %p196
        $region26: #{pointnet_dense_cls_forward.5} parent=11 // pred_check_branch
          %334 = sbr.rel (%p332) target = $region28
        $region27: #{pointnet_dense_cls_forward.5} parent=11 // pred_region
          _
        $region28: #{pointnet_dense_cls_forward.5} parent=11 // pred_fallthru
          _
        // Predicated region
        $region29: #{pointnet_dense_cls_forward.5} parent=11 // pred_check
          %p335 = pneg %p217
        $region30: #{pointnet_dense_cls_forward.5} parent=11 // pred_check_branch
          %337 = sbr.rel (%p335) target = $region32
        $region31: #{pointnet_dense_cls_forward.5} parent=11 // pred_region
          _
        $region32: #{pointnet_dense_cls_forward.5} parent=11 // pred_fallthru
          _
        // Predicated region
        $region33: #{pointnet_dense_cls_forward.5} parent=11 // pred_check
          %p338 = pneg %p238
        $region34: #{pointnet_dense_cls_forward.5} parent=11 // pred_check_branch
          %340 = sbr.rel (%p338) target = $region36
        $region35: #{pointnet_dense_cls_forward.5} parent=11 // pred_region
          _
        $region36: #{pointnet_dense_cls_forward.5} parent=11 // pred_fallthru
          _
        // Predicated region
        $region37: #{pointnet_dense_cls_forward.5} parent=11 // pred_check
          %p341 = pneg %p259
        $region38: #{pointnet_dense_cls_forward.5} parent=11 // pred_check_branch
          %343 = sbr.rel (%p341) target = $region40
        $region39: #{pointnet_dense_cls_forward.5} parent=11 // pred_region
          _
        $region40: #{pointnet_dense_cls_forward.5} parent=11 // pred_fallthru
          _
        // Predicated region
        $region41: #{pointnet_dense_cls_forward.5} parent=11 // pred_check
          %p344 = pneg %p280
        $region42: #{pointnet_dense_cls_forward.5} parent=11 // pred_check_branch
          %346 = sbr.rel (%p344) target = $region44
        $region43: #{pointnet_dense_cls_forward.5} parent=11 // pred_region
          _
        $region44: #{pointnet_dense_cls_forward.5} parent=11 // pred_fallthru
          _
      $region12: #{pointnet_dense_cls_forward.5} parent=5 // pred_fallthru
        _
      %p347 = scmp.lt.s32.totalorder %s20, 2
      // Predicated region
      $region45: #{pointnet_dense_cls_forward.5} parent=5 // pred_check
        %p348 = pneg %p347
      $region46: #{pointnet_dense_cls_forward.5} parent=5 // pred_check_branch
        %350 = sbr.rel (%p348) target = $region48
      $region47: #{pointnet_dense_cls_forward.5} parent=5 // pred_region
        // Predicated region
        $region49: #{pointnet_dense_cls_forward.5} parent=47 // pred_check
          %p351 = pneg %p54
        $region50: #{pointnet_dense_cls_forward.5} parent=47 // pred_check_branch
          %353 = sbr.rel (%p351) target = $region52
        $region51: #{pointnet_dense_cls_forward.5} parent=47 // pred_region
          %s354 = smul.u32 16, %s28
          %p355 = scmp.lt.s32.totalorder %s27, 1
          %s356 = scalar_select %p355, %s27, 1
          %p357 = scmp.lt.s32.totalorder %s354, 15
          %s358 = scalar_select %p357, %s354, 15
          %s359 = smul.addr %s356, 16
          %s360 = sadd.s32 %s358, %s359
          %s361 = smul.addr %s360, 4
          %s362 = scalar_lea.vmem %s0, %s361
          %s363 = smul.u32 16, %s28
        $region52: #{pointnet_dense_cls_forward.5} parent=47 // pred_fallthru
          _
        // Predicated region
        $region53: #{pointnet_dense_cls_forward.5} parent=47 // pred_check
          %p364 = pneg %p80
        $region54: #{pointnet_dense_cls_forward.5} parent=47 // pred_check_branch
          %366 = sbr.rel (%p364) target = $region56
        $region55: #{pointnet_dense_cls_forward.5} parent=47 // pred_region
          %p367 = scmp.lt.s32.totalorder %s27, 1
          %s368 = scalar_select %p367, %s27, 1
          %s369 = smul.addr %s368, 4
          %s370 = scalar_lea.vmem %s1, %s369
        $region56: #{pointnet_dense_cls_forward.5} parent=47 // pred_fallthru
          _
        // Predicated region
        $region57: #{pointnet_dense_cls_forward.5} parent=47 // pred_check
          %p371 = pneg %p127
        $region58: #{pointnet_dense_cls_forward.5} parent=47 // pred_check_branch
          %373 = sbr.rel (%p371) target = $region60
        $region59: #{pointnet_dense_cls_forward.5} parent=47 // pred_region
          %p374 = scmp.lt.s32.totalorder %s27, 1
          %s375 = scalar_select %p374, %s27, 1
          %s376 = smul.addr %s375, 4
          %s377 = scalar_lea.vmem %s3, %s376
        $region60: #{pointnet_dense_cls_forward.5} parent=47 // pred_fallthru
          _
      $region48: #{pointnet_dense_cls_forward.5} parent=5 // pred_fallthru
        _
      %p378 = scmp.le.s32.totalorder 1, %s20
      %p379 = scmp.lt.s32.totalorder %s20, 3
      %p380 = pnand %p378, %p379
      %p381 = pneg %p380
      // Predicated region
      $region61: #{pointnet_dense_cls_forward.5} parent=5 // pred_check
        _
      $region62: #{pointnet_dense_cls_forward.5} parent=5 // pred_check_branch
        %383 = sbr.rel (%p380) target = $region64
      $region63: #{pointnet_dense_cls_forward.5} parent=5 // pred_region
        %s384 = ssub.s32 %s20, 1
        %s385 = smul.u32 16, %s30
        %p386 = scmp.lt.s32.totalorder %s29, 1
        %s387 = scalar_select %p386, %s29, 1
        %p388 = scmp.lt.s32.totalorder %s385, 15
        %s389 = scalar_select %p388, %s385, 15
        %s390 = smul.addr %s387, 16
        %s391 = sadd.s32 %s389, %s390
        %s392 = smul.addr %s391, 4
        %s393 = scalar_lea.vmem %s0, %s392
        %p394 = pneg %p60
        %p395 = pneg %p57
        %p396 = scmp.lt.s32.totalorder %s29, 1
        %s397 = scalar_select %p396, %s29, 1
        %s398 = smul.addr %s397, 4
        %s399 = scalar_lea.vmem %s1, %s398
        %p400 = pneg %p86
        %p401 = pneg %p83
        %p402 = pneg %p107
        %p403 = pneg %p104
        %p404 = scmp.lt.s32.totalorder %s29, 1
        %s405 = scalar_select %p404, %s29, 1
        %s406 = smul.addr %s405, 4
        %s407 = scalar_lea.vmem %s3, %s406
        %p408 = pneg %p133
        %p409 = pneg %p130
        %p410 = pneg %p154
        %p411 = pneg %p151
        %p412 = pneg %p175
        %p413 = pneg %p172
        %p414 = pneg %p196
        %p415 = pneg %p193
        %p416 = pneg %p217
        %p417 = pneg %p214
        %p418 = pneg %p238
        %p419 = pneg %p235
        %p420 = pneg %p259
        %p421 = pneg %p256
        %p422 = pneg %p280
        %p423 = pneg %p277
        %p424 = pneg %p308
        %p425 = pneg %p305
        %s426 = sand.u32 %s295, 1
        %s427 = scalar_lea.sflag [#allocation3], %s426
        %s428 = sand.u32 %s295, 1
        %s429 = smul.addr %s428, 2
        %s430 = scalar_lea.vmem [#allocation2], %s429
        %s431 = smul.u32 16, %s30
        %p432 = scmp.lt.s32.totalorder %s29, 1
        %s433 = scalar_select %p432, %s29, 1
        %p434 = scmp.lt.s32.totalorder %s431, 15
        %s435 = scalar_select %p434, %s431, 15
        %s436 = smul.addr %s433, 16
        %s437 = sadd.s32 %s435, %s436
        %s438 = smul.addr %s437, 4
        %s439 = scalar_lea.vmem %s0, %s438
        %s440 = smul.u32 16, %s30
        %p441 = scmp.lt.s32.totalorder %s29, 1
        %s442 = scalar_select %p441, %s29, 1
        %s443 = smul.addr %s442, 4
        %s444 = scalar_lea.vmem %s1, %s443
        %p445 = scmp.lt.s32.totalorder %s29, 1
        %s446 = scalar_select %p445, %s29, 1
        %s447 = smul.addr %s446, 4
        %s448 = scalar_lea.vmem %s3, %s447
        %v450 = vld [vmem:[%s439] sm:$0xf]
        %v451 = vld [vmem:[%s439 + $0x4] sm:$0xf]
        %v452 = vld [vmem:[%s439 + $0x8] sm:$0xf]
        %v453 = vld [vmem:[%s439 + $0xc] sm:$0xf]
        %v454 = vld [vmem:[%s439 + $0x10] sm:$0xf]
        %v455 = vld [vmem:[%s439 + $0x14] sm:$0xf]
        %v456 = vld [vmem:[%s439 + $0x18] sm:$0xf]
        %v457 = vld [vmem:[%s439 + $0x1c] sm:$0xf]
        %v458 = vld [vmem:[%s439 + $0x20] sm:$0xf]
        %v459 = vld [vmem:[%s439 + $0x24] sm:$0xf]
        %v460 = vld [vmem:[%s439 + $0x28] sm:$0xf]
        %v461 = vld [vmem:[%s439 + $0x2c] sm:$0xf]
        %v462 = vld [vmem:[%s439 + $0x30] sm:$0xf]
        %v463 = vld [vmem:[%s439 + $0x34] sm:$0xf]
        %v464 = vld [vmem:[%s439 + $0x38] sm:$0xf]
        %v465 = vld [vmem:[%s439 + $0x3c] sm:$0xf]
        %v466 = vld [vmem:[%s444] sm:$0xf]
        %v467 = vld [vmem:[%s2] sm:$0x1]
        %v469 = vperm.slane %v467, 0
        %v487 = vunpack.c.l.b16 %v450
        %v488 = vunpack.c.l.b16 %v451
        %v489 = vunpack.c.l.b16 %v452
        %v490 = vunpack.c.l.b16 %v453
        %v491 = vunpack.c.l.b16 %v454
        %v492 = vunpack.c.l.b16 %v455
        %v493 = vunpack.c.l.b16 %v456
        %v494 = vunpack.c.l.b16 %v457
        %v495 = vunpack.c.l.b16 %v458
        %v496 = vunpack.c.l.b16 %v459
        %v497 = vunpack.c.l.b16 %v460
        %v498 = vunpack.c.l.b16 %v461
        %v499 = vunpack.c.l.b16 %v462
        %v500 = vunpack.c.l.b16 %v463
        %v501 = vunpack.c.l.b16 %v464
        %v502 = vunpack.c.l.b16 %v465
        %v503 = vpack.c.b16 %v488, %v487
        %v504 = vpack.c.b16 %v490, %v489
        %v505 = vpack.c.b16 %v492, %v491
        %v506 = vpack.c.b16 %v494, %v493
        %v507 = vpack.c.b16 %v496, %v495
        %v508 = vpack.c.b16 %v498, %v497
        %v509 = vpack.c.b16 %v500, %v499
        %v510 = vpack.c.b16 %v502, %v501
        %vm511 = vcmask 64512
        %v513 = vsel %vm511, %v503, 0
        %v516 = vsel %vm511, %v504, 0
        %v519 = vsel %vm511, %v505, 0
        %v522 = vsel %vm511, %v506, 0
        %v525 = vsel %vm511, %v507, 0
        %v528 = vsel %vm511, %v508, 0
        %v531 = vsel %vm511, %v509, 0
        %v534 = vsel %vm511, %v510, 0
        %vm536 = vcmask 1043456
        %v538 = vsel %vm536, %v466, 0
        %540 = vmatpush.bf16.msra.mxu0 0
        %541 = vmatpush.bf16.msra.mxu0 0
        %542 = vmatpush.bf16.msra.mxu0 0
        %543 = vmatpush.bf16.msra.mxu0 0
        %544 = vmatpush.bf16.msra.mxu0 0
        %545 = vmatpush.bf16.msra.mxu0 0
        %546 = vmatpush.bf16.msra.mxu0 0
        %547 = vmatpush.bf16.msra.mxu0 %v538
        %548 = vmatmul.bf16.gmra.mxu0 %v513
        %v549 = vpop.f32.mrf.mxu0
        %v550 = vadd.f32 %v469, %v549
        %v551 = vpop.f32.mrf.mxu0
        %v552 = vadd.f32 %v469, %v551
        %553 = vmatmul.bf16.gmra.mxu0 %v516
        %v554 = vpop.f32.mrf.mxu0
        %v555 = vadd.f32 %v469, %v554
        %v556 = vpop.f32.mrf.mxu0
        %v557 = vadd.f32 %v469, %v556
        %558 = vmatmul.bf16.gmra.mxu0 %v519
        %v559 = vpop.f32.mrf.mxu0
        %v560 = vadd.f32 %v469, %v559
        %v561 = vpop.f32.mrf.mxu0
        %v562 = vadd.f32 %v469, %v561
        %563 = vmatmul.bf16.gmra.mxu0 %v522
        %v564 = vpop.f32.mrf.mxu0
        %v565 = vadd.f32 %v469, %v564
        %v566 = vpop.f32.mrf.mxu0
        %v567 = vadd.f32 %v469, %v566
        %568 = vmatmul.bf16.gmra.mxu0 %v525
        %v569 = vpop.f32.mrf.mxu0
        %v570 = vadd.f32 %v469, %v569
        %v571 = vpop.f32.mrf.mxu0
        %v572 = vadd.f32 %v469, %v571
        %573 = vmatmul.bf16.gmra.mxu0 %v528
        %v574 = vpop.f32.mrf.mxu0
        %v575 = vadd.f32 %v469, %v574
        %v576 = vpop.f32.mrf.mxu0
        %v577 = vadd.f32 %v469, %v576
        %578 = vmatmul.bf16.gmra.mxu0 %v531
        %v579 = vpop.f32.mrf.mxu0
        %v580 = vadd.f32 %v469, %v579
        %v581 = vpop.f32.mrf.mxu0
        %v582 = vadd.f32 %v469, %v581
        %583 = vmatmul.bf16.gmra.mxu0 %v534
        %v584 = vpop.f32.mrf.mxu0
        %v585 = vadd.f32 %v469, %v584
        %v586 = vpop.f32.mrf.mxu0
        %v587 = vadd.f32 %v469, %v586
        %588 = vdwg.mxu0
        %v589 = vmax.f32 %v550, 0.0
        %v590 = vmax.f32 %v552, 0.0
        %v591 = vmax.f32 %v555, 0.0
        %v592 = vmax.f32 %v557, 0.0
        %v593 = vmax.f32 %v560, 0.0
        %v594 = vmax.f32 %v562, 0.0
        %v595 = vmax.f32 %v565, 0.0
        %v596 = vmax.f32 %v567, 0.0
        %v597 = vmax.f32 %v570, 0.0
        %v598 = vmax.f32 %v572, 0.0
        %v599 = vmax.f32 %v575, 0.0
        %v600 = vmax.f32 %v577, 0.0
        %v601 = vmax.f32 %v580, 0.0
        %v602 = vmax.f32 %v582, 0.0
        %v603 = vmax.f32 %v585, 0.0
        %v604 = vmax.f32 %v587, 0.0
        %v605 = vpack.c.bf16 %v590, %v589
        %v606 = vpack.c.bf16 %v592, %v591
        %v607 = vpack.c.bf16 %v594, %v593
        %v608 = vpack.c.bf16 %v596, %v595
        %v609 = vpack.c.bf16 %v598, %v597
        %v610 = vpack.c.bf16 %v600, %v599
        %v611 = vpack.c.bf16 %v602, %v601
        %v612 = vpack.c.bf16 %v604, %v603
        %v613 = vld [vmem:[%s4] sm:$0xff]
        %v614 = vld [vmem:[%s4 + $0x8] sm:$0xff]
        %v615 = vld [vmem:[%s4 + $0x10] sm:$0xff]
        %v616 = vld [vmem:[%s4 + $0x18] sm:$0xff]
        %v617 = vld [vmem:[%s4 + $0x20] sm:$0xff]
        %v618 = vld [vmem:[%s4 + $0x28] sm:$0xff]
        %v619 = vld [vmem:[%s4 + $0x30] sm:$0xff]
        %v620 = vld [vmem:[%s4 + $0x38] sm:$0xff]
        %v621 = vld [vmem:[%s4 + $0x40] sm:$0xff]
        %v622 = vld [vmem:[%s4 + $0x48] sm:$0xff]
        %v623 = vld [vmem:[%s4 + $0x50] sm:$0xff]
        %v624 = vld [vmem:[%s4 + $0x58] sm:$0xff]
        %v625 = vld [vmem:[%s4 + $0x60] sm:$0xff]
        %v626 = vld [vmem:[%s4 + $0x68] sm:$0xff]
        %v627 = vld [vmem:[%s4 + $0x70] sm:$0xff]
        %v628 = vld [vmem:[%s4 + $0x78] sm:$0xff]
        %v629 = vld [vmem:[%s448] sm:$0xf]
        %v631 = vperm.slane %v629, 0
        %v632 = vperm.slane %v629, 1
        %v633 = vperm.slane %v629, 2
        %v634 = vperm.slane %v629, 3
        %v655 = vunpack.c.l.b16 %v613
        %v656 = vunpack.c.h.b16 %v613
        %v657 = vunpack.c.l.b16 %v614
        %v658 = vunpack.c.h.b16 %v614
        %v659 = vunpack.c.l.b16 %v615
        %v660 = vunpack.c.h.b16 %v615
        %v661 = vunpack.c.l.b16 %v616
        %v662 = vunpack.c.h.b16 %v616
        %v663 = vunpack.c.l.b16 %v617
        %v664 = vunpack.c.h.b16 %v617
        %v665 = vunpack.c.l.b16 %v618
        %v666 = vunpack.c.h.b16 %v618
        %v667 = vunpack.c.l.b16 %v619
        %v668 = vunpack.c.h.b16 %v619
        %v669 = vunpack.c.l.b16 %v620
        %v670 = vunpack.c.h.b16 %v620
        %v671 = vunpack.c.l.b16 %v621
        %v672 = vunpack.c.h.b16 %v621
        %v673 = vunpack.c.l.b16 %v622
        %v674 = vunpack.c.h.b16 %v622
        %v675 = vunpack.c.l.b16 %v623
        %v676 = vunpack.c.h.b16 %v623
        %v677 = vunpack.c.l.b16 %v624
        %v678 = vunpack.c.h.b16 %v624
        %v679 = vunpack.c.l.b16 %v625
        %v680 = vunpack.c.h.b16 %v625
        %v681 = vunpack.c.l.b16 %v626
        %v682 = vunpack.c.h.b16 %v626
        %v683 = vunpack.c.l.b16 %v627
        %v684 = vunpack.c.h.b16 %v627
        %v685 = vunpack.c.l.b16 %v628
        %v686 = vunpack.c.h.b16 %v628
        %v687 = vpack.c.b16 %v659, %v655
        %v688 = vpack.c.b16 %v660, %v656
        %v689 = vpack.c.b16 %v661, %v657
        %v690 = vpack.c.b16 %v662, %v658
        %v691 = vpack.c.b16 %v667, %v663
        %v692 = vpack.c.b16 %v668, %v664
        %v693 = vpack.c.b16 %v669, %v665
        %v694 = vpack.c.b16 %v670, %v666
        %v695 = vpack.c.b16 %v675, %v671
        %v696 = vpack.c.b16 %v676, %v672
        %v697 = vpack.c.b16 %v677, %v673
        %v698 = vpack.c.b16 %v678, %v674
        %v699 = vpack.c.b16 %v683, %v679
        %v700 = vpack.c.b16 %v684, %v680
        %v701 = vpack.c.b16 %v685, %v681
        %v702 = vpack.c.b16 %v686, %v682
        %vm719 = vcmask 523264
        %v721 = vsel %vm719, %v605, 0
        %v724 = vsel %vm719, %v606, 0
        %v727 = vsel %vm719, %v607, 0
        %v730 = vsel %vm719, %v608, 0
        %v733 = vsel %vm719, %v609, 0
        %v736 = vsel %vm719, %v610, 0
        %v739 = vsel %vm719, %v611, 0
        %v742 = vsel %vm719, %v612, 0
        %744 = vmatpush.bf16.msra.mxu0 0
        %745 = vmatpush.bf16.msra.mxu0 0
        %746 = vmatpush.bf16.msra.mxu0 0
        %747 = vmatpush.bf16.msra.mxu0 0
        %748 = vmatpush.bf16.msra.mxu0 %v699
        %749 = vmatpush.bf16.msra.mxu0 %v695
        %750 = vmatpush.bf16.msra.mxu0 %v691
        %751 = vmatpush.bf16.msra.mxu0 %v687
        %752 = vmatmul.bf16.gmra.mxu0 %v721
        %v753 = vpop.f32.mrf.mxu0
        %v754 = vadd.f32 %v631, %v753
        %v755 = vpop.f32.mrf.mxu0
        %v756 = vadd.f32 %v631, %v755
        %757 = vmatmul.bf16.gmra.mxu0 %v724
        %v758 = vpop.f32.mrf.mxu0
        %v759 = vadd.f32 %v631, %v758
        %v760 = vpop.f32.mrf.mxu0
        %v761 = vadd.f32 %v631, %v760
        %762 = vmatmul.bf16.gmra.mxu0 %v727
        %v763 = vpop.f32.mrf.mxu0
        %v764 = vadd.f32 %v631, %v763
        %v765 = vpop.f32.mrf.mxu0
        %v766 = vadd.f32 %v631, %v765
        %767 = vmatmul.bf16.gmra.mxu0 %v730
        %v768 = vpop.f32.mrf.mxu0
        %v769 = vadd.f32 %v631, %v768
        %v770 = vpop.f32.mrf.mxu0
        %v771 = vadd.f32 %v631, %v770
        %772 = vmatmul.bf16.gmra.mxu0 %v733
        %v773 = vpop.f32.mrf.mxu0
        %v774 = vadd.f32 %v631, %v773
        %v775 = vpop.f32.mrf.mxu0
        %v776 = vadd.f32 %v631, %v775
        %777 = vmatmul.bf16.gmra.mxu0 %v736
        %v778 = vpop.f32.mrf.mxu0
        %v779 = vadd.f32 %v631, %v778
        %v780 = vpop.f32.mrf.mxu0
        %v781 = vadd.f32 %v631, %v780
        %782 = vmatmul.bf16.gmra.mxu0 %v739
        %v783 = vpop.f32.mrf.mxu0
        %v784 = vadd.f32 %v631, %v783
        %v785 = vpop.f32.mrf.mxu0
        %v786 = vadd.f32 %v631, %v785
        %787 = vmatmul.bf16.gmra.mxu0 %v742
        %v788 = vpop.f32.mrf.mxu0
        %v789 = vadd.f32 %v631, %v788
        %v790 = vpop.f32.mrf.mxu0
        %v791 = vadd.f32 %v631, %v790
        %792 = vdwg.mxu0
        %793 = vmatpush.bf16.msra.mxu0 0
        %794 = vmatpush.bf16.msra.mxu0 0
        %795 = vmatpush.bf16.msra.mxu0 0
        %796 = vmatpush.bf16.msra.mxu0 0
        %797 = vmatpush.bf16.msra.mxu0 %v700
        %798 = vmatpush.bf16.msra.mxu0 %v696
        %799 = vmatpush.bf16.msra.mxu0 %v692
        %800 = vmatpush.bf16.msra.mxu0 %v688
        %801 = vmatmul.bf16.gmra.mxu0 %v721
        %v802 = vpop.f32.mrf.mxu0
        %v803 = vadd.f32 %v632, %v802
        %v804 = vpop.f32.mrf.mxu0
        %v805 = vadd.f32 %v632, %v804
        %806 = vmatmul.bf16.gmra.mxu0 %v724
        %v807 = vpop.f32.mrf.mxu0
        %v808 = vadd.f32 %v632, %v807
        %v809 = vpop.f32.mrf.mxu0
        %v810 = vadd.f32 %v632, %v809
        %811 = vmatmul.bf16.gmra.mxu0 %v727
        %v812 = vpop.f32.mrf.mxu0
        %v813 = vadd.f32 %v632, %v812
        %v814 = vpop.f32.mrf.mxu0
        %v815 = vadd.f32 %v632, %v814
        %816 = vmatmul.bf16.gmra.mxu0 %v730
        %v817 = vpop.f32.mrf.mxu0
        %v818 = vadd.f32 %v632, %v817
        %v819 = vpop.f32.mrf.mxu0
        %v820 = vadd.f32 %v632, %v819
        %821 = vmatmul.bf16.gmra.mxu0 %v733
        %v822 = vpop.f32.mrf.mxu0
        %v823 = vadd.f32 %v632, %v822
        %v824 = vpop.f32.mrf.mxu0
        %v825 = vadd.f32 %v632, %v824
        %826 = vmatmul.bf16.gmra.mxu0 %v736
        %v827 = vpop.f32.mrf.mxu0
        %v828 = vadd.f32 %v632, %v827
        %v829 = vpop.f32.mrf.mxu0
        %v830 = vadd.f32 %v632, %v829
        %831 = vmatmul.bf16.gmra.mxu0 %v739
        %v832 = vpop.f32.mrf.mxu0
        %v833 = vadd.f32 %v632, %v832
        %v834 = vpop.f32.mrf.mxu0
        %v835 = vadd.f32 %v632, %v834
        %836 = vmatmul.bf16.gmra.mxu0 %v742
        %v837 = vpop.f32.mrf.mxu0
        %v838 = vadd.f32 %v632, %v837
        %v839 = vpop.f32.mrf.mxu0
        %v840 = vadd.f32 %v632, %v839
        %841 = vdwg.mxu0
        %842 = vmatpush.bf16.msra.mxu0 0
        %843 = vmatpush.bf16.msra.mxu0 0
        %844 = vmatpush.bf16.msra.mxu0 0
        %845 = vmatpush.bf16.msra.mxu0 0
        %846 = vmatpush.bf16.msra.mxu0 %v701
        %847 = vmatpush.bf16.msra.mxu0 %v697
        %848 = vmatpush.bf16.msra.mxu0 %v693
        %849 = vmatpush.bf16.msra.mxu0 %v689
        %850 = vmatmul.bf16.gmra.mxu0 %v721
        %v851 = vpop.f32.mrf.mxu0
        %v852 = vadd.f32 %v633, %v851
        %v853 = vpop.f32.mrf.mxu0
        %v854 = vadd.f32 %v633, %v853
        %855 = vmatmul.bf16.gmra.mxu0 %v724
        %v856 = vpop.f32.mrf.mxu0
        %v857 = vadd.f32 %v633, %v856
        %v858 = vpop.f32.mrf.mxu0
        %v859 = vadd.f32 %v633, %v858
        %860 = vmatmul.bf16.gmra.mxu0 %v727
        %v861 = vpop.f32.mrf.mxu0
        %v862 = vadd.f32 %v633, %v861
        %v863 = vpop.f32.mrf.mxu0
        %v864 = vadd.f32 %v633, %v863
        %865 = vmatmul.bf16.gmra.mxu0 %v730
        %v866 = vpop.f32.mrf.mxu0
        %v867 = vadd.f32 %v633, %v866
        %v868 = vpop.f32.mrf.mxu0
        %v869 = vadd.f32 %v633, %v868
        %870 = vmatmul.bf16.gmra.mxu0 %v733
        %v871 = vpop.f32.mrf.mxu0
        %v872 = vadd.f32 %v633, %v871
        %v873 = vpop.f32.mrf.mxu0
        %v874 = vadd.f32 %v633, %v873
        %875 = vmatmul.bf16.gmra.mxu0 %v736
        %v876 = vpop.f32.mrf.mxu0
        %v877 = vadd.f32 %v633, %v876
        %v878 = vpop.f32.mrf.mxu0
        %v879 = vadd.f32 %v633, %v878
        %880 = vmatmul.bf16.gmra.mxu0 %v739
        %v881 = vpop.f32.mrf.mxu0
        %v882 = vadd.f32 %v633, %v881
        %v883 = vpop.f32.mrf.mxu0
        %v884 = vadd.f32 %v633, %v883
        %885 = vmatmul.bf16.gmra.mxu0 %v742
        %v886 = vpop.f32.mrf.mxu0
        %v887 = vadd.f32 %v633, %v886
        %v888 = vpop.f32.mrf.mxu0
        %v889 = vadd.f32 %v633, %v888
        %890 = vdwg.mxu0
        %891 = vmatpush.bf16.msra.mxu0 0
        %892 = vmatpush.bf16.msra.mxu0 0
        %893 = vmatpush.bf16.msra.mxu0 0
        %894 = vmatpush.bf16.msra.mxu0 0
        %895 = vmatpush.bf16.msra.mxu0 %v702
        %896 = vmatpush.bf16.msra.mxu0 %v698
        %897 = vmatpush.bf16.msra.mxu0 %v694
        %898 = vmatpush.bf16.msra.mxu0 %v690
        %899 = vmatmul.bf16.gmra.mxu0 %v721
        %v900 = vpop.f32.mrf.mxu0
        %v901 = vadd.f32 %v634, %v900
        %v902 = vpop.f32.mrf.mxu0
        %v903 = vadd.f32 %v634, %v902
        %904 = vmatmul.bf16.gmra.mxu0 %v724
        %v905 = vpop.f32.mrf.mxu0
        %v906 = vadd.f32 %v634, %v905
        %v907 = vpop.f32.mrf.mxu0
        %v908 = vadd.f32 %v634, %v907
        %909 = vmatmul.bf16.gmra.mxu0 %v727
        %v910 = vpop.f32.mrf.mxu0
        %v911 = vadd.f32 %v634, %v910
        %v912 = vpop.f32.mrf.mxu0
        %v913 = vadd.f32 %v634, %v912
        %914 = vmatmul.bf16.gmra.mxu0 %v730
        %v915 = vpop.f32.mrf.mxu0
        %v916 = vadd.f32 %v634, %v915
        %v917 = vpop.f32.mrf.mxu0
        %v918 = vadd.f32 %v634, %v917
        %919 = vmatmul.bf16.gmra.mxu0 %v733
        %v920 = vpop.f32.mrf.mxu0
        %v921 = vadd.f32 %v634, %v920
        %v922 = vpop.f32.mrf.mxu0
        %v923 = vadd.f32 %v634, %v922
        %924 = vmatmul.bf16.gmra.mxu0 %v736
        %v925 = vpop.f32.mrf.mxu0
        %v926 = vadd.f32 %v634, %v925
        %v927 = vpop.f32.mrf.mxu0
        %v928 = vadd.f32 %v634, %v927
        %929 = vmatmul.bf16.gmra.mxu0 %v739
        %v930 = vpop.f32.mrf.mxu0
        %v931 = vadd.f32 %v634, %v930
        %v932 = vpop.f32.mrf.mxu0
        %v933 = vadd.f32 %v634, %v932
        %934 = vmatmul.bf16.gmra.mxu0 %v742
        %v935 = vpop.f32.mrf.mxu0
        %v936 = vadd.f32 %v634, %v935
        %v937 = vpop.f32.mrf.mxu0
        %v938 = vadd.f32 %v634, %v937
        %939 = vdwg.mxu0
        %v940 = vmax.f32 %v754, 0.0
        %v941 = vmax.f32 %v803, 0.0
        %v942 = vmax.f32 %v852, 0.0
        %v943 = vmax.f32 %v901, 0.0
        %v944 = vmax.f32 %v756, 0.0
        %v945 = vmax.f32 %v805, 0.0
        %v946 = vmax.f32 %v854, 0.0
        %v947 = vmax.f32 %v903, 0.0
        %v948 = vmax.f32 %v759, 0.0
        %v949 = vmax.f32 %v808, 0.0
        %v950 = vmax.f32 %v857, 0.0
        %v951 = vmax.f32 %v906, 0.0
        %v952 = vmax.f32 %v761, 0.0
        %v953 = vmax.f32 %v810, 0.0
        %v954 = vmax.f32 %v859, 0.0
        %v955 = vmax.f32 %v908, 0.0
        %v956 = vmax.f32 %v764, 0.0
        %v957 = vmax.f32 %v813, 0.0
        %v958 = vmax.f32 %v862, 0.0
        %v959 = vmax.f32 %v911, 0.0
        %v960 = vmax.f32 %v766, 0.0
        %v961 = vmax.f32 %v815, 0.0
        %v962 = vmax.f32 %v864, 0.0
        %v963 = vmax.f32 %v913, 0.0
        %v964 = vmax.f32 %v769, 0.0
        %v965 = vmax.f32 %v818, 0.0
        %v966 = vmax.f32 %v867, 0.0
        %v967 = vmax.f32 %v916, 0.0
        %v968 = vmax.f32 %v771, 0.0
        %v969 = vmax.f32 %v820, 0.0
        %v970 = vmax.f32 %v869, 0.0
        %v971 = vmax.f32 %v918, 0.0
        %v972 = vmax.f32 %v774, 0.0
        %v973 = vmax.f32 %v823, 0.0
        %v974 = vmax.f32 %v872, 0.0
        %v975 = vmax.f32 %v921, 0.0
        %v976 = vmax.f32 %v776, 0.0
        %v977 = vmax.f32 %v825, 0.0
        %v978 = vmax.f32 %v874, 0.0
        %v979 = vmax.f32 %v923, 0.0
        %v980 = vmax.f32 %v779, 0.0
        %v981 = vmax.f32 %v828, 0.0
        %v982 = vmax.f32 %v877, 0.0
        %v983 = vmax.f32 %v926, 0.0
        %v984 = vmax.f32 %v781, 0.0
        %v985 = vmax.f32 %v830, 0.0
        %v986 = vmax.f32 %v879, 0.0
        %v987 = vmax.f32 %v928, 0.0
        %v988 = vmax.f32 %v784, 0.0
        %v989 = vmax.f32 %v833, 0.0
        %v990 = vmax.f32 %v882, 0.0
        %v991 = vmax.f32 %v931, 0.0
        %v992 = vmax.f32 %v786, 0.0
        %v993 = vmax.f32 %v835, 0.0
        %v994 = vmax.f32 %v884, 0.0
        %v995 = vmax.f32 %v933, 0.0
        %v996 = vmax.f32 %v789, 0.0
        %v997 = vmax.f32 %v838, 0.0
        %v998 = vmax.f32 %v887, 0.0
        %v999 = vmax.f32 %v936, 0.0
        %v1000 = vmax.f32 %v791, 0.0
        %v1001 = vmax.f32 %v840, 0.0
        %v1002 = vmax.f32 %v889, 0.0
        %v1003 = vmax.f32 %v938, 0.0
        %v1004 = vpack.c.bf16 %v944, %v940
        %v1005 = vpack.c.bf16 %v945, %v941
        %v1006 = vpack.c.bf16 %v946, %v942
        %v1007 = vpack.c.bf16 %v947, %v943
        %v1008 = vpack.c.bf16 %v952, %v948
        %v1009 = vpack.c.bf16 %v953, %v949
        %v1010 = vpack.c.bf16 %v954, %v950
        %v1011 = vpack.c.bf16 %v955, %v951
        %v1012 = vpack.c.bf16 %v960, %v956
        %v1013 = vpack.c.bf16 %v961, %v957
        %v1014 = vpack.c.bf16 %v962, %v958
        %v1015 = vpack.c.bf16 %v963, %v959
        %v1016 = vpack.c.bf16 %v968, %v964
        %v1017 = vpack.c.bf16 %v969, %v965
        %v1018 = vpack.c.bf16 %v970, %v966
        %v1019 = vpack.c.bf16 %v971, %v967
        %v1020 = vpack.c.bf16 %v976, %v972
        %v1021 = vpack.c.bf16 %v977, %v973
        %v1022 = vpack.c.bf16 %v978, %v974
        %v1023 = vpack.c.bf16 %v979, %v975
        %v1024 = vpack.c.bf16 %v984, %v980
        %v1025 = vpack.c.bf16 %v985, %v981
        %v1026 = vpack.c.bf16 %v986, %v982
        %v1027 = vpack.c.bf16 %v987, %v983
        %v1028 = vpack.c.bf16 %v992, %v988
        %v1029 = vpack.c.bf16 %v993, %v989
        %v1030 = vpack.c.bf16 %v994, %v990
        %v1031 = vpack.c.bf16 %v995, %v991
        %v1032 = vpack.c.bf16 %v1000, %v996
        %v1033 = vpack.c.bf16 %v1001, %v997
        %v1034 = vpack.c.bf16 %v1002, %v998
        %v1035 = vpack.c.bf16 %v1003, %v999
        %v1036 = vld [vmem:[%s5] sm:$0xff]
        %v1037 = vld [vmem:[%s5 + $0x8] sm:$0xff]
        %v1038 = vld [vmem:[%s5 + $0x10] sm:$0xff]
        %v1039 = vld [vmem:[%s5 + $0x18] sm:$0xff]
        %v1040 = vld [vmem:[%s5 + $0x20] sm:$0xff]
        %v1041 = vld [vmem:[%s5 + $0x28] sm:$0xff]
        %v1042 = vld [vmem:[%s5 + $0x30] sm:$0xff]
        %v1043 = vld [vmem:[%s5 + $0x38] sm:$0xff]
        %v1044 = vld [vmem:[%s5 + $0x40] sm:$0xff]
        %v1045 = vld [vmem:[%s5 + $0x48] sm:$0xff]
        %v1046 = vld [vmem:[%s5 + $0x50] sm:$0xff]
        %v1047 = vld [vmem:[%s5 + $0x58] sm:$0xff]
        %v1048 = vld [vmem:[%s5 + $0x60] sm:$0xff]
        %v1049 = vld [vmem:[%s5 + $0x68] sm:$0xff]
        %v1050 = vld [vmem:[%s5 + $0x70] sm:$0xff]
        %v1051 = vld [vmem:[%s5 + $0x78] sm:$0xff]
        %v1052 = vld [vmem:[%s5 + $0x80] sm:$0xff]
        %v1053 = vld [vmem:[%s5 + $0x88] sm:$0xff]
        %v1054 = vld [vmem:[%s5 + $0x90] sm:$0xff]
        %v1055 = vld [vmem:[%s5 + $0x98] sm:$0xff]
        %v1056 = vld [vmem:[%s5 + $0xa0] sm:$0xff]
        %v1057 = vld [vmem:[%s5 + $0xa8] sm:$0xff]
        %v1058 = vld [vmem:[%s5 + $0xb0] sm:$0xff]
        %v1059 = vld [vmem:[%s5 + $0xb8] sm:$0xff]
        %v1060 = vld [vmem:[%s5 + $0xc0] sm:$0xff]
        %v1061 = vld [vmem:[%s5 + $0xc8] sm:$0xff]
        %v1062 = vld [vmem:[%s5 + $0xd0] sm:$0xff]
        %v1063 = vld [vmem:[%s5 + $0xd8] sm:$0xff]
        %v1064 = vld [vmem:[%s5 + $0xe0] sm:$0xff]
        %v1065 = vld [vmem:[%s5 + $0xe8] sm:$0xff]
        %v1066 = vld [vmem:[%s5 + $0xf0] sm:$0xff]
        %v1067 = vld [vmem:[%s5 + $0xf8] sm:$0xff]
        %v1068 = vld [vmem:[%s5 + $0x100] sm:$0xff]
        %v1069 = vld [vmem:[%s5 + $0x108] sm:$0xff]
        %v1070 = vld [vmem:[%s5 + $0x110] sm:$0xff]
        %v1071 = vld [vmem:[%s5 + $0x118] sm:$0xff]
        %v1072 = vld [vmem:[%s5 + $0x120] sm:$0xff]
        %v1073 = vld [vmem:[%s5 + $0x128] sm:$0xff]
        %v1074 = vld [vmem:[%s5 + $0x130] sm:$0xff]
        %v1075 = vld [vmem:[%s5 + $0x138] sm:$0xff]
        %v1076 = vld [vmem:[%s5 + $0x140] sm:$0xff]
        %v1077 = vld [vmem:[%s5 + $0x148] sm:$0xff]
        %v1078 = vld [vmem:[%s5 + $0x150] sm:$0xff]
        %v1079 = vld [vmem:[%s5 + $0x158] sm:$0xff]
        %v1080 = vld [vmem:[%s5 + $0x160] sm:$0xff]
        %v1081 = vld [vmem:[%s5 + $0x168] sm:$0xff]
        %v1082 = vld [vmem:[%s5 + $0x170] sm:$0xff]
        %v1083 = vld [vmem:[%s5 + $0x178] sm:$0xff]
        %v1084 = vld [vmem:[%s5 + $0x180] sm:$0xff]
        %v1085 = vld [vmem:[%s5 + $0x188] sm:$0xff]
        %v1086 = vld [vmem:[%s5 + $0x190] sm:$0xff]
        %v1087 = vld [vmem:[%s5 + $0x198] sm:$0xff]
        %v1088 = vld [vmem:[%s5 + $0x1a0] sm:$0xff]
        %v1089 = vld [vmem:[%s5 + $0x1a8] sm:$0xff]
        %v1090 = vld [vmem:[%s5 + $0x1b0] sm:$0xff]
        %v1091 = vld [vmem:[%s5 + $0x1b8] sm:$0xff]
        %v1092 = vld [vmem:[%s5 + $0x1c0] sm:$0xff]
        %v1093 = vld [vmem:[%s5 + $0x1c8] sm:$0xff]
        %v1094 = vld [vmem:[%s5 + $0x1d0] sm:$0xff]
        %v1095 = vld [vmem:[%s5 + $0x1d8] sm:$0xff]
        %v1096 = vld [vmem:[%s5 + $0x1e0] sm:$0xff]
        %v1097 = vld [vmem:[%s5 + $0x1e8] sm:$0xff]
        %v1098 = vld [vmem:[%s5 + $0x1f0] sm:$0xff]
        %v1099 = vld [vmem:[%s5 + $0x1f8] sm:$0xff]
        %v1100 = vld [vmem:[%s6] sm:$0x3]
        %v1102 = vperm.slane %v1100, 0
        %v1103 = vperm.slane %v1100, 1
        %v1170 = vunpack.c.l.b16 %v1036
        %v1171 = vunpack.c.h.b16 %v1036
        %v1172 = vunpack.c.l.b16 %v1037
        %v1173 = vunpack.c.h.b16 %v1037
        %v1174 = vunpack.c.l.b16 %v1038
        %v1175 = vunpack.c.h.b16 %v1038
        %v1176 = vunpack.c.l.b16 %v1039
        %v1177 = vunpack.c.h.b16 %v1039
        %v1178 = vunpack.c.l.b16 %v1040
        %v1179 = vunpack.c.h.b16 %v1040
        %v1180 = vunpack.c.l.b16 %v1041
        %v1181 = vunpack.c.h.b16 %v1041
        %v1182 = vunpack.c.l.b16 %v1042
        %v1183 = vunpack.c.h.b16 %v1042
        %v1184 = vunpack.c.l.b16 %v1043
        %v1185 = vunpack.c.h.b16 %v1043
        %v1186 = vunpack.c.l.b16 %v1044
        %v1187 = vunpack.c.h.b16 %v1044
        %v1188 = vunpack.c.l.b16 %v1045
        %v1189 = vunpack.c.h.b16 %v1045
        %v1190 = vunpack.c.l.b16 %v1046
        %v1191 = vunpack.c.h.b16 %v1046
        %v1192 = vunpack.c.l.b16 %v1047
        %v1193 = vunpack.c.h.b16 %v1047
        %v1194 = vunpack.c.l.b16 %v1048
        %v1195 = vunpack.c.h.b16 %v1048
        %v1196 = vunpack.c.l.b16 %v1049
        %v1197 = vunpack.c.h.b16 %v1049
        %v1198 = vunpack.c.l.b16 %v1050
        %v1199 = vunpack.c.h.b16 %v1050
        %v1200 = vunpack.c.l.b16 %v1051
        %v1201 = vunpack.c.h.b16 %v1051
        %v1202 = vunpack.c.l.b16 %v1052
        %v1203 = vunpack.c.h.b16 %v1052
        %v1204 = vunpack.c.l.b16 %v1053
        %v1205 = vunpack.c.h.b16 %v1053
        %v1206 = vunpack.c.l.b16 %v1054
        %v1207 = vunpack.c.h.b16 %v1054
        %v1208 = vunpack.c.l.b16 %v1055
        %v1209 = vunpack.c.h.b16 %v1055
        %v1210 = vunpack.c.l.b16 %v1056
        %v1211 = vunpack.c.h.b16 %v1056
        %v1212 = vunpack.c.l.b16 %v1057
        %v1213 = vunpack.c.h.b16 %v1057
        %v1214 = vunpack.c.l.b16 %v1058
        %v1215 = vunpack.c.h.b16 %v1058
        %v1216 = vunpack.c.l.b16 %v1059
        %v1217 = vunpack.c.h.b16 %v1059
        %v1218 = vunpack.c.l.b16 %v1060
        %v1219 = vunpack.c.h.b16 %v1060
        %v1220 = vunpack.c.l.b16 %v1061
        %v1221 = vunpack.c.h.b16 %v1061
        %v1222 = vunpack.c.l.b16 %v1062
        %v1223 = vunpack.c.h.b16 %v1062
        %v1224 = vunpack.c.l.b16 %v1063
        %v1225 = vunpack.c.h.b16 %v1063
        %v1226 = vunpack.c.l.b16 %v1064
        %v1227 = vunpack.c.h.b16 %v1064
        %v1228 = vunpack.c.l.b16 %v1065
        %v1229 = vunpack.c.h.b16 %v1065
        %v1230 = vunpack.c.l.b16 %v1066
        %v1231 = vunpack.c.h.b16 %v1066
        %v1232 = vunpack.c.l.b16 %v1067
        %v1233 = vunpack.c.h.b16 %v1067
        %v1234 = vunpack.c.l.b16 %v1068
        %v1235 = vunpack.c.h.b16 %v1068
        %v1236 = vunpack.c.l.b16 %v1069
        %v1237 = vunpack.c.h.b16 %v1069
        %v1238 = vunpack.c.l.b16 %v1070
        %v1239 = vunpack.c.h.b16 %v1070
        %v1240 = vunpack.c.l.b16 %v1071
        %v1241 = vunpack.c.h.b16 %v1071
        %v1242 = vunpack.c.l.b16 %v1072
        %v1243 = vunpack.c.h.b16 %v1072
        %v1244 = vunpack.c.l.b16 %v1073
        %v1245 = vunpack.c.h.b16 %v1073
        %v1246 = vunpack.c.l.b16 %v1074
        %v1247 = vunpack.c.h.b16 %v1074
        %v1248 = vunpack.c.l.b16 %v1075
        %v1249 = vunpack.c.h.b16 %v1075
        %v1250 = vunpack.c.l.b16 %v1076
        %v1251 = vunpack.c.h.b16 %v1076
        %v1252 = vunpack.c.l.b16 %v1077
        %v1253 = vunpack.c.h.b16 %v1077
        %v1254 = vunpack.c.l.b16 %v1078
        %v1255 = vunpack.c.h.b16 %v1078
        %v1256 = vunpack.c.l.b16 %v1079
        %v1257 = vunpack.c.h.b16 %v1079
        %v1258 = vunpack.c.l.b16 %v1080
        %v1259 = vunpack.c.h.b16 %v1080
        %v1260 = vunpack.c.l.b16 %v1081
        %v1261 = vunpack.c.h.b16 %v1081
        %v1262 = vunpack.c.l.b16 %v1082
        %v1263 = vunpack.c.h.b16 %v1082
        %v1264 = vunpack.c.l.b16 %v1083
        %v1265 = vunpack.c.h.b16 %v1083
        %v1266 = vunpack.c.l.b16 %v1084
        %v1267 = vunpack.c.h.b16 %v1084
        %v1268 = vunpack.c.l.b16 %v1085
        %v1269 = vunpack.c.h.b16 %v1085
        %v1270 = vunpack.c.l.b16 %v1086
        %v1271 = vunpack.c.h.b16 %v1086
        %v1272 = vunpack.c.l.b16 %v1087
        %v1273 = vunpack.c.h.b16 %v1087
        %v1274 = vunpack.c.l.b16 %v1088
        %v1275 = vunpack.c.h.b16 %v1088
        %v1276 = vunpack.c.l.b16 %v1089
        %v1277 = vunpack.c.h.b16 %v1089
        %v1278 = vunpack.c.l.b16 %v1090
        %v1279 = vunpack.c.h.b16 %v1090
        %v1280 = vunpack.c.l.b16 %v1091
        %v1281 = vunpack.c.h.b16 %v1091
        %v1282 = vunpack.c.l.b16 %v1092
        %v1283 = vunpack.c.h.b16 %v1092
        %v1284 = vunpack.c.l.b16 %v1093
        %v1285 = vunpack.c.h.b16 %v1093
        %v1286 = vunpack.c.l.b16 %v1094
        %v1287 = vunpack.c.h.b16 %v1094
        %v1288 = vunpack.c.l.b16 %v1095
        %v1289 = vunpack.c.h.b16 %v1095
        %v1290 = vunpack.c.l.b16 %v1096
        %v1291 = vunpack.c.h.b16 %v1096
        %v1292 = vunpack.c.l.b16 %v1097
        %v1293 = vunpack.c.h.b16 %v1097
        %v1294 = vunpack.c.l.b16 %v1098
        %v1295 = vunpack.c.h.b16 %v1098
        %v1296 = vunpack.c.l.b16 %v1099
        %v1297 = vunpack.c.h.b16 %v1099
        %v1298 = vpack.c.b16 %v1172, %v1170
        %v1299 = vpack.c.b16 %v1173, %v1171
        %v1300 = vpack.c.b16 %v1176, %v1174
        %v1301 = vpack.c.b16 %v1177, %v1175
        %v1302 = vpack.c.b16 %v1180, %v1178
        %v1303 = vpack.c.b16 %v1181, %v1179
        %v1304 = vpack.c.b16 %v1184, %v1182
        %v1305 = vpack.c.b16 %v1185, %v1183
        %v1306 = vpack.c.b16 %v1188, %v1186
        %v1307 = vpack.c.b16 %v1189, %v1187
        %v1308 = vpack.c.b16 %v1192, %v1190
        %v1309 = vpack.c.b16 %v1193, %v1191
        %v1310 = vpack.c.b16 %v1196, %v1194
        %v1311 = vpack.c.b16 %v1197, %v1195
        %v1312 = vpack.c.b16 %v1200, %v1198
        %v1313 = vpack.c.b16 %v1201, %v1199
        %v1314 = vpack.c.b16 %v1204, %v1202
        %v1315 = vpack.c.b16 %v1205, %v1203
        %v1316 = vpack.c.b16 %v1208, %v1206
        %v1317 = vpack.c.b16 %v1209, %v1207
        %v1318 = vpack.c.b16 %v1212, %v1210
        %v1319 = vpack.c.b16 %v1213, %v1211
        %v1320 = vpack.c.b16 %v1216, %v1214
        %v1321 = vpack.c.b16 %v1217, %v1215
        %v1322 = vpack.c.b16 %v1220, %v1218
        %v1323 = vpack.c.b16 %v1221, %v1219
        %v1324 = vpack.c.b16 %v1224, %v1222
        %v1325 = vpack.c.b16 %v1225, %v1223
        %v1326 = vpack.c.b16 %v1228, %v1226
        %v1327 = vpack.c.b16 %v1229, %v1227
        %v1328 = vpack.c.b16 %v1232, %v1230
        %v1329 = vpack.c.b16 %v1233, %v1231
        %v1330 = vpack.c.b16 %v1236, %v1234
        %v1331 = vpack.c.b16 %v1237, %v1235
        %v1332 = vpack.c.b16 %v1240, %v1238
        %v1333 = vpack.c.b16 %v1241, %v1239
        %v1334 = vpack.c.b16 %v1244, %v1242
        %v1335 = vpack.c.b16 %v1245, %v1243
        %v1336 = vpack.c.b16 %v1248, %v1246
        %v1337 = vpack.c.b16 %v1249, %v1247
        %v1338 = vpack.c.b16 %v1252, %v1250
        %v1339 = vpack.c.b16 %v1253, %v1251
        %v1340 = vpack.c.b16 %v1256, %v1254
        %v1341 = vpack.c.b16 %v1257, %v1255
        %v1342 = vpack.c.b16 %v1260, %v1258
        %v1343 = vpack.c.b16 %v1261, %v1259
        %v1344 = vpack.c.b16 %v1264, %v1262
        %v1345 = vpack.c.b16 %v1265, %v1263
        %v1346 = vpack.c.b16 %v1268, %v1266
        %v1347 = vpack.c.b16 %v1269, %v1267
        %v1348 = vpack.c.b16 %v1272, %v1270
        %v1349 = vpack.c.b16 %v1273, %v1271
        %v1350 = vpack.c.b16 %v1276, %v1274
        %v1351 = vpack.c.b16 %v1277, %v1275
        %v1352 = vpack.c.b16 %v1280, %v1278
        %v1353 = vpack.c.b16 %v1281, %v1279
        %v1354 = vpack.c.b16 %v1284, %v1282
        %v1355 = vpack.c.b16 %v1285, %v1283
        %v1356 = vpack.c.b16 %v1288, %v1286
        %v1357 = vpack.c.b16 %v1289, %v1287
        %v1358 = vpack.c.b16 %v1292, %v1290
        %v1359 = vpack.c.b16 %v1293, %v1291
        %v1360 = vpack.c.b16 %v1296, %v1294
        %v1361 = vpack.c.b16 %v1297, %v1295
        %1426 = vmatpush.bf16.msra.mxu0 %v1312
        %1427 = vmatpush.bf16.msra.mxu0 %v1310
        %1428 = vmatpush.bf16.msra.mxu0 %v1308
        %1429 = vmatpush.bf16.msra.mxu0 %v1306
        %1430 = vmatpush.bf16.msra.mxu0 %v1304
        %1431 = vmatpush.bf16.msra.mxu0 %v1302
        %1432 = vmatpush.bf16.msra.mxu0 %v1300
        %1433 = vmatpush.bf16.msra.mxu0 %v1298
        %1434 = vmatmul.bf16.gmra.mxu0 %v1004
        %v1435 = vpop.f32.mrf.mxu0
        %v1436 = vadd.f32 %v1102, %v1435
        %v1437 = vpop.f32.mrf.mxu0
        %v1438 = vadd.f32 %v1102, %v1437
        %1439 = vmatmul.bf16.gmra.mxu0 %v1008
        %v1440 = vpop.f32.mrf.mxu0
        %v1441 = vadd.f32 %v1102, %v1440
        %v1442 = vpop.f32.mrf.mxu0
        %v1443 = vadd.f32 %v1102, %v1442
        %1444 = vmatmul.bf16.gmra.mxu0 %v1012
        %v1445 = vpop.f32.mrf.mxu0
        %v1446 = vadd.f32 %v1102, %v1445
        %v1447 = vpop.f32.mrf.mxu0
        %v1448 = vadd.f32 %v1102, %v1447
        %1449 = vmatmul.bf16.gmra.mxu0 %v1016
        %v1450 = vpop.f32.mrf.mxu0
        %v1451 = vadd.f32 %v1102, %v1450
        %v1452 = vpop.f32.mrf.mxu0
        %v1453 = vadd.f32 %v1102, %v1452
        %1454 = vmatmul.bf16.gmra.mxu0 %v1020
        %v1455 = vpop.f32.mrf.mxu0
        %v1456 = vadd.f32 %v1102, %v1455
        %v1457 = vpop.f32.mrf.mxu0
        %v1458 = vadd.f32 %v1102, %v1457
        %1459 = vmatmul.bf16.gmra.mxu0 %v1024
        %v1460 = vpop.f32.mrf.mxu0
        %v1461 = vadd.f32 %v1102, %v1460
        %v1462 = vpop.f32.mrf.mxu0
        %v1463 = vadd.f32 %v1102, %v1462
        %1464 = vmatmul.bf16.gmra.mxu0 %v1028
        %v1465 = vpop.f32.mrf.mxu0
        %v1466 = vadd.f32 %v1102, %v1465
        %v1467 = vpop.f32.mrf.mxu0
        %v1468 = vadd.f32 %v1102, %v1467
        %1469 = vmatmul.bf16.gmra.mxu0 %v1032
        %v1470 = vpop.f32.mrf.mxu0
        %v1471 = vadd.f32 %v1102, %v1470
        %v1472 = vpop.f32.mrf.mxu0
        %v1473 = vadd.f32 %v1102, %v1472
        %1474 = vdwg.mxu0
        %1475 = vmatpush.bf16.msra.mxu0 %v1328
        %1476 = vmatpush.bf16.msra.mxu0 %v1326
        %1477 = vmatpush.bf16.msra.mxu0 %v1324
        %1478 = vmatpush.bf16.msra.mxu0 %v1322
        %1479 = vmatpush.bf16.msra.mxu0 %v1320
        %1480 = vmatpush.bf16.msra.mxu0 %v1318
        %1481 = vmatpush.bf16.msra.mxu0 %v1316
        %1482 = vmatpush.bf16.msra.mxu0 %v1314
        %1483 = vmatmul.bf16.gmra.mxu0 %v1005
        %v1484 = vpop.f32.mrf.mxu0
        %v1485 = vadd.f32 %v1436, %v1484
        %v1486 = vpop.f32.mrf.mxu0
        %v1487 = vadd.f32 %v1438, %v1486
        %1488 = vmatmul.bf16.gmra.mxu0 %v1009
        %v1489 = vpop.f32.mrf.mxu0
        %v1490 = vadd.f32 %v1441, %v1489
        %v1491 = vpop.f32.mrf.mxu0
        %v1492 = vadd.f32 %v1443, %v1491
        %1493 = vmatmul.bf16.gmra.mxu0 %v1013
        %v1494 = vpop.f32.mrf.mxu0
        %v1495 = vadd.f32 %v1446, %v1494
        %v1496 = vpop.f32.mrf.mxu0
        %v1497 = vadd.f32 %v1448, %v1496
        %1498 = vmatmul.bf16.gmra.mxu0 %v1017
        %v1499 = vpop.f32.mrf.mxu0
        %v1500 = vadd.f32 %v1451, %v1499
        %v1501 = vpop.f32.mrf.mxu0
        %v1502 = vadd.f32 %v1453, %v1501
        %1503 = vmatmul.bf16.gmra.mxu0 %v1021
        %v1504 = vpop.f32.mrf.mxu0
        %v1505 = vadd.f32 %v1456, %v1504
        %v1506 = vpop.f32.mrf.mxu0
        %v1507 = vadd.f32 %v1458, %v1506
        %1508 = vmatmul.bf16.gmra.mxu0 %v1025
        %v1509 = vpop.f32.mrf.mxu0
        %v1510 = vadd.f32 %v1461, %v1509
        %v1511 = vpop.f32.mrf.mxu0
        %v1512 = vadd.f32 %v1463, %v1511
        %1513 = vmatmul.bf16.gmra.mxu0 %v1029
        %v1514 = vpop.f32.mrf.mxu0
        %v1515 = vadd.f32 %v1466, %v1514
        %v1516 = vpop.f32.mrf.mxu0
        %v1517 = vadd.f32 %v1468, %v1516
        %1518 = vmatmul.bf16.gmra.mxu0 %v1033
        %v1519 = vpop.f32.mrf.mxu0
        %v1520 = vadd.f32 %v1471, %v1519
        %v1521 = vpop.f32.mrf.mxu0
        %v1522 = vadd.f32 %v1473, %v1521
        %1523 = vdwg.mxu0
        %1524 = vmatpush.bf16.msra.mxu0 %v1344
        %1525 = vmatpush.bf16.msra.mxu0 %v1342
        %1526 = vmatpush.bf16.msra.mxu0 %v1340
        %1527 = vmatpush.bf16.msra.mxu0 %v1338
        %1528 = vmatpush.bf16.msra.mxu0 %v1336
        %1529 = vmatpush.bf16.msra.mxu0 %v1334
        %1530 = vmatpush.bf16.msra.mxu0 %v1332
        %1531 = vmatpush.bf16.msra.mxu0 %v1330
        %1532 = vmatmul.bf16.gmra.mxu0 %v1006
        %v1533 = vpop.f32.mrf.mxu0
        %v1534 = vadd.f32 %v1485, %v1533
        %v1535 = vpop.f32.mrf.mxu0
        %v1536 = vadd.f32 %v1487, %v1535
        %1537 = vmatmul.bf16.gmra.mxu0 %v1010
        %v1538 = vpop.f32.mrf.mxu0
        %v1539 = vadd.f32 %v1490, %v1538
        %v1540 = vpop.f32.mrf.mxu0
        %v1541 = vadd.f32 %v1492, %v1540
        %1542 = vmatmul.bf16.gmra.mxu0 %v1014
        %v1543 = vpop.f32.mrf.mxu0
        %v1544 = vadd.f32 %v1495, %v1543
        %v1545 = vpop.f32.mrf.mxu0
        %v1546 = vadd.f32 %v1497, %v1545
        %1547 = vmatmul.bf16.gmra.mxu0 %v1018
        %v1548 = vpop.f32.mrf.mxu0
        %v1549 = vadd.f32 %v1500, %v1548
        %v1550 = vpop.f32.mrf.mxu0
        %v1551 = vadd.f32 %v1502, %v1550
        %1552 = vmatmul.bf16.gmra.mxu0 %v1022
        %v1553 = vpop.f32.mrf.mxu0
        %v1554 = vadd.f32 %v1505, %v1553
        %v1555 = vpop.f32.mrf.mxu0
        %v1556 = vadd.f32 %v1507, %v1555
        %1557 = vmatmul.bf16.gmra.mxu0 %v1026
        %v1558 = vpop.f32.mrf.mxu0
        %v1559 = vadd.f32 %v1510, %v1558
        %v1560 = vpop.f32.mrf.mxu0
        %v1561 = vadd.f32 %v1512, %v1560
        %1562 = vmatmul.bf16.gmra.mxu0 %v1030
        %v1563 = vpop.f32.mrf.mxu0
        %v1564 = vadd.f32 %v1515, %v1563
        %v1565 = vpop.f32.mrf.mxu0
        %v1566 = vadd.f32 %v1517, %v1565
        %1567 = vmatmul.bf16.gmra.mxu0 %v1034
        %v1568 = vpop.f32.mrf.mxu0
        %v1569 = vadd.f32 %v1520, %v1568
        %v1570 = vpop.f32.mrf.mxu0
        %v1571 = vadd.f32 %v1522, %v1570
        %1572 = vdwg.mxu0
        %1573 = vmatpush.bf16.msra.mxu0 %v1360
        %1574 = vmatpush.bf16.msra.mxu0 %v1358
        %1575 = vmatpush.bf16.msra.mxu0 %v1356
        %1576 = vmatpush.bf16.msra.mxu0 %v1354
        %1577 = vmatpush.bf16.msra.mxu0 %v1352
        %1578 = vmatpush.bf16.msra.mxu0 %v1350
        %1579 = vmatpush.bf16.msra.mxu0 %v1348
        %1580 = vmatpush.bf16.msra.mxu0 %v1346
        %1581 = vmatmul.bf16.gmra.mxu0 %v1007
        %v1582 = vpop.f32.mrf.mxu0
        %v1583 = vadd.f32 %v1534, %v1582
        %v1584 = vpop.f32.mrf.mxu0
        %v1585 = vadd.f32 %v1536, %v1584
        %1586 = vmatmul.bf16.gmra.mxu0 %v1011
        %v1587 = vpop.f32.mrf.mxu0
        %v1588 = vadd.f32 %v1539, %v1587
        %v1589 = vpop.f32.mrf.mxu0
        %v1590 = vadd.f32 %v1541, %v1589
        %1591 = vmatmul.bf16.gmra.mxu0 %v1015
        %v1592 = vpop.f32.mrf.mxu0
        %v1593 = vadd.f32 %v1544, %v1592
        %v1594 = vpop.f32.mrf.mxu0
        %v1595 = vadd.f32 %v1546, %v1594
        %1596 = vmatmul.bf16.gmra.mxu0 %v1019
        %v1597 = vpop.f32.mrf.mxu0
        %v1598 = vadd.f32 %v1549, %v1597
        %v1599 = vpop.f32.mrf.mxu0
        %v1600 = vadd.f32 %v1551, %v1599
        %1601 = vmatmul.bf16.gmra.mxu0 %v1023
        %v1602 = vpop.f32.mrf.mxu0
        %v1603 = vadd.f32 %v1554, %v1602
        %v1604 = vpop.f32.mrf.mxu0
        %v1605 = vadd.f32 %v1556, %v1604
        %1606 = vmatmul.bf16.gmra.mxu0 %v1027
        %v1607 = vpop.f32.mrf.mxu0
        %v1608 = vadd.f32 %v1559, %v1607
        %v1609 = vpop.f32.mrf.mxu0
        %v1610 = vadd.f32 %v1561, %v1609
        %1611 = vmatmul.bf16.gmra.mxu0 %v1031
        %v1612 = vpop.f32.mrf.mxu0
        %v1613 = vadd.f32 %v1564, %v1612
        %v1614 = vpop.f32.mrf.mxu0
        %v1615 = vadd.f32 %v1566, %v1614
        %1616 = vmatmul.bf16.gmra.mxu0 %v1035
        %v1617 = vpop.f32.mrf.mxu0
        %v1618 = vadd.f32 %v1569, %v1617
        %v1619 = vpop.f32.mrf.mxu0
        %v1620 = vadd.f32 %v1571, %v1619
        %1621 = vdwg.mxu0
        %1622 = vmatpush.bf16.msra.mxu0 %v1313
        %1623 = vmatpush.bf16.msra.mxu0 %v1311
        %1624 = vmatpush.bf16.msra.mxu0 %v1309
        %1625 = vmatpush.bf16.msra.mxu0 %v1307
        %1626 = vmatpush.bf16.msra.mxu0 %v1305
        %1627 = vmatpush.bf16.msra.mxu0 %v1303
        %1628 = vmatpush.bf16.msra.mxu0 %v1301
        %1629 = vmatpush.bf16.msra.mxu0 %v1299
        %1630 = vmatmul.bf16.gmra.mxu0 %v1004
        %v1631 = vpop.f32.mrf.mxu0
        %v1632 = vadd.f32 %v1103, %v1631
        %v1633 = vpop.f32.mrf.mxu0
        %v1634 = vadd.f32 %v1103, %v1633
        %1635 = vmatmul.bf16.gmra.mxu0 %v1008
        %v1636 = vpop.f32.mrf.mxu0
        %v1637 = vadd.f32 %v1103, %v1636
        %v1638 = vpop.f32.mrf.mxu0
        %v1639 = vadd.f32 %v1103, %v1638
        %1640 = vmatmul.bf16.gmra.mxu0 %v1012
        %v1641 = vpop.f32.mrf.mxu0
        %v1642 = vadd.f32 %v1103, %v1641
        %v1643 = vpop.f32.mrf.mxu0
        %v1644 = vadd.f32 %v1103, %v1643
        %1645 = vmatmul.bf16.gmra.mxu0 %v1016
        %v1646 = vpop.f32.mrf.mxu0
        %v1647 = vadd.f32 %v1103, %v1646
        %v1648 = vpop.f32.mrf.mxu0
        %v1649 = vadd.f32 %v1103, %v1648
        %1650 = vmatmul.bf16.gmra.mxu0 %v1020
        %v1651 = vpop.f32.mrf.mxu0
        %v1652 = vadd.f32 %v1103, %v1651
        %v1653 = vpop.f32.mrf.mxu0
        %v1654 = vadd.f32 %v1103, %v1653
        %1655 = vmatmul.bf16.gmra.mxu0 %v1024
        %v1656 = vpop.f32.mrf.mxu0
        %v1657 = vadd.f32 %v1103, %v1656
        %v1658 = vpop.f32.mrf.mxu0
        %v1659 = vadd.f32 %v1103, %v1658
        %1660 = vmatmul.bf16.gmra.mxu0 %v1028
        %v1661 = vpop.f32.mrf.mxu0
        %v1662 = vadd.f32 %v1103, %v1661
        %v1663 = vpop.f32.mrf.mxu0
        %v1664 = vadd.f32 %v1103, %v1663
        %1665 = vmatmul.bf16.gmra.mxu0 %v1032
        %v1666 = vpop.f32.mrf.mxu0
        %v1667 = vadd.f32 %v1103, %v1666
        %v1668 = vpop.f32.mrf.mxu0
        %v1669 = vadd.f32 %v1103, %v1668
        %1670 = vdwg.mxu0
        %1671 = vmatpush.bf16.msra.mxu0 %v1329
        %1672 = vmatpush.bf16.msra.mxu0 %v1327
        %1673 = vmatpush.bf16.msra.mxu0 %v1325
        %1674 = vmatpush.bf16.msra.mxu0 %v1323
        %1675 = vmatpush.bf16.msra.mxu0 %v1321
        %1676 = vmatpush.bf16.msra.mxu0 %v1319
        %1677 = vmatpush.bf16.msra.mxu0 %v1317
        %1678 = vmatpush.bf16.msra.mxu0 %v1315
        %1679 = vmatmul.bf16.gmra.mxu0 %v1005
        %v1680 = vpop.f32.mrf.mxu0
        %v1681 = vadd.f32 %v1632, %v1680
        %v1682 = vpop.f32.mrf.mxu0
        %v1683 = vadd.f32 %v1634, %v1682
        %1684 = vmatmul.bf16.gmra.mxu0 %v1009
        %v1685 = vpop.f32.mrf.mxu0
        %v1686 = vadd.f32 %v1637, %v1685
        %v1687 = vpop.f32.mrf.mxu0
        %v1688 = vadd.f32 %v1639, %v1687
        %1689 = vmatmul.bf16.gmra.mxu0 %v1013
        %v1690 = vpop.f32.mrf.mxu0
        %v1691 = vadd.f32 %v1642, %v1690
        %v1692 = vpop.f32.mrf.mxu0
        %v1693 = vadd.f32 %v1644, %v1692
        %1694 = vmatmul.bf16.gmra.mxu0 %v1017
        %v1695 = vpop.f32.mrf.mxu0
        %v1696 = vadd.f32 %v1647, %v1695
        %v1697 = vpop.f32.mrf.mxu0
        %v1698 = vadd.f32 %v1649, %v1697
        %1699 = vmatmul.bf16.gmra.mxu0 %v1021
        %v1700 = vpop.f32.mrf.mxu0
        %v1701 = vadd.f32 %v1652, %v1700
        %v1702 = vpop.f32.mrf.mxu0
        %v1703 = vadd.f32 %v1654, %v1702
        %1704 = vmatmul.bf16.gmra.mxu0 %v1025
        %v1705 = vpop.f32.mrf.mxu0
        %v1706 = vadd.f32 %v1657, %v1705
        %v1707 = vpop.f32.mrf.mxu0
        %v1708 = vadd.f32 %v1659, %v1707
        %1709 = vmatmul.bf16.gmra.mxu0 %v1029
        %v1710 = vpop.f32.mrf.mxu0
        %v1711 = vadd.f32 %v1662, %v1710
        %v1712 = vpop.f32.mrf.mxu0
        %v1713 = vadd.f32 %v1664, %v1712
        %1714 = vmatmul.bf16.gmra.mxu0 %v1033
        %v1715 = vpop.f32.mrf.mxu0
        %v1716 = vadd.f32 %v1667, %v1715
        %v1717 = vpop.f32.mrf.mxu0
        %v1718 = vadd.f32 %v1669, %v1717
        %1719 = vdwg.mxu0
        %1720 = vmatpush.bf16.msra.mxu0 %v1345
        %1721 = vmatpush.bf16.msra.mxu0 %v1343
        %1722 = vmatpush.bf16.msra.mxu0 %v1341
        %1723 = vmatpush.bf16.msra.mxu0 %v1339
        %1724 = vmatpush.bf16.msra.mxu0 %v1337
        %1725 = vmatpush.bf16.msra.mxu0 %v1335
        %1726 = vmatpush.bf16.msra.mxu0 %v1333
        %1727 = vmatpush.bf16.msra.mxu0 %v1331
        %1728 = vmatmul.bf16.gmra.mxu0 %v1006
        %v1729 = vpop.f32.mrf.mxu0
        %v1730 = vadd.f32 %v1681, %v1729
        %v1731 = vpop.f32.mrf.mxu0
        %v1732 = vadd.f32 %v1683, %v1731
        %1733 = vmatmul.bf16.gmra.mxu0 %v1010
        %v1734 = vpop.f32.mrf.mxu0
        %v1735 = vadd.f32 %v1686, %v1734
        %v1736 = vpop.f32.mrf.mxu0
        %v1737 = vadd.f32 %v1688, %v1736
        %1738 = vmatmul.bf16.gmra.mxu0 %v1014
        %v1739 = vpop.f32.mrf.mxu0
        %v1740 = vadd.f32 %v1691, %v1739
        %v1741 = vpop.f32.mrf.mxu0
        %v1742 = vadd.f32 %v1693, %v1741
        %1743 = vmatmul.bf16.gmra.mxu0 %v1018
        %v1744 = vpop.f32.mrf.mxu0
        %v1745 = vadd.f32 %v1696, %v1744
        %v1746 = vpop.f32.mrf.mxu0
        %v1747 = vadd.f32 %v1698, %v1746
        %1748 = vmatmul.bf16.gmra.mxu0 %v1022
        %v1749 = vpop.f32.mrf.mxu0
        %v1750 = vadd.f32 %v1701, %v1749
        %v1751 = vpop.f32.mrf.mxu0
        %v1752 = vadd.f32 %v1703, %v1751
        %1753 = vmatmul.bf16.gmra.mxu0 %v1026
        %v1754 = vpop.f32.mrf.mxu0
        %v1755 = vadd.f32 %v1706, %v1754
        %v1756 = vpop.f32.mrf.mxu0
        %v1757 = vadd.f32 %v1708, %v1756
        %1758 = vmatmul.bf16.gmra.mxu0 %v1030
        %v1759 = vpop.f32.mrf.mxu0
        %v1760 = vadd.f32 %v1711, %v1759
        %v1761 = vpop.f32.mrf.mxu0
        %v1762 = vadd.f32 %v1713, %v1761
        %1763 = vmatmul.bf16.gmra.mxu0 %v1034
        %v1764 = vpop.f32.mrf.mxu0
        %v1765 = vadd.f32 %v1716, %v1764
        %v1766 = vpop.f32.mrf.mxu0
        %v1767 = vadd.f32 %v1718, %v1766
        %1768 = vdwg.mxu0
        %1769 = vmatpush.bf16.msra.mxu0 %v1361
        %1770 = vmatpush.bf16.msra.mxu0 %v1359
        %1771 = vmatpush.bf16.msra.mxu0 %v1357
        %1772 = vmatpush.bf16.msra.mxu0 %v1355
        %1773 = vmatpush.bf16.msra.mxu0 %v1353
        %1774 = vmatpush.bf16.msra.mxu0 %v1351
        %1775 = vmatpush.bf16.msra.mxu0 %v1349
        %1776 = vmatpush.bf16.msra.mxu0 %v1347
        %1777 = vmatmul.bf16.gmra.mxu0 %v1007
        %v1778 = vpop.f32.mrf.mxu0
        %v1779 = vadd.f32 %v1730, %v1778
        %v1780 = vpop.f32.mrf.mxu0
        %v1781 = vadd.f32 %v1732, %v1780
        %1782 = vmatmul.bf16.gmra.mxu0 %v1011
        %v1783 = vpop.f32.mrf.mxu0
        %v1784 = vadd.f32 %v1735, %v1783
        %v1785 = vpop.f32.mrf.mxu0
        %v1786 = vadd.f32 %v1737, %v1785
        %1787 = vmatmul.bf16.gmra.mxu0 %v1015
        %v1788 = vpop.f32.mrf.mxu0
        %v1789 = vadd.f32 %v1740, %v1788
        %v1790 = vpop.f32.mrf.mxu0
        %v1791 = vadd.f32 %v1742, %v1790
        %1792 = vmatmul.bf16.gmra.mxu0 %v1019
        %v1793 = vpop.f32.mrf.mxu0
        %v1794 = vadd.f32 %v1745, %v1793
        %v1795 = vpop.f32.mrf.mxu0
        %v1796 = vadd.f32 %v1747, %v1795
        %1797 = vmatmul.bf16.gmra.mxu0 %v1023
        %v1798 = vpop.f32.mrf.mxu0
        %v1799 = vadd.f32 %v1750, %v1798
        %v1800 = vpop.f32.mrf.mxu0
        %v1801 = vadd.f32 %v1752, %v1800
        %1802 = vmatmul.bf16.gmra.mxu0 %v1027
        %v1803 = vpop.f32.mrf.mxu0
        %v1804 = vadd.f32 %v1755, %v1803
        %v1805 = vpop.f32.mrf.mxu0
        %v1806 = vadd.f32 %v1757, %v1805
        %1807 = vmatmul.bf16.gmra.mxu0 %v1031
        %v1808 = vpop.f32.mrf.mxu0
        %v1809 = vadd.f32 %v1760, %v1808
        %v1810 = vpop.f32.mrf.mxu0
        %v1811 = vadd.f32 %v1762, %v1810
        %1812 = vmatmul.bf16.gmra.mxu0 %v1035
        %v1813 = vpop.f32.mrf.mxu0
        %v1814 = vadd.f32 %v1765, %v1813
        %v1815 = vpop.f32.mrf.mxu0
        %v1816 = vadd.f32 %v1767, %v1815
        %1817 = vdwg.mxu0
        %v1818 = vmax.f32 %v1583, 0.0
        %v1819 = vmax.f32 %v1779, 0.0
        %v1820 = vmax.f32 %v1585, 0.0
        %v1821 = vmax.f32 %v1781, 0.0
        %v1822 = vmax.f32 %v1588, 0.0
        %v1823 = vmax.f32 %v1784, 0.0
        %v1824 = vmax.f32 %v1590, 0.0
        %v1825 = vmax.f32 %v1786, 0.0
        %v1826 = vmax.f32 %v1593, 0.0
        %v1827 = vmax.f32 %v1789, 0.0
        %v1828 = vmax.f32 %v1595, 0.0
        %v1829 = vmax.f32 %v1791, 0.0
        %v1830 = vmax.f32 %v1598, 0.0
        %v1831 = vmax.f32 %v1794, 0.0
        %v1832 = vmax.f32 %v1600, 0.0
        %v1833 = vmax.f32 %v1796, 0.0
        %v1834 = vmax.f32 %v1603, 0.0
        %v1835 = vmax.f32 %v1799, 0.0
        %v1836 = vmax.f32 %v1605, 0.0
        %v1837 = vmax.f32 %v1801, 0.0
        %v1838 = vmax.f32 %v1608, 0.0
        %v1839 = vmax.f32 %v1804, 0.0
        %v1840 = vmax.f32 %v1610, 0.0
        %v1841 = vmax.f32 %v1806, 0.0
        %v1842 = vmax.f32 %v1613, 0.0
        %v1843 = vmax.f32 %v1809, 0.0
        %v1844 = vmax.f32 %v1615, 0.0
        %v1845 = vmax.f32 %v1811, 0.0
        %v1846 = vmax.f32 %v1618, 0.0
        %v1847 = vmax.f32 %v1814, 0.0
        %v1848 = vmax.f32 %v1620, 0.0
        %v1849 = vmax.f32 %v1816, 0.0
        %v1850 = vpack.c.bf16 %v1820, %v1818
        %v1851 = vpack.c.bf16 %v1821, %v1819
        %v1852 = vpack.c.bf16 %v1824, %v1822
        %v1853 = vpack.c.bf16 %v1825, %v1823
        %v1854 = vpack.c.bf16 %v1828, %v1826
        %v1855 = vpack.c.bf16 %v1829, %v1827
        %v1856 = vpack.c.bf16 %v1832, %v1830
        %v1857 = vpack.c.bf16 %v1833, %v1831
        %v1858 = vpack.c.bf16 %v1836, %v1834
        %v1859 = vpack.c.bf16 %v1837, %v1835
        %v1860 = vpack.c.bf16 %v1840, %v1838
        %v1861 = vpack.c.bf16 %v1841, %v1839
        %v1862 = vpack.c.bf16 %v1844, %v1842
        %v1863 = vpack.c.bf16 %v1845, %v1843
        %v1864 = vpack.c.bf16 %v1848, %v1846
        %v1865 = vpack.c.bf16 %v1849, %v1847
        %v1866 = vld [vmem:[%s7] sm:$0xf]
        %v1867 = vld [vmem:[%s7 + $0x4] sm:$0xf]
        %v1868 = vld [vmem:[%s7 + $0x8] sm:$0xf]
        %v1869 = vld [vmem:[%s7 + $0xc] sm:$0xf]
        %v1870 = vld [vmem:[%s7 + $0x10] sm:$0xf]
        %v1871 = vld [vmem:[%s7 + $0x14] sm:$0xf]
        %v1872 = vld [vmem:[%s7 + $0x18] sm:$0xf]
        %v1873 = vld [vmem:[%s7 + $0x1c] sm:$0xf]
        %v1874 = vld [vmem:[%s7 + $0x20] sm:$0xf]
        %v1875 = vld [vmem:[%s7 + $0x24] sm:$0xf]
        %v1876 = vld [vmem:[%s7 + $0x28] sm:$0xf]
        %v1877 = vld [vmem:[%s7 + $0x2c] sm:$0xf]
        %v1878 = vld [vmem:[%s7 + $0x30] sm:$0xf]
        %v1879 = vld [vmem:[%s7 + $0x34] sm:$0xf]
        %v1880 = vld [vmem:[%s7 + $0x38] sm:$0xf]
        %v1881 = vld [vmem:[%s7 + $0x3c] sm:$0xf]
        %v1882 = vld [vmem:[%s7 + $0x40] sm:$0xf]
        %v1883 = vld [vmem:[%s7 + $0x44] sm:$0xf]
        %v1884 = vld [vmem:[%s7 + $0x48] sm:$0xf]
        %v1885 = vld [vmem:[%s7 + $0x4c] sm:$0xf]
        %v1886 = vld [vmem:[%s7 + $0x50] sm:$0xf]
        %v1887 = vld [vmem:[%s7 + $0x54] sm:$0xf]
        %v1888 = vld [vmem:[%s7 + $0x58] sm:$0xf]
        %v1889 = vld [vmem:[%s7 + $0x5c] sm:$0xf]
        %v1890 = vld [vmem:[%s7 + $0x60] sm:$0xf]
        %v1891 = vld [vmem:[%s7 + $0x64] sm:$0xf]
        %v1892 = vld [vmem:[%s7 + $0x68] sm:$0xf]
        %v1893 = vld [vmem:[%s7 + $0x6c] sm:$0xf]
        %v1894 = vld [vmem:[%s7 + $0x70] sm:$0xf]
        %v1895 = vld [vmem:[%s7 + $0x74] sm:$0xf]
        %v1896 = vld [vmem:[%s7 + $0x78] sm:$0xf]
        %v1897 = vld [vmem:[%s7 + $0x7c] sm:$0xf]
        %v1898 = vld [vmem:[%s8] sm:$0x1]
        %v1900 = vperm.slane %v1898, 0
        %v1934 = vunpack.c.l.b16 %v1866
        %v1935 = vunpack.c.l.b16 %v1867
        %v1936 = vunpack.c.l.b16 %v1868
        %v1937 = vunpack.c.l.b16 %v1869
        %v1938 = vunpack.c.l.b16 %v1870
        %v1939 = vunpack.c.l.b16 %v1871
        %v1940 = vunpack.c.l.b16 %v1872
        %v1941 = vunpack.c.l.b16 %v1873
        %v1942 = vunpack.c.l.b16 %v1874
        %v1943 = vunpack.c.l.b16 %v1875
        %v1944 = vunpack.c.l.b16 %v1876
        %v1945 = vunpack.c.l.b16 %v1877
        %v1946 = vunpack.c.l.b16 %v1878
        %v1947 = vunpack.c.l.b16 %v1879
        %v1948 = vunpack.c.l.b16 %v1880
        %v1949 = vunpack.c.l.b16 %v1881
        %v1950 = vunpack.c.l.b16 %v1882
        %v1951 = vunpack.c.l.b16 %v1883
        %v1952 = vunpack.c.l.b16 %v1884
        %v1953 = vunpack.c.l.b16 %v1885
        %v1954 = vunpack.c.l.b16 %v1886
        %v1955 = vunpack.c.l.b16 %v1887
        %v1956 = vunpack.c.l.b16 %v1888
        %v1957 = vunpack.c.l.b16 %v1889
        %v1958 = vunpack.c.l.b16 %v1890
        %v1959 = vunpack.c.l.b16 %v1891
        %v1960 = vunpack.c.l.b16 %v1892
        %v1961 = vunpack.c.l.b16 %v1893
        %v1962 = vunpack.c.l.b16 %v1894
        %v1963 = vunpack.c.l.b16 %v1895
        %v1964 = vunpack.c.l.b16 %v1896
        %v1965 = vunpack.c.l.b16 %v1897
        %v1966 = vpack.c.b16 %v1935, %v1934
        %v1967 = vpack.c.b16 %v1937, %v1936
        %v1968 = vpack.c.b16 %v1939, %v1938
        %v1969 = vpack.c.b16 %v1941, %v1940
        %v1970 = vpack.c.b16 %v1943, %v1942
        %v1971 = vpack.c.b16 %v1945, %v1944
        %v1972 = vpack.c.b16 %v1947, %v1946
        %v1973 = vpack.c.b16 %v1949, %v1948
        %v1974 = vpack.c.b16 %v1951, %v1950
        %v1975 = vpack.c.b16 %v1953, %v1952
        %v1976 = vpack.c.b16 %v1955, %v1954
        %v1977 = vpack.c.b16 %v1957, %v1956
        %v1978 = vpack.c.b16 %v1959, %v1958
        %v1979 = vpack.c.b16 %v1961, %v1960
        %v1980 = vpack.c.b16 %v1963, %v1962
        %v1981 = vpack.c.b16 %v1965, %v1964
        %1998 = vmatpush.bf16.msra.mxu0 %v1973
        %1999 = vmatpush.bf16.msra.mxu0 %v1972
        %2000 = vmatpush.bf16.msra.mxu0 %v1971
        %2001 = vmatpush.bf16.msra.mxu0 %v1970
        %2002 = vmatpush.bf16.msra.mxu0 %v1969
        %2003 = vmatpush.bf16.msra.mxu0 %v1968
        %2004 = vmatpush.bf16.msra.mxu0 %v1967
        %2005 = vmatpush.bf16.msra.mxu0 %v1966
        %2006 = vmatmul.bf16.gmra.mxu0 %v1850
        %v2007 = vpop.f32.mrf.mxu0
        %v2008 = vadd.f32 %v1900, %v2007
        %v2009 = vpop.f32.mrf.mxu0
        %v2010 = vadd.f32 %v1900, %v2009
        %2011 = vmatmul.bf16.gmra.mxu0 %v1852
        %v2012 = vpop.f32.mrf.mxu0
        %v2013 = vadd.f32 %v1900, %v2012
        %v2014 = vpop.f32.mrf.mxu0
        %v2015 = vadd.f32 %v1900, %v2014
        %2016 = vmatmul.bf16.gmra.mxu0 %v1854
        %v2017 = vpop.f32.mrf.mxu0
        %v2018 = vadd.f32 %v1900, %v2017
        %v2019 = vpop.f32.mrf.mxu0
        %v2020 = vadd.f32 %v1900, %v2019
        %2021 = vmatmul.bf16.gmra.mxu0 %v1856
        %v2022 = vpop.f32.mrf.mxu0
        %v2023 = vadd.f32 %v1900, %v2022
        %v2024 = vpop.f32.mrf.mxu0
        %v2025 = vadd.f32 %v1900, %v2024
        %2026 = vmatmul.bf16.gmra.mxu0 %v1858
        %v2027 = vpop.f32.mrf.mxu0
        %v2028 = vadd.f32 %v1900, %v2027
        %v2029 = vpop.f32.mrf.mxu0
        %v2030 = vadd.f32 %v1900, %v2029
        %2031 = vmatmul.bf16.gmra.mxu0 %v1860
        %v2032 = vpop.f32.mrf.mxu0
        %v2033 = vadd.f32 %v1900, %v2032
        %v2034 = vpop.f32.mrf.mxu0
        %v2035 = vadd.f32 %v1900, %v2034
        %2036 = vmatmul.bf16.gmra.mxu0 %v1862
        %v2037 = vpop.f32.mrf.mxu0
        %v2038 = vadd.f32 %v1900, %v2037
        %v2039 = vpop.f32.mrf.mxu0
        %v2040 = vadd.f32 %v1900, %v2039
        %2041 = vmatmul.bf16.gmra.mxu0 %v1864
        %v2042 = vpop.f32.mrf.mxu0
        %v2043 = vadd.f32 %v1900, %v2042
        %v2044 = vpop.f32.mrf.mxu0
        %v2045 = vadd.f32 %v1900, %v2044
        %2046 = vdwg.mxu0
        %2047 = vmatpush.bf16.msra.mxu0 %v1981
        %2048 = vmatpush.bf16.msra.mxu0 %v1980
        %2049 = vmatpush.bf16.msra.mxu0 %v1979
        %2050 = vmatpush.bf16.msra.mxu0 %v1978
        %2051 = vmatpush.bf16.msra.mxu0 %v1977
        %2052 = vmatpush.bf16.msra.mxu0 %v1976
        %2053 = vmatpush.bf16.msra.mxu0 %v1975
        %2054 = vmatpush.bf16.msra.mxu0 %v1974
        %2055 = vmatmul.bf16.gmra.mxu0 %v1851
        %v2056 = vpop.f32.mrf.mxu0
        %v2057 = vadd.f32 %v2008, %v2056
        %v2058 = vpop.f32.mrf.mxu0
        %v2059 = vadd.f32 %v2010, %v2058
        %2060 = vmatmul.bf16.gmra.mxu0 %v1853
        %v2061 = vpop.f32.mrf.mxu0
        %v2062 = vadd.f32 %v2013, %v2061
        %v2063 = vpop.f32.mrf.mxu0
        %v2064 = vadd.f32 %v2015, %v2063
        %2065 = vmatmul.bf16.gmra.mxu0 %v1855
        %v2066 = vpop.f32.mrf.mxu0
        %v2067 = vadd.f32 %v2018, %v2066
        %v2068 = vpop.f32.mrf.mxu0
        %v2069 = vadd.f32 %v2020, %v2068
        %2070 = vmatmul.bf16.gmra.mxu0 %v1857
        %v2071 = vpop.f32.mrf.mxu0
        %v2072 = vadd.f32 %v2023, %v2071
        %v2073 = vpop.f32.mrf.mxu0
        %v2074 = vadd.f32 %v2025, %v2073
        %2075 = vmatmul.bf16.gmra.mxu0 %v1859
        %v2076 = vpop.f32.mrf.mxu0
        %v2077 = vadd.f32 %v2028, %v2076
        %v2078 = vpop.f32.mrf.mxu0
        %v2079 = vadd.f32 %v2030, %v2078
        %2080 = vmatmul.bf16.gmra.mxu0 %v1861
        %v2081 = vpop.f32.mrf.mxu0
        %v2082 = vadd.f32 %v2033, %v2081
        %v2083 = vpop.f32.mrf.mxu0
        %v2084 = vadd.f32 %v2035, %v2083
        %2085 = vmatmul.bf16.gmra.mxu0 %v1863
        %v2086 = vpop.f32.mrf.mxu0
        %v2087 = vadd.f32 %v2038, %v2086
        %v2088 = vpop.f32.mrf.mxu0
        %v2089 = vadd.f32 %v2040, %v2088
        %2090 = vmatmul.bf16.gmra.mxu0 %v1865
        %v2091 = vpop.f32.mrf.mxu0
        %v2092 = vadd.f32 %v2043, %v2091
        %v2093 = vpop.f32.mrf.mxu0
        %v2094 = vadd.f32 %v2045, %v2093
        %2095 = vdwg.mxu0
        %v2096 = vmax.f32 %v2057, 0.0
        %v2097 = vmax.f32 %v2059, 0.0
        %v2098 = vmax.f32 %v2062, 0.0
        %v2099 = vmax.f32 %v2064, 0.0
        %v2100 = vmax.f32 %v2067, 0.0
        %v2101 = vmax.f32 %v2069, 0.0
        %v2102 = vmax.f32 %v2072, 0.0
        %v2103 = vmax.f32 %v2074, 0.0
        %v2104 = vmax.f32 %v2077, 0.0
        %v2105 = vmax.f32 %v2079, 0.0
        %v2106 = vmax.f32 %v2082, 0.0
        %v2107 = vmax.f32 %v2084, 0.0
        %v2108 = vmax.f32 %v2087, 0.0
        %v2109 = vmax.f32 %v2089, 0.0
        %v2110 = vmax.f32 %v2092, 0.0
        %v2111 = vmax.f32 %v2094, 0.0
        %v2112 = vpack.c.bf16 %v2097, %v2096
        %v2113 = vpack.c.bf16 %v2099, %v2098
        %v2114 = vpack.c.bf16 %v2101, %v2100
        %v2115 = vpack.c.bf16 %v2103, %v2102
        %v2116 = vpack.c.bf16 %v2105, %v2104
        %v2117 = vpack.c.bf16 %v2107, %v2106
        %v2118 = vpack.c.bf16 %v2109, %v2108
        %v2119 = vpack.c.bf16 %v2111, %v2110
        %v2120 = vld [vmem:[%s9] sm:$0xf]
        %v2121 = vld [vmem:[%s9 + $0x4] sm:$0xf]
        %v2122 = vld [vmem:[%s9 + $0x8] sm:$0xf]
        %v2123 = vld [vmem:[%s9 + $0xc] sm:$0xf]
        %v2124 = vld [vmem:[%s9 + $0x10] sm:$0xf]
        %v2125 = vld [vmem:[%s9 + $0x14] sm:$0xf]
        %v2126 = vld [vmem:[%s9 + $0x18] sm:$0xf]
        %v2127 = vld [vmem:[%s9 + $0x1c] sm:$0xf]
        %v2128 = vld [vmem:[%s9 + $0x20] sm:$0xf]
        %v2129 = vld [vmem:[%s9 + $0x24] sm:$0xf]
        %v2130 = vld [vmem:[%s9 + $0x28] sm:$0xf]
        %v2131 = vld [vmem:[%s9 + $0x2c] sm:$0xf]
        %v2132 = vld [vmem:[%s9 + $0x30] sm:$0xf]
        %v2133 = vld [vmem:[%s9 + $0x34] sm:$0xf]
        %v2134 = vld [vmem:[%s9 + $0x38] sm:$0xf]
        %v2135 = vld [vmem:[%s9 + $0x3c] sm:$0xf]
        %v2136 = vld [vmem:[%s10] sm:$0x1]
        %v2138 = vperm.slane %v2136, 0
        %v2156 = vunpack.c.l.b16 %v2120
        %v2157 = vunpack.c.l.b16 %v2121
        %v2158 = vunpack.c.l.b16 %v2122
        %v2159 = vunpack.c.l.b16 %v2123
        %v2160 = vunpack.c.l.b16 %v2124
        %v2161 = vunpack.c.l.b16 %v2125
        %v2162 = vunpack.c.l.b16 %v2126
        %v2163 = vunpack.c.l.b16 %v2127
        %v2164 = vunpack.c.l.b16 %v2128
        %v2165 = vunpack.c.l.b16 %v2129
        %v2166 = vunpack.c.l.b16 %v2130
        %v2167 = vunpack.c.l.b16 %v2131
        %v2168 = vunpack.c.l.b16 %v2132
        %v2169 = vunpack.c.l.b16 %v2133
        %v2170 = vunpack.c.l.b16 %v2134
        %v2171 = vunpack.c.l.b16 %v2135
        %v2172 = vpack.c.b16 %v2157, %v2156
        %v2173 = vpack.c.b16 %v2159, %v2158
        %v2174 = vpack.c.b16 %v2161, %v2160
        %v2175 = vpack.c.b16 %v2163, %v2162
        %v2176 = vpack.c.b16 %v2165, %v2164
        %v2177 = vpack.c.b16 %v2167, %v2166
        %v2178 = vpack.c.b16 %v2169, %v2168
        %v2179 = vpack.c.b16 %v2171, %v2170
        %2188 = vmatpush.bf16.msra.mxu0 %v2179
        %2189 = vmatpush.bf16.msra.mxu0 %v2178
        %2190 = vmatpush.bf16.msra.mxu0 %v2177
        %2191 = vmatpush.bf16.msra.mxu0 %v2176
        %2192 = vmatpush.bf16.msra.mxu0 %v2175
        %2193 = vmatpush.bf16.msra.mxu0 %v2174
        %2194 = vmatpush.bf16.msra.mxu0 %v2173
        %2195 = vmatpush.bf16.msra.mxu0 %v2172
        %2196 = vmatmul.bf16.gmra.mxu0 %v2112
        %v2197 = vpop.f32.mrf.mxu0
        %v2198 = vadd.f32 %v2138, %v2197
        %v2199 = vpop.f32.mrf.mxu0
        %v2200 = vadd.f32 %v2138, %v2199
        %2201 = vmatmul.bf16.gmra.mxu0 %v2113
        %v2202 = vpop.f32.mrf.mxu0
        %v2203 = vadd.f32 %v2138, %v2202
        %v2204 = vpop.f32.mrf.mxu0
        %v2205 = vadd.f32 %v2138, %v2204
        %2206 = vmatmul.bf16.gmra.mxu0 %v2114
        %v2207 = vpop.f32.mrf.mxu0
        %v2208 = vadd.f32 %v2138, %v2207
        %v2209 = vpop.f32.mrf.mxu0
        %v2210 = vadd.f32 %v2138, %v2209
        %2211 = vmatmul.bf16.gmra.mxu0 %v2115
        %v2212 = vpop.f32.mrf.mxu0
        %v2213 = vadd.f32 %v2138, %v2212
        %v2214 = vpop.f32.mrf.mxu0
        %v2215 = vadd.f32 %v2138, %v2214
        %2216 = vmatmul.bf16.gmra.mxu0 %v2116
        %v2217 = vpop.f32.mrf.mxu0
        %v2218 = vadd.f32 %v2138, %v2217
        %v2219 = vpop.f32.mrf.mxu0
        %v2220 = vadd.f32 %v2138, %v2219
        %2221 = vmatmul.bf16.gmra.mxu0 %v2117
        %v2222 = vpop.f32.mrf.mxu0
        %v2223 = vadd.f32 %v2138, %v2222
        %v2224 = vpop.f32.mrf.mxu0
        %v2225 = vadd.f32 %v2138, %v2224
        %2226 = vmatmul.bf16.gmra.mxu0 %v2118
        %v2227 = vpop.f32.mrf.mxu0
        %v2228 = vadd.f32 %v2138, %v2227
        %v2229 = vpop.f32.mrf.mxu0
        %v2230 = vadd.f32 %v2138, %v2229
        %2231 = vmatmul.bf16.gmra.mxu0 %v2119
        %v2232 = vpop.f32.mrf.mxu0
        %v2233 = vadd.f32 %v2138, %v2232
        %v2234 = vpop.f32.mrf.mxu0
        %v2235 = vadd.f32 %v2138, %v2234
        %2236 = vdwg.mxu0
        %2237 = vmax.xlane.f32.xlu0 %v2198
        %v2238 = vpop.xlane.xlu0 %2237
        %2239 = vmax.xlane.f32.xlu0 %v2200
        %v2240 = vpop.xlane.xlu0 %2239
        %2241 = vmax.xlane.f32.xlu0 %v2203
        %v2242 = vpop.xlane.xlu0 %2241
        %2243 = vmax.xlane.f32.xlu0 %v2205
        %v2244 = vpop.xlane.xlu0 %2243
        %2245 = vmax.xlane.f32.xlu0 %v2208
        %v2246 = vpop.xlane.xlu0 %2245
        %2247 = vmax.xlane.f32.xlu0 %v2210
        %v2248 = vpop.xlane.xlu0 %2247
        %2249 = vmax.xlane.f32.xlu0 %v2213
        %v2250 = vpop.xlane.xlu0 %2249
        %2251 = vmax.xlane.f32.xlu0 %v2215
        %v2252 = vpop.xlane.xlu0 %2251
        %2253 = vmax.xlane.f32.xlu0 %v2218
        %v2254 = vpop.xlane.xlu0 %2253
        %2255 = vmax.xlane.f32.xlu0 %v2220
        %v2256 = vpop.xlane.xlu0 %2255
        %2257 = vmax.xlane.f32.xlu0 %v2223
        %v2258 = vpop.xlane.xlu0 %2257
        %2259 = vmax.xlane.f32.xlu0 %v2225
        %v2260 = vpop.xlane.xlu0 %2259
        %2261 = vmax.xlane.f32.xlu0 %v2228
        %v2262 = vpop.xlane.xlu0 %2261
        %2263 = vmax.xlane.f32.xlu0 %v2230
        %v2264 = vpop.xlane.xlu0 %2263
        %2265 = vmax.xlane.f32.xlu0 %v2233
        %v2266 = vpop.xlane.xlu0 %2265
        %2267 = vmax.xlane.f32.xlu0 %v2235
        %v2268 = vpop.xlane.xlu0 %2267
        %v2269 = vsub.f32 %v2198, %v2238
        %v2270 = vsub.f32 %v2200, %v2240
        %v2271 = vsub.f32 %v2203, %v2242
        %v2272 = vsub.f32 %v2205, %v2244
        %v2273 = vsub.f32 %v2208, %v2246
        %v2274 = vsub.f32 %v2210, %v2248
        %v2275 = vsub.f32 %v2213, %v2250
        %v2276 = vsub.f32 %v2215, %v2252
        %v2277 = vsub.f32 %v2218, %v2254
        %v2278 = vsub.f32 %v2220, %v2256
        %v2279 = vsub.f32 %v2223, %v2258
        %v2280 = vsub.f32 %v2225, %v2260
        %v2281 = vsub.f32 %v2228, %v2262
        %v2282 = vsub.f32 %v2230, %v2264
        %v2283 = vsub.f32 %v2233, %v2266
        %v2284 = vsub.f32 %v2235, %v2268
        %v2285 = vmul.f32 %v2269, 1.442695
        %v2286 = vpow.pop %v2285
        %v2287 = vmul.f32 %v2270, 1.442695
        %v2288 = vpow.pop %v2287
        %v2289 = vmul.f32 %v2271, 1.442695
        %v2290 = vpow.pop %v2289
        %v2291 = vmul.f32 %v2272, 1.442695
        %v2292 = vpow.pop %v2291
        %v2293 = vmul.f32 %v2273, 1.442695
        %v2294 = vpow.pop %v2293
        %v2295 = vmul.f32 %v2274, 1.442695
        %v2296 = vpow.pop %v2295
        %v2297 = vmul.f32 %v2275, 1.442695
        %v2298 = vpow.pop %v2297
        %v2299 = vmul.f32 %v2276, 1.442695
        %v2300 = vpow.pop %v2299
        %v2301 = vmul.f32 %v2277, 1.442695
        %v2302 = vpow.pop %v2301
        %v2303 = vmul.f32 %v2278, 1.442695
        %v2304 = vpow.pop %v2303
        %v2305 = vmul.f32 %v2279, 1.442695
        %v2306 = vpow.pop %v2305
        %v2307 = vmul.f32 %v2280, 1.442695
        %v2308 = vpow.pop %v2307
        %v2309 = vmul.f32 %v2281, 1.442695
        %v2310 = vpow.pop %v2309
        %v2311 = vmul.f32 %v2282, 1.442695
        %v2312 = vpow.pop %v2311
        %v2313 = vmul.f32 %v2283, 1.442695
        %v2314 = vpow.pop %v2313
        %v2315 = vmul.f32 %v2284, 1.442695
        %v2316 = vpow.pop %v2315
        %2317 = vadd.xlane.f32.xlu0 %v2286
        %v2318 = vpop.xlane.xlu0 %2317
        %2319 = vadd.xlane.f32.xlu0 %v2288
        %v2320 = vpop.xlane.xlu0 %2319
        %2321 = vadd.xlane.f32.xlu0 %v2290
        %v2322 = vpop.xlane.xlu0 %2321
        %2323 = vadd.xlane.f32.xlu0 %v2292
        %v2324 = vpop.xlane.xlu0 %2323
        %2325 = vadd.xlane.f32.xlu0 %v2294
        %v2326 = vpop.xlane.xlu0 %2325
        %2327 = vadd.xlane.f32.xlu0 %v2296
        %v2328 = vpop.xlane.xlu0 %2327
        %2329 = vadd.xlane.f32.xlu0 %v2298
        %v2330 = vpop.xlane.xlu0 %2329
        %2331 = vadd.xlane.f32.xlu0 %v2300
        %v2332 = vpop.xlane.xlu0 %2331
        %2333 = vadd.xlane.f32.xlu0 %v2302
        %v2334 = vpop.xlane.xlu0 %2333
        %2335 = vadd.xlane.f32.xlu0 %v2304
        %v2336 = vpop.xlane.xlu0 %2335
        %2337 = vadd.xlane.f32.xlu0 %v2306
        %v2338 = vpop.xlane.xlu0 %2337
        %2339 = vadd.xlane.f32.xlu0 %v2308
        %v2340 = vpop.xlane.xlu0 %2339
        %2341 = vadd.xlane.f32.xlu0 %v2310
        %v2342 = vpop.xlane.xlu0 %2341
        %2343 = vadd.xlane.f32.xlu0 %v2312
        %v2344 = vpop.xlane.xlu0 %2343
        %2345 = vadd.xlane.f32.xlu0 %v2314
        %v2346 = vpop.xlane.xlu0 %2345
        %2347 = vadd.xlane.f32.xlu0 %v2316
        %v2348 = vpop.xlane.xlu0 %2347
        %v2349 = vlog2.pop %v2318
        %v2350 = vmul.f32 %v2349, 0.6931472
        %v2351 = vlog2.pop %v2320
        %v2352 = vmul.f32 %v2351, 0.6931472
        %v2353 = vlog2.pop %v2322
        %v2354 = vmul.f32 %v2353, 0.6931472
        %v2355 = vlog2.pop %v2324
        %v2356 = vmul.f32 %v2355, 0.6931472
        %v2357 = vlog2.pop %v2326
        %v2358 = vmul.f32 %v2357, 0.6931472
        %v2359 = vlog2.pop %v2328
        %v2360 = vmul.f32 %v2359, 0.6931472
        %v2361 = vlog2.pop %v2330
        %v2362 = vmul.f32 %v2361, 0.6931472
        %v2363 = vlog2.pop %v2332
        %v2364 = vmul.f32 %v2363, 0.6931472
        %v2365 = vlog2.pop %v2334
        %v2366 = vmul.f32 %v2365, 0.6931472
        %v2367 = vlog2.pop %v2336
        %v2368 = vmul.f32 %v2367, 0.6931472
        %v2369 = vlog2.pop %v2338
        %v2370 = vmul.f32 %v2369, 0.6931472
        %v2371 = vlog2.pop %v2340
        %v2372 = vmul.f32 %v2371, 0.6931472
        %v2373 = vlog2.pop %v2342
        %v2374 = vmul.f32 %v2373, 0.6931472
        %v2375 = vlog2.pop %v2344
        %v2376 = vmul.f32 %v2375, 0.6931472
        %v2377 = vlog2.pop %v2346
        %v2378 = vmul.f32 %v2377, 0.6931472
        %v2379 = vlog2.pop %v2348
        %v2380 = vmul.f32 %v2379, 0.6931472
        %v2381 = vsub.f32 %v2269, %v2350
        %v2382 = vsub.f32 %v2270, %v2352
        %v2383 = vsub.f32 %v2271, %v2354
        %v2384 = vsub.f32 %v2272, %v2356
        %v2385 = vsub.f32 %v2273, %v2358
        %v2386 = vsub.f32 %v2274, %v2360
        %v2387 = vsub.f32 %v2275, %v2362
        %v2388 = vsub.f32 %v2276, %v2364
        %v2389 = vsub.f32 %v2277, %v2366
        %v2390 = vsub.f32 %v2278, %v2368
        %v2391 = vsub.f32 %v2279, %v2370
        %v2392 = vsub.f32 %v2280, %v2372
        %v2393 = vsub.f32 %v2281, %v2374
        %v2394 = vsub.f32 %v2282, %v2376
        %v2395 = vsub.f32 %v2283, %v2378
        %v2396 = vsub.f32 %v2284, %v2380
        %2397 = vxpose.xlu0.b32.start [1/16] %v2381, 128
        %2398 = vxpose.xlu0.b32.cont [2/16] %v2382, 128
        %2399 = vxpose.xlu0.b32.cont [3/16] %v2383, 128
        %2400 = vxpose.xlu0.b32.cont [4/16] %v2384, 128
        %2401 = vxpose.xlu0.b32.cont [5/16] %v2385, 128
        %2402 = vxpose.xlu0.b32.cont [6/16] %v2386, 128
        %2403 = vxpose.xlu0.b32.cont [7/16] %v2387, 128
        %2404 = vxpose.xlu0.b32.cont [8/16] %v2388, 128
        %2405 = vxpose.xlu0.b32.cont [9/16] %v2389, 128
        %2406 = vxpose.xlu0.b32.cont [10/16] %v2390, 128
        %2407 = vxpose.xlu0.b32.cont [11/16] %v2391, 128
        %2408 = vxpose.xlu0.b32.cont [12/16] %v2392, 128
        %2409 = vxpose.xlu0.b32.cont [13/16] %v2393, 128
        %2410 = vxpose.xlu0.b32.cont [14/16] %v2394, 128
        %2411 = vxpose.xlu0.b32.cont [15/16] %v2395, 128
        %2412 = vxpose.xlu0.b32.end [16/16] %v2396, 128
        %v2413 = vpop.trf.xlu0
        %v2414 = vpop.trf.xlu0
        %v2415 = vpop.trf.xlu0
        %v2416 = vpop.trf.xlu0
        %v2417 = vpop.trf.xlu0
        %v2418 = vpop.trf.xlu0
        %v2419 = vpop.trf.xlu0
        %v2420 = vpop.trf.xlu0
        %v2421 = vpop.trf.xlu0
        %v2422 = vpop.trf.xlu0
        %v2423 = vpop.trf.xlu0
        %v2424 = vpop.trf.xlu0
        %v2425 = vpop.trf.xlu0
        %v2426 = vpop.trf.xlu0
        %v2427 = vpop.trf.xlu0
        %v2428 = vpop.trf.xlu0
        %2429 = vst [vmem:[%s430] sm:$0x3] %v2413
        %s2430 = sand.u32 %s295, 1
        %s2431 = scalar_lea.sflag [#allocation3], %s2430
        %s2432 = sand.u32 %s295, 1
        %s2433 = smul.addr %s2432, 2
        %s2434 = scalar_lea.vmem [#allocation2], %s2433
        // Predicated region
        $region65: #{pointnet_dense_cls_forward.5} parent=63 // pred_check
          %p2435 = pneg %p305
        $region66: #{pointnet_dense_cls_forward.5} parent=63 // pred_check_branch
          %2437 = sbr.rel (%p2435) target = $region68
        $region67: #{pointnet_dense_cls_forward.5} parent=63 // pred_region
          %2439 = vsyncadd %s2431, 0
          %s2440 = sadd.s32 %s30, %s29
          %s2441 = smul.addr %s2440, 2
          %s2442 = scalar_lea.hbm %s11, %s2441
          %s2444 = sshll.u32 %s2434, 4
          %s2445 = int_to_ptr.vmem [resolvable:$true] %s2444
          %s2446 = sshll.u32 %s2442, 4
          %s2447 = int_to_ptr.hbm [resolvable:$true] %s2446
          %2449 = dma.vmem_to_hbm [thread:$0]  %s2445, 32, %s2447, %s2431
        $region68: #{pointnet_dense_cls_forward.5} parent=63 // pred_fallthru
          _
      $region64: #{pointnet_dense_cls_forward.5} parent=5 // pred_fallthru
        _
      %p2450 = scmp.le.s32.totalorder 2, %s20
      // Predicated region
      $region69: #{pointnet_dense_cls_forward.5} parent=5 // pred_check
        %p2451 = pneg %p2450
      $region70: #{pointnet_dense_cls_forward.5} parent=5 // pred_check_branch
        %2453 = sbr.rel (%p2451) target = $region72
      $region71: #{pointnet_dense_cls_forward.5} parent=5 // pred_region
        %s2454 = ssub.s32 %s20, 2
        // Predicated region
        $region73: #{pointnet_dense_cls_forward.5} parent=71 // pred_check
          %p2455 = pneg %p311
        $region74: #{pointnet_dense_cls_forward.5} parent=71 // pred_check_branch
          %2457 = sbr.rel (%p2455) target = $region76
        $region75: #{pointnet_dense_cls_forward.5} parent=71 // pred_region
          %s2458 = sand.u32 %s296, 1
          %s2459 = scalar_lea.sflag [#allocation3], %s2458
          %s2460 = sand.u32 %s296, 1
          %s2461 = smul.addr %s2460, 2
          %s2462 = scalar_lea.vmem [#allocation2], %s2461
          %2464 = dma.done %s2459, 32
        $region76: #{pointnet_dense_cls_forward.5} parent=71 // pred_fallthru
          _
      $region72: #{pointnet_dense_cls_forward.5} parent=5 // pred_fallthru
        _
    $region6: #{pointnet_dense_cls_forward.5} parent=1 // loop_footer
      %s24 = sadd.s32 1, %s20
    $region7: #{pointnet_dense_cls_forward.5} parent=1 // loop_footer_branch
      %19 = sbr.rel target = $region3
    $region8: #{pointnet_dense_cls_forward.5} parent=1 // loop_exit
      _
    %2465 = vsyncpa [#allocation3], 1
    %s2466 = scalar_lea.sflag [#allocation3], 1
    %2467 = vsyncpa %s2466, 1

</llo_original>
